<compile_context>
chip_gen: v5e
topology: v5e:2x2
jax: 0.10.0
libtpu: 0.0.40
codegen_flags: <defaults>
</compile_context>

<pallas_src>
import jax
import jax.numpy as jnp
from jax import lax
from jax.experimental import pallas as pl
from jax.experimental.pallas import tpu as pltpu


def _make_xception_block_kernel(H, W, Cin, Cout):
    Ho, Wo = H // 2, W // 2
    NEG = float(jnp.finfo(jnp.float32).min)  # finite "-inf" for max-pool padding
    f32 = jnp.float32

    def kernel(x_ref, dw1_ref, pw1_ref, b1_ref, dw2_ref, pw2_ref, b2_ref,
               wsk_ref, bsk_ref, sel_ref, o_ref, pad1_ref, pad2_ref):
        x = x_ref[0]                                            # (H, W, Cin)

        # ---- ReLU -> depthwise 3x3 (pad 1) -> pointwise 1x1 (BN1 folded) ----
        xr = jnp.maximum(x, 0.0)
        pad1_ref[...] = jnp.zeros_like(pad1_ref)
        pad1_ref[1:H + 1, 1:W + 1, :] = xr
        p1 = pad1_ref[...]
        dw1 = dw1_ref[...]                                      # (3, 3, Cin)
        acc1 = jnp.zeros((H, W, Cin), f32)
        for di in range(3):
            for dj in range(3):
                acc1 = acc1 + p1[di:di + H, dj:dj + W, :] * dw1[di, dj]
        y1 = jnp.dot(acc1.reshape(H * W, Cin), pw1_ref[...],
                     preferred_element_type=f32) + b1_ref[...]  # (H*W, Cout)

        # ---- ReLU -> depthwise 3x3 (pad 1) -> pointwise 1x1 (BN2 folded) ----
        y1r = jnp.maximum(y1, 0.0).reshape(H, W, Cout)
        pad2_ref[...] = jnp.zeros_like(pad2_ref)
        pad2_ref[1:H + 1, 1:W + 1, :] = y1r
        p2 = pad2_ref[...]
        dw2 = dw2_ref[...]                                      # (3, 3, Cout)
        acc2 = jnp.zeros((H, W, Cout), f32)
        for di in range(3):
            for dj in range(3):
                acc2 = acc2 + p2[di:di + H, dj:dj + W, :] * dw2[di, dj]
        y2 = jnp.dot(acc2.reshape(H * W, Cout), pw2_ref[...],
                     preferred_element_type=f32) + b2_ref[...]  # (H*W, Cout)

        # ---- MaxPool 3x3, stride 2, pad 1 -- all in VMEM (reuse pad2 scratch) ----
        pad2_ref[...] = jnp.full((H + 2, W + 2, Cout), NEG, f32)
        pad2_ref[1:H + 1, 1:W + 1, :] = y2.reshape(H, W, Cout)
        pp = pad2_ref[...]
        hm = jnp.maximum(jnp.maximum(pp[:, 0:W, :], pp[:, 1:W + 1, :]),
                         pp[:, 2:W + 2, :])                     # (H+2, W, Cout)
        vm = jnp.maximum(jnp.maximum(hm[0:H], hm[1:H + 1]), hm[2:H + 2])  # (H, W, Cout)
        # stride-2 subsample (rows/cols 0,2,...) as a 0/1 selection matmul (MXU)
        sel = sel_ref[...]                                      # (Ho*Wo, H*W)
        pooled = jnp.dot(sel, vm.reshape(H * W, Cout),
                         preferred_element_type=f32)            # (Ho*Wo, Cout)

        # ---- skip path: 1x1 conv stride 2 on the ORIGINAL x (BN folded) ----
        xs = jnp.dot(sel, x.reshape(H * W, Cin), preferred_element_type=f32)
        skip = jnp.dot(xs, wsk_ref[...], preferred_element_type=f32) + bsk_ref[...]

        res = pooled + skip                                     # (Ho*Wo, Cout)

        # ---- relayout to channel-major (NCHW-flat) via identity matmul ----
        r = lax.broadcasted_iota(jnp.int32, (Cout, Cout), 0)
        c = lax.broadcasted_iota(jnp.int32, (Cout, Cout), 1)
        ident = jnp.where(r == c, f32(1.0), f32(0.0))
        out_cm = lax.dot_general(ident, res, (((1,), (1,)), ((), ())),
                                 preferred_element_type=f32)    # (Cout, Ho*Wo)
        o_ref[0] = out_cm

    return kernel


@jax.jit
def xception_block_forward(x_nchw, params):
    N, Cin, H, W = x_nchw.shape
    Cout = params["pw1"].shape[1]
    assert H % 2 == 0 and W % 2 == 0, "even spatial sizes assumed (stride-2 block)"
    Ho, Wo = H // 2, W // 2

    # Fold BN (inference mode) scales into the pointwise / skip weights.
    pw1 = (params["pw1"] * params["bn1_scale"][None, :]).astype(jnp.float32)
    pw2 = (params["pw2"] * params["bn2_scale"][None, :]).astype(jnp.float32)
    wsk = (params["wskip"] * params["bns_scale"][None, :]).astype(jnp.float32)
    b1 = params["bn1_bias"].reshape(1, Cout).astype(jnp.float32)
    b2 = params["bn2_bias"].reshape(1, Cout).astype(jnp.float32)
    bsk = params["bns_bias"].reshape(1, Cout).astype(jnp.float32)

    # 0/1 selection matrix for the stride-2 subsample (pool output + skip conv).
    t = jnp.arange(Ho * Wo)
    src = (t // Wo) * (2 * W) + (t % Wo) * 2
    sel = (jnp.arange(H * W)[None, :] == src[:, None]).astype(jnp.float32)

    # Single small input relayout NCHW -> NHWC; the NCHW-major output layout is
    # produced inside the kernel, so no output transpose in HBM.
    x_nhwc = jnp.transpose(x_nchw, (0, 2, 3, 1)).astype(jnp.float32)

    kernel = _make_xception_block_kernel(H, W, Cin, Cout)
    out_flat = pl.pallas_call(
        kernel,
        out_shape=jax.ShapeDtypeStruct((N, Cout, Ho * Wo), jnp.float32),
        grid=(N,),
        in_specs=[
            pl.BlockSpec((1, H, W, Cin), lambda n: (n, 0, 0, 0)),
            pl.BlockSpec((3, 3, Cin), lambda n: (0, 0, 0)),
            pl.BlockSpec((Cin, Cout), lambda n: (0, 0)),
            pl.BlockSpec((1, Cout), lambda n: (0, 0)),
            pl.BlockSpec((3, 3, Cout), lambda n: (0, 0, 0)),
            pl.BlockSpec((Cout, Cout), lambda n: (0, 0)),
            pl.BlockSpec((1, Cout), lambda n: (0, 0)),
            pl.BlockSpec((Cin, Cout), lambda n: (0, 0)),
            pl.BlockSpec((1, Cout), lambda n: (0, 0)),
            pl.BlockSpec((Ho * Wo, H * W), lambda n: (0, 0)),
        ],
        out_specs=pl.BlockSpec((1, Cout, Ho * Wo), lambda n: (n, 0, 0)),
        scratch_shapes=[
            pltpu.VMEM((H + 2, W + 2, Cin), jnp.float32),   # zero pad, sepconv1
            pltpu.VMEM((H + 2, W + 2, Cout), jnp.float32),  # pad, sepconv2 + pool
        ],
        compiler_params=pltpu.CompilerParams(
            dimension_semantics=("parallel",)),
    )(x_nhwc, params["dw1"], pw1, b1, params["dw2"], pw2, b2, wsk, bsk, sel)
    return out_flat.reshape(N, Cout, Ho, Wo)


def _folded_bn(key, c):
    """Fold (gamma, beta, running_mean, running_var) -> (scale, bias), eval mode."""
    k1, k2, k3, k4 = jax.random.split(key, 4)
    gamma = jax.random.uniform(k1, (c,), jnp.float32, 0.5, 1.5)
    beta = 0.1 * jax.random.normal(k2, (c,), jnp.float32)
    mean = 0.1 * jax.random.normal(k3, (c,), jnp.float32)
    var = jax.random.uniform(k4, (c,), jnp.float32, 0.5, 1.5)
    eps = 1e-5
    scale = gamma / jnp.sqrt(var + eps)
    bias = beta - mean * scale
    return scale, bias


if __name__ == "__main__":
    N, Cin, H, W = 2, 4, 16, 16
    Cout = 8

    key = jax.random.PRNGKey(0)
    ks = jax.random.split(key, 10)

    x = jax.random.normal(ks[0], (N, Cin, H, W), jnp.float32)

    bn1_scale, bn1_bias = _folded_bn(ks[3], Cout)
    bn2_scale, bn2_bias = _folded_bn(ks[6], Cout)
    bns_scale, bns_bias = _folded_bn(ks[8], Cout)

    params = {
        # depthwise weights stored as (kh, kw, C); pointwise/skip as (Cin, Cout)
        "dw1": 0.1 * jax.random.normal(ks[1], (3, 3, Cin), jnp.float32),
        "pw1": 0.1 * jax.random.normal(ks[2], (Cin, Cout), jnp.float32),
        "bn1_scale": bn1_scale, "bn1_bias": bn1_bias,
        "dw2": 0.1 * jax.random.normal(ks[4], (3, 3, Cout), jnp.float32),
        "pw2": 0.1 * jax.random.normal(ks[5], (Cout, Cout), jnp.float32),
        "bn2_scale": bn2_scale, "bn2_bias": bn2_bias,
        "wskip": 0.1 * jax.random.normal(ks[7], (Cin, Cout), jnp.float32),
        "bns_scale": bns_scale, "bns_bias": bns_bias,
    }

    out = xception_block_forward(x, params)
    out = jax.block_until_ready(out)

    assert out.shape == (N, Cout, H // 2, W // 2), out.shape
    assert out.dtype == jnp.float32
    assert bool(jnp.all(jnp.isfinite(out)))
    print("KERNEL_OK")
</pallas_src>

<mosaic_0001>
module attributes {stable_mosaic.version = 11 : i64} {
  func.func @kernel(%arg0: i32, %arg1: memref<1x16x16x4xf32, #tpu.memory_space<vmem>>, %arg2: memref<3x3x4xf32, #tpu.memory_space<vmem>>, %arg3: memref<4x8xf32, #tpu.memory_space<vmem>>, %arg4: memref<1x8xf32, #tpu.memory_space<vmem>>, %arg5: memref<3x3x8xf32, #tpu.memory_space<vmem>>, %arg6: memref<8x8xf32, #tpu.memory_space<vmem>>, %arg7: memref<1x8xf32, #tpu.memory_space<vmem>>, %arg8: memref<4x8xf32, #tpu.memory_space<vmem>>, %arg9: memref<1x8xf32, #tpu.memory_space<vmem>>, %arg10: memref<64x256xf32, #tpu.memory_space<vmem>>, %arg11: memref<1x8x64xf32, #tpu.memory_space<vmem>>, %arg12: memref<18x18x4xf32, #tpu.memory_space<vmem>>, %arg13: memref<18x18x8xf32, #tpu.memory_space<vmem>>) attributes {dimension_semantics = [#tpu.dimension_semantics<parallel>], iteration_bounds = array<i64: 2>, scalar_prefetch = 0 : i64, scratch_operands = 2 : i64, tpu.core_type = #tpu.core_type<tc>, window_params = [{transform_indices = @transform_0, window_bounds = array<i64: 1, 16, 16, 4>}, {pipeline_mode = #tpu.pipeline_mode<synchronous>, transform_indices = @transform_1, window_bounds = array<i64: 3, 3, 4>}, {pipeline_mode = #tpu.pipeline_mode<synchronous>, transform_indices = @transform_2, window_bounds = array<i64: 4, 8>}, {pipeline_mode = #tpu.pipeline_mode<synchronous>, transform_indices = @transform_3, window_bounds = array<i64: 1, 8>}, {pipeline_mode = #tpu.pipeline_mode<synchronous>, transform_indices = @transform_4, window_bounds = array<i64: 3, 3, 8>}, {pipeline_mode = #tpu.pipeline_mode<synchronous>, transform_indices = @transform_5, window_bounds = array<i64: 8, 8>}, {pipeline_mode = #tpu.pipeline_mode<synchronous>, transform_indices = @transform_6, window_bounds = array<i64: 1, 8>}, {pipeline_mode = #tpu.pipeline_mode<synchronous>, transform_indices = @transform_7, window_bounds = array<i64: 4, 8>}, {pipeline_mode = #tpu.pipeline_mode<synchronous>, transform_indices = @transform_8, window_bounds = array<i64: 1, 8>}, {pipeline_mode = #tpu.pipeline_mode<synchronous>, transform_indices = @transform_9, window_bounds = array<i64: 64, 256>}, {transform_indices = @transform_10, window_bounds = array<i64: 1, 8, 64>}]} {
    %c0 = arith.constant 0 : index
    %c0_0 = arith.constant 0 : index
    %c0_1 = arith.constant 0 : index
    %c0_2 = arith.constant 0 : index
    %0 = vector.load %arg1[%c0, %c0_0, %c0_1, %c0_2] : memref<1x16x16x4xf32, #tpu.memory_space<vmem>>, vector<1x16x16x4xf32>
    %1 = vector.shape_cast %0 : vector<1x16x16x4xf32> to vector<16x16x4xf32>
    %cst = arith.constant 0.000000e+00 : f32
    %2 = vector.broadcast %cst : f32 to vector<16x16x4xf32>
    %3 = arith.maximumf %1, %2 : vector<16x16x4xf32>
    %cst_3 = arith.constant 0.000000e+00 : f32
    %4 = vector.broadcast %cst_3 : f32 to vector<18x18x4xf32>
    %c0_4 = arith.constant 0 : index
    %c0_5 = arith.constant 0 : index
    %c0_6 = arith.constant 0 : index
    %5 = vector.load %arg12[%c0_4, %c0_5, %c0_6] : memref<18x18x4xf32, #tpu.memory_space<vmem>>, vector<18x18x4xf32>
    tpu.vector_store %arg12[%c0_4, %c0_5, %c0_6], %4 {strides = array<i32>} : memref<18x18x4xf32, #tpu.memory_space<vmem>>, vector<18x18x4xf32>,
    %c1 = arith.constant 1 : index
    %c1_7 = arith.constant 1 : index
    %c0_8 = arith.constant 0 : index
    %6 = vector.load %arg12[%c1, %c1_7, %c0_8] : memref<18x18x4xf32, #tpu.memory_space<vmem>>, vector<16x16x4xf32>
    tpu.vector_store %arg12[%c1, %c1_7, %c0_8], %3 {strides = array<i32>} : memref<18x18x4xf32, #tpu.memory_space<vmem>>, vector<16x16x4xf32>,
    %c0_9 = arith.constant 0 : index
    %c0_10 = arith.constant 0 : index
    %c0_11 = arith.constant 0 : index
    %7 = vector.load %arg12[%c0_9, %c0_10, %c0_11] : memref<18x18x4xf32, #tpu.memory_space<vmem>>, vector<18x18x4xf32>
    %c0_12 = arith.constant 0 : index
    %c0_13 = arith.constant 0 : index
    %c0_14 = arith.constant 0 : index
    %8 = vector.load %arg2[%c0_12, %c0_13, %c0_14] : memref<3x3x4xf32, #tpu.memory_space<vmem>>, vector<3x3x4xf32>
    %cst_15 = arith.constant 0.000000e+00 : f32
    %9 = vector.broadcast %cst_15 : f32 to vector<16x16x4xf32>
    %10 = vector.extract_strided_slice %7 {offsets = [0, 0, 0], sizes = [16, 16, 4], strides = [1, 1, 1]} : vector<18x18x4xf32> to vector<16x16x4xf32>
    %11 = vector.extract_strided_slice %8 {offsets = [0, 0, 0], sizes = [1, 1, 4], strides = [1, 1, 1]} : vector<3x3x4xf32> to vector<1x1x4xf32>
    %12 = vector.shape_cast %11 : vector<1x1x4xf32> to vector<4xf32>
    %13 = vector.shape_cast %12 : vector<4xf32> to vector<1x1x4xf32>
    %14 = vector.broadcast %13 : vector<1x1x4xf32> to vector<16x16x4xf32>
    %15 = arith.mulf %10, %14 : vector<16x16x4xf32>
    %16 = arith.addf %9, %15 : vector<16x16x4xf32>
    %17 = vector.extract_strided_slice %7 {offsets = [0, 1, 0], sizes = [16, 16, 4], strides = [1, 1, 1]} : vector<18x18x4xf32> to vector<16x16x4xf32>
    %18 = vector.extract_strided_slice %8 {offsets = [0, 1, 0], sizes = [1, 1, 4], strides = [1, 1, 1]} : vector<3x3x4xf32> to vector<1x1x4xf32>
    %19 = vector.shape_cast %18 : vector<1x1x4xf32> to vector<4xf32>
    %20 = vector.shape_cast %19 : vector<4xf32> to vector<1x1x4xf32>
    %21 = vector.broadcast %20 : vector<1x1x4xf32> to vector<16x16x4xf32>
    %22 = arith.mulf %17, %21 : vector<16x16x4xf32>
    %23 = arith.addf %16, %22 : vector<16x16x4xf32>
    %24 = vector.extract_strided_slice %7 {offsets = [0, 2, 0], sizes = [16, 16, 4], strides = [1, 1, 1]} : vector<18x18x4xf32> to vector<16x16x4xf32>
    %25 = vector.extract_strided_slice %8 {offsets = [0, 2, 0], sizes = [1, 1, 4], strides = [1, 1, 1]} : vector<3x3x4xf32> to vector<1x1x4xf32>
    %26 = vector.shape_cast %25 : vector<1x1x4xf32> to vector<4xf32>
    %27 = vector.shape_cast %26 : vector<4xf32> to vector<1x1x4xf32>
    %28 = vector.broadcast %27 : vector<1x1x4xf32> to vector<16x16x4xf32>
    %29 = arith.mulf %24, %28 : vector<16x16x4xf32>
    %30 = arith.addf %23, %29 : vector<16x16x4xf32>
    %31 = vector.extract_strided_slice %7 {offsets = [1, 0, 0], sizes = [16, 16, 4], strides = [1, 1, 1]} : vector<18x18x4xf32> to vector<16x16x4xf32>
    %32 = vector.extract_strided_slice %8 {offsets = [1, 0, 0], sizes = [1, 1, 4], strides = [1, 1, 1]} : vector<3x3x4xf32> to vector<1x1x4xf32>
    %33 = vector.shape_cast %32 : vector<1x1x4xf32> to vector<4xf32>
    %34 = vector.shape_cast %33 : vector<4xf32> to vector<1x1x4xf32>
    %35 = vector.broadcast %34 : vector<1x1x4xf32> to vector<16x16x4xf32>
    %36 = arith.mulf %31, %35 : vector<16x16x4xf32>
    %37 = arith.addf %30, %36 : vector<16x16x4xf32>
    %38 = vector.extract_strided_slice %7 {offsets = [1, 1, 0], sizes = [16, 16, 4], strides = [1, 1, 1]} : vector<18x18x4xf32> to vector<16x16x4xf32>
    %39 = vector.extract_strided_slice %8 {offsets = [1, 1, 0], sizes = [1, 1, 4], strides = [1, 1, 1]} : vector<3x3x4xf32> to vector<1x1x4xf32>
    %40 = vector.shape_cast %39 : vector<1x1x4xf32> to vector<4xf32>
    %41 = vector.shape_cast %40 : vector<4xf32> to vector<1x1x4xf32>
    %42 = vector.broadcast %41 : vector<1x1x4xf32> to vector<16x16x4xf32>
    %43 = arith.mulf %38, %42 : vector<16x16x4xf32>
    %44 = arith.addf %37, %43 : vector<16x16x4xf32>
    %45 = vector.extract_strided_slice %7 {offsets = [1, 2, 0], sizes = [16, 16, 4], strides = [1, 1, 1]} : vector<18x18x4xf32> to vector<16x16x4xf32>
    %46 = vector.extract_strided_slice %8 {offsets = [1, 2, 0], sizes = [1, 1, 4], strides = [1, 1, 1]} : vector<3x3x4xf32> to vector<1x1x4xf32>
    %47 = vector.shape_cast %46 : vector<1x1x4xf32> to vector<4xf32>
    %48 = vector.shape_cast %47 : vector<4xf32> to vector<1x1x4xf32>
    %49 = vector.broadcast %48 : vector<1x1x4xf32> to vector<16x16x4xf32>
    %50 = arith.mulf %45, %49 : vector<16x16x4xf32>
    %51 = arith.addf %44, %50 : vector<16x16x4xf32>
    %52 = vector.extract_strided_slice %7 {offsets = [2, 0, 0], sizes = [16, 16, 4], strides = [1, 1, 1]} : vector<18x18x4xf32> to vector<16x16x4xf32>
    %53 = vector.extract_strided_slice %8 {offsets = [2, 0, 0], sizes = [1, 1, 4], strides = [1, 1, 1]} : vector<3x3x4xf32> to vector<1x1x4xf32>
    %54 = vector.shape_cast %53 : vector<1x1x4xf32> to vector<4xf32>
    %55 = vector.shape_cast %54 : vector<4xf32> to vector<1x1x4xf32>
    %56 = vector.broadcast %55 : vector<1x1x4xf32> to vector<16x16x4xf32>
    %57 = arith.mulf %52, %56 : vector<16x16x4xf32>
    %58 = arith.addf %51, %57 : vector<16x16x4xf32>
    %59 = vector.extract_strided_slice %7 {offsets = [2, 1, 0], sizes = [16, 16, 4], strides = [1, 1, 1]} : vector<18x18x4xf32> to vector<16x16x4xf32>
    %60 = vector.extract_strided_slice %8 {offsets = [2, 1, 0], sizes = [1, 1, 4], strides = [1, 1, 1]} : vector<3x3x4xf32> to vector<1x1x4xf32>
    %61 = vector.shape_cast %60 : vector<1x1x4xf32> to vector<4xf32>
    %62 = vector.shape_cast %61 : vector<4xf32> to vector<1x1x4xf32>
    %63 = vector.broadcast %62 : vector<1x1x4xf32> to vector<16x16x4xf32>
    %64 = arith.mulf %59, %63 : vector<16x16x4xf32>
    %65 = arith.addf %58, %64 : vector<16x16x4xf32>
    %66 = vector.extract_strided_slice %7 {offsets = [2, 2, 0], sizes = [16, 16, 4], strides = [1, 1, 1]} : vector<18x18x4xf32> to vector<16x16x4xf32>
    %67 = vector.extract_strided_slice %8 {offsets = [2, 2, 0], sizes = [1, 1, 4], strides = [1, 1, 1]} : vector<3x3x4xf32> to vector<1x1x4xf32>
    %68 = vector.shape_cast %67 : vector<1x1x4xf32> to vector<4xf32>
    %69 = vector.shape_cast %68 : vector<4xf32> to vector<1x1x4xf32>
    %70 = vector.broadcast %69 : vector<1x1x4xf32> to vector<16x16x4xf32>
    %71 = arith.mulf %66, %70 : vector<16x16x4xf32>
    %72 = arith.addf %65, %71 : vector<16x16x4xf32>
    %73 = vector.shape_cast %72 : vector<16x16x4xf32> to vector<256x4xf32>
    %c0_16 = arith.constant 0 : index
    %c0_17 = arith.constant 0 : index
    %74 = vector.load %arg3[%c0_16, %c0_17] : memref<4x8xf32, #tpu.memory_space<vmem>>, vector<4x8xf32>
    %cst_18 = arith.constant dense<0.000000e+00> : vector<256x8xf32>
    %75 = tpu.matmul %73, %74, %cst_18 {dimension_numbers = #tpu.dot_dimension_numbers<[1], [0], [0], [1], [0, 0, 1, 1], [], []>} : vector<256x4xf32>, vector<4x8xf32>, vector<256x8xf32> -> vector<256x8xf32>
    %c0_19 = arith.constant 0 : index
    %c0_20 = arith.constant 0 : index
    %76 = vector.load %arg4[%c0_19, %c0_20] : memref<1x8xf32, #tpu.memory_space<vmem>>, vector<1x8xf32>
    %77 = vector.broadcast %76 : vector<1x8xf32> to vector<256x8xf32>
    %78 = arith.addf %75, %77 : vector<256x8xf32>
    %cst_21 = arith.constant 0.000000e+00 : f32
    %79 = vector.broadcast %cst_21 : f32 to vector<256x8xf32>
    %80 = arith.maximumf %78, %79 : vector<256x8xf32>
    %81 = vector.shape_cast %80 : vector<256x8xf32> to vector<16x16x8xf32>
    %cst_22 = arith.constant 0.000000e+00 : f32
    %82 = vector.broadcast %cst_22 : f32 to vector<18x18x8xf32>
    %c0_23 = arith.constant 0 : index
    %c0_24 = arith.constant 0 : index
    %c0_25 = arith.constant 0 : index
    %83 = vector.load %arg13[%c0_23, %c0_24, %c0_25] : memref<18x18x8xf32, #tpu.memory_space<vmem>>, vector<18x18x8xf32>
    tpu.vector_store %arg13[%c0_23, %c0_24, %c0_25], %82 {strides = array<i32>} : memref<18x18x8xf32, #tpu.memory_space<vmem>>, vector<18x18x8xf32>,
    %c1_26 = arith.constant 1 : index
    %c1_27 = arith.constant 1 : index
    %c0_28 = arith.constant 0 : index
    %84 = vector.load %arg13[%c1_26, %c1_27, %c0_28] : memref<18x18x8xf32, #tpu.memory_space<vmem>>, vector<16x16x8xf32>
    tpu.vector_store %arg13[%c1_26, %c1_27, %c0_28], %81 {strides = array<i32>} : memref<18x18x8xf32, #tpu.memory_space<vmem>>, vector<16x16x8xf32>,
    %c0_29 = arith.constant 0 : index
    %c0_30 = arith.constant 0 : index
    %c0_31 = arith.constant 0 : index
    %85 = vector.load %arg13[%c0_29, %c0_30, %c0_31] : memref<18x18x8xf32, #tpu.memory_space<vmem>>, vector<18x18x8xf32>
    %c0_32 = arith.constant 0 : index
    %c0_33 = arith.constant 0 : index
    %c0_34 = arith.constant 0 : index
    %86 = vector.load %arg5[%c0_32, %c0_33, %c0_34] : memref<3x3x8xf32, #tpu.memory_space<vmem>>, vector<3x3x8xf32>
    %cst_35 = arith.constant 0.000000e+00 : f32
    %87 = vector.broadcast %cst_35 : f32 to vector<16x16x8xf32>
    %88 = vector.extract_strided_slice %85 {offsets = [0, 0, 0], sizes = [16, 16, 8], strides = [1, 1, 1]} : vector<18x18x8xf32> to vector<16x16x8xf32>
    %89 = vector.extract_strided_slice %86 {offsets = [0, 0, 0], sizes = [1, 1, 8], strides = [1, 1, 1]} : vector<3x3x8xf32> to vector<1x1x8xf32>
    %90 = vector.shape_cast %89 : vector<1x1x8xf32> to vector<8xf32>
    %91 = vector.shape_cast %90 : vector<8xf32> to vector<1x1x8xf32>
    %92 = vector.broadcast %91 : vector<1x1x8xf32> to vector<16x16x8xf32>
    %93 = arith.mulf %88, %92 : vector<16x16x8xf32>
    %94 = arith.addf %87, %93 : vector<16x16x8xf32>
    %95 = vector.extract_strided_slice %85 {offsets = [0, 1, 0], sizes = [16, 16, 8], strides = [1, 1, 1]} : vector<18x18x8xf32> to vector<16x16x8xf32>
    %96 = vector.extract_strided_slice %86 {offsets = [0, 1, 0], sizes = [1, 1, 8], strides = [1, 1, 1]} : vector<3x3x8xf32> to vector<1x1x8xf32>
    %97 = vector.shape_cast %96 : vector<1x1x8xf32> to vector<8xf32>
    %98 = vector.shape_cast %97 : vector<8xf32> to vector<1x1x8xf32>
    %99 = vector.broadcast %98 : vector<1x1x8xf32> to vector<16x16x8xf32>
    %100 = arith.mulf %95, %99 : vector<16x16x8xf32>
    %101 = arith.addf %94, %100 : vector<16x16x8xf32>
    %102 = vector.extract_strided_slice %85 {offsets = [0, 2, 0], sizes = [16, 16, 8], strides = [1, 1, 1]} : vector<18x18x8xf32> to vector<16x16x8xf32>
    %103 = vector.extract_strided_slice %86 {offsets = [0, 2, 0], sizes = [1, 1, 8], strides = [1, 1, 1]} : vector<3x3x8xf32> to vector<1x1x8xf32>
    %104 = vector.shape_cast %103 : vector<1x1x8xf32> to vector<8xf32>
    %105 = vector.shape_cast %104 : vector<8xf32> to vector<1x1x8xf32>
    %106 = vector.broadcast %105 : vector<1x1x8xf32> to vector<16x16x8xf32>
    %107 = arith.mulf %102, %106 : vector<16x16x8xf32>
    %108 = arith.addf %101, %107 : vector<16x16x8xf32>
    %109 = vector.extract_strided_slice %85 {offsets = [1, 0, 0], sizes = [16, 16, 8], strides = [1, 1, 1]} : vector<18x18x8xf32> to vector<16x16x8xf32>
    %110 = vector.extract_strided_slice %86 {offsets = [1, 0, 0], sizes = [1, 1, 8], strides = [1, 1, 1]} : vector<3x3x8xf32> to vector<1x1x8xf32>
    %111 = vector.shape_cast %110 : vector<1x1x8xf32> to vector<8xf32>
    %112 = vector.shape_cast %111 : vector<8xf32> to vector<1x1x8xf32>
    %113 = vector.broadcast %112 : vector<1x1x8xf32> to vector<16x16x8xf32>
    %114 = arith.mulf %109, %113 : vector<16x16x8xf32>
    %115 = arith.addf %108, %114 : vector<16x16x8xf32>
    %116 = vector.extract_strided_slice %85 {offsets = [1, 1, 0], sizes = [16, 16, 8], strides = [1, 1, 1]} : vector<18x18x8xf32> to vector<16x16x8xf32>
    %117 = vector.extract_strided_slice %86 {offsets = [1, 1, 0], sizes = [1, 1, 8], strides = [1, 1, 1]} : vector<3x3x8xf32> to vector<1x1x8xf32>
    %118 = vector.shape_cast %117 : vector<1x1x8xf32> to vector<8xf32>
    %119 = vector.shape_cast %118 : vector<8xf32> to vector<1x1x8xf32>
    %120 = vector.broadcast %119 : vector<1x1x8xf32> to vector<16x16x8xf32>
    %121 = arith.mulf %116, %120 : vector<16x16x8xf32>
    %122 = arith.addf %115, %121 : vector<16x16x8xf32>
    %123 = vector.extract_strided_slice %85 {offsets = [1, 2, 0], sizes = [16, 16, 8], strides = [1, 1, 1]} : vector<18x18x8xf32> to vector<16x16x8xf32>
    %124 = vector.extract_strided_slice %86 {offsets = [1, 2, 0], sizes = [1, 1, 8], strides = [1, 1, 1]} : vector<3x3x8xf32> to vector<1x1x8xf32>
    %125 = vector.shape_cast %124 : vector<1x1x8xf32> to vector<8xf32>
    %126 = vector.shape_cast %125 : vector<8xf32> to vector<1x1x8xf32>
    %127 = vector.broadcast %126 : vector<1x1x8xf32> to vector<16x16x8xf32>
    %128 = arith.mulf %123, %127 : vector<16x16x8xf32>
    %129 = arith.addf %122, %128 : vector<16x16x8xf32>
    %130 = vector.extract_strided_slice %85 {offsets = [2, 0, 0], sizes = [16, 16, 8], strides = [1, 1, 1]} : vector<18x18x8xf32> to vector<16x16x8xf32>
    %131 = vector.extract_strided_slice %86 {offsets = [2, 0, 0], sizes = [1, 1, 8], strides = [1, 1, 1]} : vector<3x3x8xf32> to vector<1x1x8xf32>
    %132 = vector.shape_cast %131 : vector<1x1x8xf32> to vector<8xf32>
    %133 = vector.shape_cast %132 : vector<8xf32> to vector<1x1x8xf32>
    %134 = vector.broadcast %133 : vector<1x1x8xf32> to vector<16x16x8xf32>
    %135 = arith.mulf %130, %134 : vector<16x16x8xf32>
    %136 = arith.addf %129, %135 : vector<16x16x8xf32>
    %137 = vector.extract_strided_slice %85 {offsets = [2, 1, 0], sizes = [16, 16, 8], strides = [1, 1, 1]} : vector<18x18x8xf32> to vector<16x16x8xf32>
    %138 = vector.extract_strided_slice %86 {offsets = [2, 1, 0], sizes = [1, 1, 8], strides = [1, 1, 1]} : vector<3x3x8xf32> to vector<1x1x8xf32>
    %139 = vector.shape_cast %138 : vector<1x1x8xf32> to vector<8xf32>
    %140 = vector.shape_cast %139 : vector<8xf32> to vector<1x1x8xf32>
    %141 = vector.broadcast %140 : vector<1x1x8xf32> to vector<16x16x8xf32>
    %142 = arith.mulf %137, %141 : vector<16x16x8xf32>
    %143 = arith.addf %136, %142 : vector<16x16x8xf32>
    %144 = vector.extract_strided_slice %85 {offsets = [2, 2, 0], sizes = [16, 16, 8], strides = [1, 1, 1]} : vector<18x18x8xf32> to vector<16x16x8xf32>
    %145 = vector.extract_strided_slice %86 {offsets = [2, 2, 0], sizes = [1, 1, 8], strides = [1, 1, 1]} : vector<3x3x8xf32> to vector<1x1x8xf32>
    %146 = vector.shape_cast %145 : vector<1x1x8xf32> to vector<8xf32>
    %147 = vector.shape_cast %146 : vector<8xf32> to vector<1x1x8xf32>
    %148 = vector.broadcast %147 : vector<1x1x8xf32> to vector<16x16x8xf32>
    %149 = arith.mulf %144, %148 : vector<16x16x8xf32>
    %150 = arith.addf %143, %149 : vector<16x16x8xf32>
    %151 = vector.shape_cast %150 : vector<16x16x8xf32> to vector<256x8xf32>
    %c0_36 = arith.constant 0 : index
    %c0_37 = arith.constant 0 : index
    %152 = vector.load %arg6[%c0_36, %c0_37] : memref<8x8xf32, #tpu.memory_space<vmem>>, vector<8x8xf32>
    %cst_38 = arith.constant dense<0.000000e+00> : vector<256x8xf32>
    %153 = tpu.matmul %151, %152, %cst_38 {dimension_numbers = #tpu.dot_dimension_numbers<[1], [0], [0], [1], [0, 0, 1, 1], [], []>} : vector<256x8xf32>, vector<8x8xf32>, vector<256x8xf32> -> vector<256x8xf32>
    %c0_39 = arith.constant 0 : index
    %c0_40 = arith.constant 0 : index
    %154 = vector.load %arg7[%c0_39, %c0_40] : memref<1x8xf32, #tpu.memory_space<vmem>>, vector<1x8xf32>
    %155 = vector.broadcast %154 : vector<1x8xf32> to vector<256x8xf32>
    %156 = arith.addf %153, %155 : vector<256x8xf32>
    %cst_41 = arith.constant -3.40282347E+38 : f32
    %157 = vector.broadcast %cst_41 : f32 to vector<18x18x8xf32>
    %c0_42 = arith.constant 0 : index
    %c0_43 = arith.constant 0 : index
    %c0_44 = arith.constant 0 : index
    %158 = vector.load %arg13[%c0_42, %c0_43, %c0_44] : memref<18x18x8xf32, #tpu.memory_space<vmem>>, vector<18x18x8xf32>
    tpu.vector_store %arg13[%c0_42, %c0_43, %c0_44], %157 {strides = array<i32>} : memref<18x18x8xf32, #tpu.memory_space<vmem>>, vector<18x18x8xf32>,
    %159 = vector.shape_cast %156 : vector<256x8xf32> to vector<16x16x8xf32>
    %c1_45 = arith.constant 1 : index
    %c1_46 = arith.constant 1 : index
    %c0_47 = arith.constant 0 : index
    %160 = vector.load %arg13[%c1_45, %c1_46, %c0_47] : memref<18x18x8xf32, #tpu.memory_space<vmem>>, vector<16x16x8xf32>
    tpu.vector_store %arg13[%c1_45, %c1_46, %c0_47], %159 {strides = array<i32>} : memref<18x18x8xf32, #tpu.memory_space<vmem>>, vector<16x16x8xf32>,
    %c0_48 = arith.constant 0 : index
    %c0_49 = arith.constant 0 : index
    %c0_50 = arith.constant 0 : index
    %161 = vector.load %arg13[%c0_48, %c0_49, %c0_50] : memref<18x18x8xf32, #tpu.memory_space<vmem>>, vector<18x18x8xf32>
    %162 = vector.extract_strided_slice %161 {offsets = [0, 0, 0], sizes = [18, 16, 8], strides = [1, 1, 1]} : vector<18x18x8xf32> to vector<18x16x8xf32>
    %163 = vector.extract_strided_slice %161 {offsets = [0, 1, 0], sizes = [18, 16, 8], strides = [1, 1, 1]} : vector<18x18x8xf32> to vector<18x16x8xf32>
    %164 = arith.maximumf %162, %163 : vector<18x16x8xf32>
    %165 = vector.extract_strided_slice %161 {offsets = [0, 2, 0], sizes = [18, 16, 8], strides = [1, 1, 1]} : vector<18x18x8xf32> to vector<18x16x8xf32>
    %166 = arith.maximumf %164, %165 : vector<18x16x8xf32>
    %167 = vector.extract_strided_slice %166 {offsets = [0, 0, 0], sizes = [16, 16, 8], strides = [1, 1, 1]} : vector<18x16x8xf32> to vector<16x16x8xf32>
    %168 = vector.extract_strided_slice %166 {offsets = [1, 0, 0], sizes = [16, 16, 8], strides = [1, 1, 1]} : vector<18x16x8xf32> to vector<16x16x8xf32>
    %169 = arith.maximumf %167, %168 : vector<16x16x8xf32>
    %170 = vector.extract_strided_slice %166 {offsets = [2, 0, 0], sizes = [16, 16, 8], strides = [1, 1, 1]} : vector<18x16x8xf32> to vector<16x16x8xf32>
    %171 = arith.maximumf %169, %170 : vector<16x16x8xf32>
    %c0_51 = arith.constant 0 : index
    %c0_52 = arith.constant 0 : index
    %172 = vector.load %arg10[%c0_51, %c0_52] : memref<64x256xf32, #tpu.memory_space<vmem>>, vector<64x256xf32>
    %173 = vector.shape_cast %171 : vector<16x16x8xf32> to vector<256x8xf32>
    %cst_53 = arith.constant dense<0.000000e+00> : vector<64x8xf32>
    %174 = tpu.matmul %172, %173, %cst_53 {dimension_numbers = #tpu.dot_dimension_numbers<[1], [0], [0], [1], [0, 0, 1, 1], [], []>} : vector<64x256xf32>, vector<256x8xf32>, vector<64x8xf32> -> vector<64x8xf32>
    %175 = vector.shape_cast %1 : vector<16x16x4xf32> to vector<256x4xf32>
    %cst_54 = arith.constant dense<0.000000e+00> : vector<64x4xf32>
    %176 = tpu.matmul %172, %175, %cst_54 {dimension_numbers = #tpu.dot_dimension_numbers<[1], [0], [0], [1], [0, 0, 1, 1], [], []>} : vector<64x256xf32>, vector<256x4xf32>, vector<64x4xf32> -> vector<64x4xf32>
    %c0_55 = arith.constant 0 : index
    %c0_56 = arith.constant 0 : index
    %177 = vector.load %arg8[%c0_55, %c0_56] : memref<4x8xf32, #tpu.memory_space<vmem>>, vector<4x8xf32>
    %cst_57 = arith.constant dense<0.000000e+00> : vector<64x8xf32>
    %178 = tpu.matmul %176, %177, %cst_57 {dimension_numbers = #tpu.dot_dimension_numbers<[1], [0], [0], [1], [0, 0, 1, 1], [], []>} : vector<64x4xf32>, vector<4x8xf32>, vector<64x8xf32> -> vector<64x8xf32>
    %c0_58 = arith.constant 0 : index
    %c0_59 = arith.constant 0 : index
    %179 = vector.load %arg9[%c0_58, %c0_59] : memref<1x8xf32, #tpu.memory_space<vmem>>, vector<1x8xf32>
    %180 = vector.broadcast %179 : vector<1x8xf32> to vector<64x8xf32>
    %181 = arith.addf %178, %180 : vector<64x8xf32>
    %182 = arith.addf %174, %181 : vector<64x8xf32>
    %183 = tpu.iota {dimensions = array<i32: 0>} : vector<8x8xi32>
    %184 = tpu.iota {dimensions = array<i32: 1>} : vector<8x8xi32>
    %185 = arith.cmpi eq, %183, %184 : vector<8x8xi32>
    %cst_60 = arith.constant 1.000000e+00 : f32
    %cst_61 = arith.constant 0.000000e+00 : f32
    %186 = vector.broadcast %cst_60 : f32 to vector<8x8xf32>
    %187 = vector.broadcast %cst_61 : f32 to vector<8x8xf32>
    %188 = arith.select %185, %186, %187 : vector<8x8xi1>, vector<8x8xf32>
    %cst_62 = arith.constant dense<0.000000e+00> : vector<8x64xf32>
    %189 = tpu.matmul %188, %182, %cst_62 {dimension_numbers = #tpu.dot_dimension_numbers<[1], [1], [0], [0], [0, 0, 1, 0], [], []>} : vector<8x8xf32>, vector<64x8xf32>, vector<8x64xf32> -> vector<8x64xf32>
    %c0_63 = arith.constant 0 : index
    %c0_64 = arith.constant 0 : index
    %c0_65 = arith.constant 0 : index
    %190 = vector.load %arg11[%c0_63, %c0_64, %c0_65] : memref<1x8x64xf32, #tpu.memory_space<vmem>>, vector<1x8x64xf32>
    %191 = vector.shape_cast %190 : vector<1x8x64xf32> to vector<8x64xf32>
    %192 = vector.shape_cast %189 : vector<8x64xf32> to vector<1x8x64xf32>
    tpu.vector_store %arg11[%c0_63, %c0_64, %c0_65], %192 {strides = array<i32>} : memref<1x8x64xf32, #tpu.memory_space<vmem>>, vector<1x8x64xf32>,
    return
  }
  func.func @transform_0(%arg0: i32) -> (i32, i32, i32, i32) {
    %c0_i32 = arith.constant 0 : i32
    %c0_i32_0 = arith.constant 0 : i32
    %c0_i32_1 = arith.constant 0 : i32
    %c0_i32_2 = arith.constant 0 : i32
    return %arg0, %c0_i32, %c0_i32_0, %c0_i32_1 : i32, i32, i32, i32
  }
  func.func @transform_1(%arg0: i32) -> (i32, i32, i32) {
    %c0_i32 = arith.constant 0 : i32
    %c0_i32_0 = arith.constant 0 : i32
    %c0_i32_1 = arith.constant 0 : i32
    %c0_i32_2 = arith.constant 0 : i32
    return %c0_i32, %c0_i32_0, %c0_i32_1 : i32, i32, i32
  }
  func.func @transform_2(%arg0: i32) -> (i32, i32) {
    %c0_i32 = arith.constant 0 : i32
    %c0_i32_0 = arith.constant 0 : i32
    %c0_i32_1 = arith.constant 0 : i32
    return %c0_i32, %c0_i32_0 : i32, i32
  }
  func.func @transform_3(%arg0: i32) -> (i32, i32) {
    %c0_i32 = arith.constant 0 : i32
    %c0_i32_0 = arith.constant 0 : i32
    %c0_i32_1 = arith.constant 0 : i32
    return %c0_i32, %c0_i32_0 : i32, i32
  }
  func.func @transform_4(%arg0: i32) -> (i32, i32, i32) {
    %c0_i32 = arith.constant 0 : i32
    %c0_i32_0 = arith.constant 0 : i32
    %c0_i32_1 = arith.constant 0 : i32
    %c0_i32_2 = arith.constant 0 : i32
    return %c0_i32, %c0_i32_0, %c0_i32_1 : i32, i32, i32
  }
  func.func @transform_5(%arg0: i32) -> (i32, i32) {
    %c0_i32 = arith.constant 0 : i32
    %c0_i32_0 = arith.constant 0 : i32
    %c0_i32_1 = arith.constant 0 : i32
    return %c0_i32, %c0_i32_0 : i32, i32
  }
  func.func @transform_6(%arg0: i32) -> (i32, i32) {
    %c0_i32 = arith.constant 0 : i32
    %c0_i32_0 = arith.constant 0 : i32
    %c0_i32_1 = arith.constant 0 : i32
    return %c0_i32, %c0_i32_0 : i32, i32
  }
  func.func @transform_7(%arg0: i32) -> (i32, i32) {
    %c0_i32 = arith.constant 0 : i32
    %c0_i32_0 = arith.constant 0 : i32
    %c0_i32_1 = arith.constant 0 : i32
    return %c0_i32, %c0_i32_0 : i32, i32
  }
  func.func @transform_8(%arg0: i32) -> (i32, i32) {
    %c0_i32 = arith.constant 0 : i32
    %c0_i32_0 = arith.constant 0 : i32
    %c0_i32_1 = arith.constant 0 : i32
    return %c0_i32, %c0_i32_0 : i32, i32
  }
  func.func @transform_9(%arg0: i32) -> (i32, i32) {
    %c0_i32 = arith.constant 0 : i32
    %c0_i32_0 = arith.constant 0 : i32
    %c0_i32_1 = arith.constant 0 : i32
    return %c0_i32, %c0_i32_0 : i32, i32
  }
  func.func @transform_10(%arg0: i32) -> (i32, i32, i32) {
    %c0_i32 = arith.constant 0 : i32
    %c0_i32_0 = arith.constant 0 : i32
    %c0_i32_1 = arith.constant 0 : i32
    return %arg0, %c0_i32, %c0_i32_0 : i32, i32, i32
  }
}

</mosaic_0001>

<llo_original>
// kernel: xception_block_forward.1
$region0: #{xception_block_forward.1}
  #allocation0 [shape = 'u32[]', space=smem, size = 0x4, offset = 0x4, fixed_abs, tag = 'smem constant byte address 0x4 - core index']
  #allocation1 [shape = 'u32[72,128]{1,0:T(1,128)}', space=vmem, size = 0x9000, scoped, tag = 'internal scratch']
  #allocation2 [shape = 'f32[18,18,4]{2,1,0:T(8,128)}', space=vmem, size = 0x36000, scoped, tag = 'scratch operand']
  #allocation3 [shape = 'f32[18,18,8]{2,1,0:T(8,128)}', space=vmem, size = 0x36000, scoped, tag = 'scratch operand']
  %s0 = inlined_call_operand.vmem [shape: f32[2,16,16,4], index: 0, kind: input, shape index: {}]
  %s1 = inlined_call_operand.vmem [shape: f32[3,3,4], index: 1, kind: input, shape index: {}]
  %s2 = inlined_call_operand.vmem [shape: f32[4,8], index: 2, kind: input, shape index: {}]
  %s3 = inlined_call_operand.vmem [shape: f32[1,8], index: 3, kind: input, shape index: {}]
  %s4 = inlined_call_operand.vmem [shape: f32[3,3,8], index: 4, kind: input, shape index: {}]
  %s5 = inlined_call_operand.vmem [shape: f32[8,8], index: 5, kind: input, shape index: {}]
  %s6 = inlined_call_operand.vmem [shape: f32[1,8], index: 6, kind: input, shape index: {}]
  %s7 = inlined_call_operand.vmem [shape: f32[4,8], index: 7, kind: input, shape index: {}]
  %s8 = inlined_call_operand.vmem [shape: f32[1,8], index: 8, kind: input, shape index: {}]
  %s9 = inlined_call_operand.vmem [shape: f32[64,256], index: 9, kind: input, shape index: {}]
  %s10 = inlined_call_operand.vmem [shape: f32[2,8,64], index: 10, kind: output, shape index: {}]
  %s11 = sld [smem:[#allocation0]]
  $region73: #{xception_block_forward.1} parent=0
    _
  %s13 = ssub.s32 1, %s11
  %s14 = scalar_select 0, %s13, %s11
  loop: start=0, step=1, limit=4
  $region2: #{xception_block_forward.1} parent=0 // loop_pre_header
    _
  $region3: #{xception_block_forward.1} parent=0 // loop_header
    %s16 = sphi 0, %s20
    %p17 = scmp.ge.s32.totalorder %s16, 4
    %s26 = sphi 0, %s28
    %s29 = sphi 0, %s26
    %s30 = sphi 0, %s29
    %s46 = sphi 0, %s30
    %s50 = sphi 0, %s50
    %s52 = sphi 0, %s50
    %s53 = sphi 0, %s52
    %s67 = sphi 0, %s53
    %s71 = sphi 0, %s71
    %s73 = sphi 0, %s71
    %s74 = sphi 0, %s73
    %s88 = sphi 0, %s74
    %s92 = sphi 0, %s92
    %s94 = sphi 0, %s92
    %s95 = sphi 0, %s94
    %s109 = sphi 0, %s95
    %s113 = sphi 0, %s113
    %s115 = sphi 0, %s113
    %s116 = sphi 0, %s115
    %s130 = sphi 0, %s116
    %s134 = sphi 0, %s134
    %s136 = sphi 0, %s134
    %s137 = sphi 0, %s136
    %s151 = sphi 0, %s137
    %s155 = sphi 0, %s155
    %s157 = sphi 0, %s155
    %s158 = sphi 0, %s157
    %s172 = sphi 0, %s158
    %s176 = sphi 0, %s176
    %s178 = sphi 0, %s176
    %s179 = sphi 0, %s178
    %s193 = sphi 0, %s179
    %s197 = sphi 0, %s197
    %s199 = sphi 0, %s197
    %s200 = sphi 0, %s199
    %s214 = sphi 0, %s200
    %s218 = sphi 0, %s218
    %s220 = sphi 0, %s218
    %s221 = sphi 0, %s220
    %s235 = sphi 0, %s221
    %s241 = sphi 0, %s243
    %s244 = sphi 0, %s241
    %s245 = sphi 0, %s244
    %s261 = sphi 0, %s245
  $region4: #{xception_block_forward.1} parent=0 // loop_header_branch
    %19 = sbr.rel (%p17) target = $region8
  $region5: #{xception_block_forward.1} parent=0 // loop_body
    %s21 = ssub.s32 %s16, 1
    %s22 = ssub.s32 %s16, 2
    %s23 = sadd.s32 %s16, 1
    %s24 = ssub.s32 %s16, %s23
    %p25 = scmp.eq.s32.totalorder %s24, 0
    %s27 = sadd.s32 %s26, 1
    %s28 = scalar_select %p25, %s26, %s27
    %p31 = pneg %p25
    %p32 = scmp.eq.s32.totalorder %s16, 1
    %p33 = por %p31, %p32
    %p34 = scmp.ne.s32.totalorder %s26, %s29
    %p35 = scmp.eq.s32.totalorder %s16, 0
    %p36 = por %p34, %p35
    %p37 = scmp.ne.s32.totalorder %s26, %s29
    %p38 = scmp.eq.s32.totalorder %s21, 1
    %p39 = por %p37, %p38
    %p40 = scmp.ne.s32.totalorder %s29, %s30
    %p41 = scmp.eq.s32.totalorder %s21, 0
    %p42 = por %p40, %p41
    %p43 = scmp.ne.s32.totalorder %s29, %s30
    %p44 = scmp.eq.s32.totalorder %s22, 1
    %p45 = por %p43, %p44
    %p47 = scmp.ne.s32.totalorder %s30, %s46
    %p48 = scmp.eq.s32.totalorder %s22, 0
    %p49 = por %p47, %p48
    %s51 = sadd.s32 %s50, 1
    %p54 = scmp.eq.s32.totalorder %s16, 1
    %p55 = scmp.ne.s32.totalorder %s50, %s52
    %p56 = scmp.eq.s32.totalorder %s16, 0
    %p57 = por %p55, %p56
    %p58 = scmp.ne.s32.totalorder %s50, %s52
    %p59 = scmp.eq.s32.totalorder %s21, 1
    %p60 = por %p58, %p59
    %p61 = scmp.ne.s32.totalorder %s52, %s53
    %p62 = scmp.eq.s32.totalorder %s21, 0
    %p63 = por %p61, %p62
    %p64 = scmp.ne.s32.totalorder %s52, %s53
    %p65 = scmp.eq.s32.totalorder %s22, 1
    %p66 = por %p64, %p65
    %p68 = scmp.ne.s32.totalorder %s53, %s67
    %p69 = scmp.eq.s32.totalorder %s22, 0
    %p70 = por %p68, %p69
    %s72 = sadd.s32 %s71, 1
    %p75 = scmp.eq.s32.totalorder %s16, 1
    %p76 = scmp.ne.s32.totalorder %s71, %s73
    %p77 = scmp.eq.s32.totalorder %s16, 0
    %p78 = por %p76, %p77
    %p79 = scmp.ne.s32.totalorder %s71, %s73
    %p80 = scmp.eq.s32.totalorder %s21, 1
    %p81 = por %p79, %p80
    %p82 = scmp.ne.s32.totalorder %s73, %s74
    %p83 = scmp.eq.s32.totalorder %s21, 0
    %p84 = por %p82, %p83
    %p85 = scmp.ne.s32.totalorder %s73, %s74
    %p86 = scmp.eq.s32.totalorder %s22, 1
    %p87 = por %p85, %p86
    %p89 = scmp.ne.s32.totalorder %s74, %s88
    %p90 = scmp.eq.s32.totalorder %s22, 0
    %p91 = por %p89, %p90
    %s93 = sadd.s32 %s92, 1
    %p96 = scmp.eq.s32.totalorder %s16, 1
    %p97 = scmp.ne.s32.totalorder %s92, %s94
    %p98 = scmp.eq.s32.totalorder %s16, 0
    %p99 = por %p97, %p98
    %p100 = scmp.ne.s32.totalorder %s92, %s94
    %p101 = scmp.eq.s32.totalorder %s21, 1
    %p102 = por %p100, %p101
    %p103 = scmp.ne.s32.totalorder %s94, %s95
    %p104 = scmp.eq.s32.totalorder %s21, 0
    %p105 = por %p103, %p104
    %p106 = scmp.ne.s32.totalorder %s94, %s95
    %p107 = scmp.eq.s32.totalorder %s22, 1
    %p108 = por %p106, %p107
    %p110 = scmp.ne.s32.totalorder %s95, %s109
    %p111 = scmp.eq.s32.totalorder %s22, 0
    %p112 = por %p110, %p111
    %s114 = sadd.s32 %s113, 1
    %p117 = scmp.eq.s32.totalorder %s16, 1
    %p118 = scmp.ne.s32.totalorder %s113, %s115
    %p119 = scmp.eq.s32.totalorder %s16, 0
    %p120 = por %p118, %p119
    %p121 = scmp.ne.s32.totalorder %s113, %s115
    %p122 = scmp.eq.s32.totalorder %s21, 1
    %p123 = por %p121, %p122
    %p124 = scmp.ne.s32.totalorder %s115, %s116
    %p125 = scmp.eq.s32.totalorder %s21, 0
    %p126 = por %p124, %p125
    %p127 = scmp.ne.s32.totalorder %s115, %s116
    %p128 = scmp.eq.s32.totalorder %s22, 1
    %p129 = por %p127, %p128
    %p131 = scmp.ne.s32.totalorder %s116, %s130
    %p132 = scmp.eq.s32.totalorder %s22, 0
    %p133 = por %p131, %p132
    %s135 = sadd.s32 %s134, 1
    %p138 = scmp.eq.s32.totalorder %s16, 1
    %p139 = scmp.ne.s32.totalorder %s134, %s136
    %p140 = scmp.eq.s32.totalorder %s16, 0
    %p141 = por %p139, %p140
    %p142 = scmp.ne.s32.totalorder %s134, %s136
    %p143 = scmp.eq.s32.totalorder %s21, 1
    %p144 = por %p142, %p143
    %p145 = scmp.ne.s32.totalorder %s136, %s137
    %p146 = scmp.eq.s32.totalorder %s21, 0
    %p147 = por %p145, %p146
    %p148 = scmp.ne.s32.totalorder %s136, %s137
    %p149 = scmp.eq.s32.totalorder %s22, 1
    %p150 = por %p148, %p149
    %p152 = scmp.ne.s32.totalorder %s137, %s151
    %p153 = scmp.eq.s32.totalorder %s22, 0
    %p154 = por %p152, %p153
    %s156 = sadd.s32 %s155, 1
    %p159 = scmp.eq.s32.totalorder %s16, 1
    %p160 = scmp.ne.s32.totalorder %s155, %s157
    %p161 = scmp.eq.s32.totalorder %s16, 0
    %p162 = por %p160, %p161
    %p163 = scmp.ne.s32.totalorder %s155, %s157
    %p164 = scmp.eq.s32.totalorder %s21, 1
    %p165 = por %p163, %p164
    %p166 = scmp.ne.s32.totalorder %s157, %s158
    %p167 = scmp.eq.s32.totalorder %s21, 0
    %p168 = por %p166, %p167
    %p169 = scmp.ne.s32.totalorder %s157, %s158
    %p170 = scmp.eq.s32.totalorder %s22, 1
    %p171 = por %p169, %p170
    %p173 = scmp.ne.s32.totalorder %s158, %s172
    %p174 = scmp.eq.s32.totalorder %s22, 0
    %p175 = por %p173, %p174
    %s177 = sadd.s32 %s176, 1
    %p180 = scmp.eq.s32.totalorder %s16, 1
    %p181 = scmp.ne.s32.totalorder %s176, %s178
    %p182 = scmp.eq.s32.totalorder %s16, 0
    %p183 = por %p181, %p182
    %p184 = scmp.ne.s32.totalorder %s176, %s178
    %p185 = scmp.eq.s32.totalorder %s21, 1
    %p186 = por %p184, %p185
    %p187 = scmp.ne.s32.totalorder %s178, %s179
    %p188 = scmp.eq.s32.totalorder %s21, 0
    %p189 = por %p187, %p188
    %p190 = scmp.ne.s32.totalorder %s178, %s179
    %p191 = scmp.eq.s32.totalorder %s22, 1
    %p192 = por %p190, %p191
    %p194 = scmp.ne.s32.totalorder %s179, %s193
    %p195 = scmp.eq.s32.totalorder %s22, 0
    %p196 = por %p194, %p195
    %s198 = sadd.s32 %s197, 1
    %p201 = scmp.eq.s32.totalorder %s16, 1
    %p202 = scmp.ne.s32.totalorder %s197, %s199
    %p203 = scmp.eq.s32.totalorder %s16, 0
    %p204 = por %p202, %p203
    %p205 = scmp.ne.s32.totalorder %s197, %s199
    %p206 = scmp.eq.s32.totalorder %s21, 1
    %p207 = por %p205, %p206
    %p208 = scmp.ne.s32.totalorder %s199, %s200
    %p209 = scmp.eq.s32.totalorder %s21, 0
    %p210 = por %p208, %p209
    %p211 = scmp.ne.s32.totalorder %s199, %s200
    %p212 = scmp.eq.s32.totalorder %s22, 1
    %p213 = por %p211, %p212
    %p215 = scmp.ne.s32.totalorder %s200, %s214
    %p216 = scmp.eq.s32.totalorder %s22, 0
    %p217 = por %p215, %p216
    %s219 = sadd.s32 %s218, 1
    %p222 = scmp.eq.s32.totalorder %s16, 1
    %p223 = scmp.ne.s32.totalorder %s218, %s220
    %p224 = scmp.eq.s32.totalorder %s16, 0
    %p225 = por %p223, %p224
    %p226 = scmp.ne.s32.totalorder %s218, %s220
    %p227 = scmp.eq.s32.totalorder %s21, 1
    %p228 = por %p226, %p227
    %p229 = scmp.ne.s32.totalorder %s220, %s221
    %p230 = scmp.eq.s32.totalorder %s21, 0
    %p231 = por %p229, %p230
    %p232 = scmp.ne.s32.totalorder %s220, %s221
    %p233 = scmp.eq.s32.totalorder %s22, 1
    %p234 = por %p232, %p233
    %p236 = scmp.ne.s32.totalorder %s221, %s235
    %p237 = scmp.eq.s32.totalorder %s22, 0
    %p238 = por %p236, %p237
    %s239 = ssub.s32 %s16, %s23
    %p240 = scmp.eq.s32.totalorder %s239, 0
    %s242 = sadd.s32 %s241, 1
    %s243 = scalar_select %p240, %s241, %s242
    %p246 = pneg %p240
    %p247 = scmp.eq.s32.totalorder %s16, 1
    %p248 = por %p246, %p247
    %p249 = scmp.ne.s32.totalorder %s241, %s244
    %p250 = scmp.eq.s32.totalorder %s16, 0
    %p251 = por %p249, %p250
    %p252 = scmp.ne.s32.totalorder %s241, %s244
    %p253 = scmp.eq.s32.totalorder %s21, 1
    %p254 = por %p252, %p253
    %p255 = scmp.ne.s32.totalorder %s244, %s245
    %p256 = scmp.eq.s32.totalorder %s21, 0
    %p257 = por %p255, %p256
    %p258 = scmp.ne.s32.totalorder %s244, %s245
    %p259 = scmp.eq.s32.totalorder %s22, 1
    %p260 = por %p258, %p259
    %p262 = scmp.ne.s32.totalorder %s245, %s261
    %p263 = scmp.eq.s32.totalorder %s22, 0
    %p264 = por %p262, %p263
    %p265 = scmp.le.s32.totalorder 1, %s16
    %p266 = scmp.lt.s32.totalorder %s16, 3
    %p267 = pnand %p265, %p266
    %p268 = pneg %p267
    // Predicated region
    $region9: #{xception_block_forward.1} parent=5 // pred_check
      _
    $region10: #{xception_block_forward.1} parent=5 // pred_check_branch
      %270 = sbr.rel (%p267) target = $region12
    $region11: #{xception_block_forward.1} parent=5 // pred_region
      %s271 = ssub.s32 %s16, 1
      // Predicated region
      $region13: #{xception_block_forward.1} parent=11 // pred_check
        %p272 = pneg %p63
      $region14: #{xception_block_forward.1} parent=11 // pred_check_branch
        %274 = sbr.rel (%p272) target = $region16
      $region15: #{xception_block_forward.1} parent=11 // pred_region
        _
      $region16: #{xception_block_forward.1} parent=11 // pred_fallthru
        _
      // Predicated region
      $region17: #{xception_block_forward.1} parent=11 // pred_check
        %p275 = pneg %p84
      $region18: #{xception_block_forward.1} parent=11 // pred_check_branch
        %277 = sbr.rel (%p275) target = $region20
      $region19: #{xception_block_forward.1} parent=11 // pred_region
        _
      $region20: #{xception_block_forward.1} parent=11 // pred_fallthru
        _
      // Predicated region
      $region21: #{xception_block_forward.1} parent=11 // pred_check
        %p278 = pneg %p105
      $region22: #{xception_block_forward.1} parent=11 // pred_check_branch
        %280 = sbr.rel (%p278) target = $region24
      $region23: #{xception_block_forward.1} parent=11 // pred_region
        _
      $region24: #{xception_block_forward.1} parent=11 // pred_fallthru
        _
      // Predicated region
      $region25: #{xception_block_forward.1} parent=11 // pred_check
        %p281 = pneg %p126
      $region26: #{xception_block_forward.1} parent=11 // pred_check_branch
        %283 = sbr.rel (%p281) target = $region28
      $region27: #{xception_block_forward.1} parent=11 // pred_region
        _
      $region28: #{xception_block_forward.1} parent=11 // pred_fallthru
        _
      // Predicated region
      $region29: #{xception_block_forward.1} parent=11 // pred_check
        %p284 = pneg %p147
      $region30: #{xception_block_forward.1} parent=11 // pred_check_branch
        %286 = sbr.rel (%p284) target = $region32
      $region31: #{xception_block_forward.1} parent=11 // pred_region
        _
      $region32: #{xception_block_forward.1} parent=11 // pred_fallthru
        _
      // Predicated region
      $region33: #{xception_block_forward.1} parent=11 // pred_check
        %p287 = pneg %p168
      $region34: #{xception_block_forward.1} parent=11 // pred_check_branch
        %289 = sbr.rel (%p287) target = $region36
      $region35: #{xception_block_forward.1} parent=11 // pred_region
        _
      $region36: #{xception_block_forward.1} parent=11 // pred_fallthru
        _
      // Predicated region
      $region37: #{xception_block_forward.1} parent=11 // pred_check
        %p290 = pneg %p189
      $region38: #{xception_block_forward.1} parent=11 // pred_check_branch
        %292 = sbr.rel (%p290) target = $region40
      $region39: #{xception_block_forward.1} parent=11 // pred_region
        _
      $region40: #{xception_block_forward.1} parent=11 // pred_fallthru
        _
      // Predicated region
      $region41: #{xception_block_forward.1} parent=11 // pred_check
        %p293 = pneg %p210
      $region42: #{xception_block_forward.1} parent=11 // pred_check_branch
        %295 = sbr.rel (%p293) target = $region44
      $region43: #{xception_block_forward.1} parent=11 // pred_region
        _
      $region44: #{xception_block_forward.1} parent=11 // pred_fallthru
        _
      // Predicated region
      $region45: #{xception_block_forward.1} parent=11 // pred_check
        %p296 = pneg %p231
      $region46: #{xception_block_forward.1} parent=11 // pred_check_branch
        %298 = sbr.rel (%p296) target = $region48
      $region47: #{xception_block_forward.1} parent=11 // pred_region
        _
      $region48: #{xception_block_forward.1} parent=11 // pred_fallthru
        _
    $region12: #{xception_block_forward.1} parent=5 // pred_fallthru
      _
    %p299 = scmp.lt.s32.totalorder %s16, 2
    // Predicated region
    $region49: #{xception_block_forward.1} parent=5 // pred_check
      %p300 = pneg %p299
    $region50: #{xception_block_forward.1} parent=5 // pred_check_branch
      %302 = sbr.rel (%p300) target = $region52
    $region51: #{xception_block_forward.1} parent=5 // pred_region
      // Predicated region
      $region53: #{xception_block_forward.1} parent=51 // pred_check
        %p303 = pneg %p36
      $region54: #{xception_block_forward.1} parent=51 // pred_check_branch
        %305 = sbr.rel (%p303) target = $region56
      $region55: #{xception_block_forward.1} parent=51 // pred_region
        %p306 = scmp.lt.s32.totalorder %s16, 1
        %s307 = scalar_select %p306, %s16, 1
        %s308 = smul.addr %s307, 32
        %s309 = smul.addr %s308, 8
        %s310 = scalar_lea.vmem %s0, %s309
      $region56: #{xception_block_forward.1} parent=51 // pred_fallthru
        _
    $region52: #{xception_block_forward.1} parent=5 // pred_fallthru
      _
    %p311 = scmp.le.s32.totalorder 1, %s16
    %p312 = scmp.lt.s32.totalorder %s16, 3
    %p313 = pnand %p311, %p312
    %p314 = pneg %p313
    // Predicated region
    $region57: #{xception_block_forward.1} parent=5 // pred_check
      _
    $region58: #{xception_block_forward.1} parent=5 // pred_check_branch
      %316 = sbr.rel (%p313) target = $region60
    $region59: #{xception_block_forward.1} parent=5 // pred_region
      %s317 = ssub.s32 %s16, 1
      %p318 = scmp.lt.s32.totalorder %s21, 1
      %s319 = scalar_select %p318, %s21, 1
      %s320 = smul.addr %s319, 32
      %s321 = smul.addr %s320, 8
      %s322 = scalar_lea.vmem %s0, %s321
      %p323 = pneg %p42
      %p324 = pneg %p39
      %p325 = pneg %p63
      %p326 = pneg %p60
      %p327 = pneg %p84
      %p328 = pneg %p81
      %p329 = pneg %p105
      %p330 = pneg %p102
      %p331 = pneg %p126
      %p332 = pneg %p123
      %p333 = pneg %p147
      %p334 = pneg %p144
      %p335 = pneg %p168
      %p336 = pneg %p165
      %p337 = pneg %p189
      %p338 = pneg %p186
      %p339 = pneg %p210
      %p340 = pneg %p207
      %p341 = pneg %p231
      %p342 = pneg %p228
      %p343 = pneg %p257
      %p344 = pneg %p254
      %p345 = scmp.lt.s32.totalorder %s21, 1
      %s346 = scalar_select %p345, %s21, 1
      %s347 = smul.addr %s346, 8
      %s348 = scalar_lea.vmem %s10, %s347
      %p349 = scmp.lt.s32.totalorder %s21, 1
      %s350 = scalar_select %p349, %s21, 1
      %s351 = smul.addr %s350, 32
      %s352 = smul.addr %s351, 8
      %s353 = scalar_lea.vmem %s0, %s352
      %p354 = scmp.lt.s32.totalorder %s21, 1
      %s355 = scalar_select %p354, %s21, 1
      %s356 = smul.addr %s355, 8
      %s357 = scalar_lea.vmem %s10, %s356
      %v358 = vld [vmem:[%s353] sm:$0xff]
      %v359 = vld [vmem:[%s353 + $0x8] sm:$0xff]
      %v360 = vld [vmem:[%s353 + $0x10] sm:$0xff]
      %v361 = vld [vmem:[%s353 + $0x18] sm:$0xff]
      %v362 = vld [vmem:[%s353 + $0x20] sm:$0xff]
      %v363 = vld [vmem:[%s353 + $0x28] sm:$0xff]
      %v364 = vld [vmem:[%s353 + $0x30] sm:$0xff]
      %v365 = vld [vmem:[%s353 + $0x38] sm:$0xff]
      %v366 = vld [vmem:[%s353 + $0x40] sm:$0xff]
      %v367 = vld [vmem:[%s353 + $0x48] sm:$0xff]
      %v368 = vld [vmem:[%s353 + $0x50] sm:$0xff]
      %v369 = vld [vmem:[%s353 + $0x58] sm:$0xff]
      %v370 = vld [vmem:[%s353 + $0x60] sm:$0xff]
      %v371 = vld [vmem:[%s353 + $0x68] sm:$0xff]
      %v372 = vld [vmem:[%s353 + $0x70] sm:$0xff]
      %v373 = vld [vmem:[%s353 + $0x78] sm:$0xff]
      %v374 = vld [vmem:[%s353 + $0x80] sm:$0xff]
      %v375 = vld [vmem:[%s353 + $0x88] sm:$0xff]
      %v376 = vld [vmem:[%s353 + $0x90] sm:$0xff]
      %v377 = vld [vmem:[%s353 + $0x98] sm:$0xff]
      %v378 = vld [vmem:[%s353 + $0xa0] sm:$0xff]
      %v379 = vld [vmem:[%s353 + $0xa8] sm:$0xff]
      %v380 = vld [vmem:[%s353 + $0xb0] sm:$0xff]
      %v381 = vld [vmem:[%s353 + $0xb8] sm:$0xff]
      %v382 = vld [vmem:[%s353 + $0xc0] sm:$0xff]
      %v383 = vld [vmem:[%s353 + $0xc8] sm:$0xff]
      %v384 = vld [vmem:[%s353 + $0xd0] sm:$0xff]
      %v385 = vld [vmem:[%s353 + $0xd8] sm:$0xff]
      %v386 = vld [vmem:[%s353 + $0xe0] sm:$0xff]
      %v387 = vld [vmem:[%s353 + $0xe8] sm:$0xff]
      %v388 = vld [vmem:[%s353 + $0xf0] sm:$0xff]
      %v389 = vld [vmem:[%s353 + $0xf8] sm:$0xff]
      %v390 = vmax.f32 %v358, 0.0
      %v391 = vmax.f32 %v359, 0.0
      %v392 = vmax.f32 %v360, 0.0
      %v393 = vmax.f32 %v361, 0.0
      %v394 = vmax.f32 %v362, 0.0
      %v395 = vmax.f32 %v363, 0.0
      %v396 = vmax.f32 %v364, 0.0
      %v397 = vmax.f32 %v365, 0.0
      %v398 = vmax.f32 %v366, 0.0
      %v399 = vmax.f32 %v367, 0.0
      %v400 = vmax.f32 %v368, 0.0
      %v401 = vmax.f32 %v369, 0.0
      %v402 = vmax.f32 %v370, 0.0
      %v403 = vmax.f32 %v371, 0.0
      %v404 = vmax.f32 %v372, 0.0
      %v405 = vmax.f32 %v373, 0.0
      %v406 = vmax.f32 %v374, 0.0
      %v407 = vmax.f32 %v375, 0.0
      %v408 = vmax.f32 %v376, 0.0
      %v409 = vmax.f32 %v377, 0.0
      %v410 = vmax.f32 %v378, 0.0
      %v411 = vmax.f32 %v379, 0.0
      %v412 = vmax.f32 %v380, 0.0
      %v413 = vmax.f32 %v381, 0.0
      %v414 = vmax.f32 %v382, 0.0
      %v415 = vmax.f32 %v383, 0.0
      %v416 = vmax.f32 %v384, 0.0
      %v417 = vmax.f32 %v385, 0.0
      %v418 = vmax.f32 %v386, 0.0
      %v419 = vmax.f32 %v387, 0.0
      %v420 = vmax.f32 %v388, 0.0
      %v421 = vmax.f32 %v389, 0.0
      %vm422 = vcmask 31744
      %423 = vst.msk [vmem:[#allocation2] sm:$0xff] %vm422, 0.0
      %424 = vst.msk [vmem:[#allocation2 + $0x8] sm:$0xff] %vm422, 0.0
      %vm425 = vcmask 25600
      %426 = vst.msk [vmem:[#allocation2 + $0x10] sm:$0x3] %vm425, 0.0
      %427 = vst.msk [vmem:[#allocation2 + $0x18] sm:$0xff] %vm422, 0.0
      %428 = vst.msk [vmem:[#allocation2 + $0x20] sm:$0xff] %vm422, 0.0
      %429 = vst.msk [vmem:[#allocation2 + $0x28] sm:$0x3] %vm425, 0.0
      %430 = vst.msk [vmem:[#allocation2 + $0x30] sm:$0xff] %vm422, 0.0
      %431 = vst.msk [vmem:[#allocation2 + $0x38] sm:$0xff] %vm422, 0.0
      %432 = vst.msk [vmem:[#allocation2 + $0x40] sm:$0x3] %vm425, 0.0
      %433 = vst.msk [vmem:[#allocation2 + $0x48] sm:$0xff] %vm422, 0.0
      %434 = vst.msk [vmem:[#allocation2 + $0x50] sm:$0xff] %vm422, 0.0
      %435 = vst.msk [vmem:[#allocation2 + $0x58] sm:$0x3] %vm425, 0.0
      %436 = vst.msk [vmem:[#allocation2 + $0x60] sm:$0xff] %vm422, 0.0
      %437 = vst.msk [vmem:[#allocation2 + $0x68] sm:$0xff] %vm422, 0.0
      %438 = vst.msk [vmem:[#allocation2 + $0x70] sm:$0x3] %vm425, 0.0
      %439 = vst.msk [vmem:[#allocation2 + $0x78] sm:$0xff] %vm422, 0.0
      %440 = vst.msk [vmem:[#allocation2 + $0x80] sm:$0xff] %vm422, 0.0
      %441 = vst.msk [vmem:[#allocation2 + $0x88] sm:$0x3] %vm425, 0.0
      %442 = vst.msk [vmem:[#allocation2 + $0x90] sm:$0xff] %vm422, 0.0
      %443 = vst.msk [vmem:[#allocation2 + $0x98] sm:$0xff] %vm422, 0.0
      %444 = vst.msk [vmem:[#allocation2 + $0xa0] sm:$0x3] %vm425, 0.0
      %445 = vst.msk [vmem:[#allocation2 + $0xa8] sm:$0xff] %vm422, 0.0
      %446 = vst.msk [vmem:[#allocation2 + $0xb0] sm:$0xff] %vm422, 0.0
      %447 = vst.msk [vmem:[#allocation2 + $0xb8] sm:$0x3] %vm425, 0.0
      %448 = vst.msk [vmem:[#allocation2 + $0xc0] sm:$0xff] %vm422, 0.0
      %449 = vst.msk [vmem:[#allocation2 + $0xc8] sm:$0xff] %vm422, 0.0
      %450 = vst.msk [vmem:[#allocation2 + $0xd0] sm:$0x3] %vm425, 0.0
      %451 = vst.msk [vmem:[#allocation2 + $0xd8] sm:$0xff] %vm422, 0.0
      %452 = vst.msk [vmem:[#allocation2 + $0xe0] sm:$0xff] %vm422, 0.0
      %453 = vst.msk [vmem:[#allocation2 + $0xe8] sm:$0x3] %vm425, 0.0
      %454 = vst.msk [vmem:[#allocation2 + $0xf0] sm:$0xff] %vm422, 0.0
      %455 = vst.msk [vmem:[#allocation2 + $0xf8] sm:$0xff] %vm422, 0.0
      %456 = vst.msk [vmem:[#allocation2 + $0x100] sm:$0x3] %vm425, 0.0
      %457 = vst.msk [vmem:[#allocation2 + $0x108] sm:$0xff] %vm422, 0.0
      %458 = vst.msk [vmem:[#allocation2 + $0x110] sm:$0xff] %vm422, 0.0
      %459 = vst.msk [vmem:[#allocation2 + $0x118] sm:$0x3] %vm425, 0.0
      %460 = vst.msk [vmem:[#allocation2 + $0x120] sm:$0xff] %vm422, 0.0
      %461 = vst.msk [vmem:[#allocation2 + $0x128] sm:$0xff] %vm422, 0.0
      %462 = vst.msk [vmem:[#allocation2 + $0x130] sm:$0x3] %vm425, 0.0
      %463 = vst.msk [vmem:[#allocation2 + $0x138] sm:$0xff] %vm422, 0.0
      %464 = vst.msk [vmem:[#allocation2 + $0x140] sm:$0xff] %vm422, 0.0
      %465 = vst.msk [vmem:[#allocation2 + $0x148] sm:$0x3] %vm425, 0.0
      %466 = vst.msk [vmem:[#allocation2 + $0x150] sm:$0xff] %vm422, 0.0
      %467 = vst.msk [vmem:[#allocation2 + $0x158] sm:$0xff] %vm422, 0.0
      %468 = vst.msk [vmem:[#allocation2 + $0x160] sm:$0x3] %vm425, 0.0
      %469 = vst.msk [vmem:[#allocation2 + $0x168] sm:$0xff] %vm422, 0.0
      %470 = vst.msk [vmem:[#allocation2 + $0x170] sm:$0xff] %vm422, 0.0
      %471 = vst.msk [vmem:[#allocation2 + $0x178] sm:$0x3] %vm425, 0.0
      %472 = vst.msk [vmem:[#allocation2 + $0x180] sm:$0xff] %vm422, 0.0
      %473 = vst.msk [vmem:[#allocation2 + $0x188] sm:$0xff] %vm422, 0.0
      %474 = vst.msk [vmem:[#allocation2 + $0x190] sm:$0x3] %vm425, 0.0
      %475 = vst.msk [vmem:[#allocation2 + $0x198] sm:$0xff] %vm422, 0.0
      %476 = vst.msk [vmem:[#allocation2 + $0x1a0] sm:$0xff] %vm422, 0.0
      %477 = vst.msk [vmem:[#allocation2 + $0x1a8] sm:$0x3] %vm425, 0.0
      %s478 = scalar_lea.vmem [#allocation2], 24
      %479 = vst.msk [vmem:[%s478 + $0x1] sm:$0xff] %vm422, %v390
      %480 = vst.msk [vmem:[%s478 + $0x9] sm:$0xff] %vm422, %v391
      %481 = vst.msk [vmem:[%s478 + $0x19] sm:$0xff] %vm422, %v392
      %482 = vst.msk [vmem:[%s478 + $0x21] sm:$0xff] %vm422, %v393
      %483 = vst.msk [vmem:[%s478 + $0x31] sm:$0xff] %vm422, %v394
      %484 = vst.msk [vmem:[%s478 + $0x39] sm:$0xff] %vm422, %v395
      %485 = vst.msk [vmem:[%s478 + $0x49] sm:$0xff] %vm422, %v396
      %486 = vst.msk [vmem:[%s478 + $0x51] sm:$0xff] %vm422, %v397
      %487 = vst.msk [vmem:[%s478 + $0x61] sm:$0xff] %vm422, %v398
      %488 = vst.msk [vmem:[%s478 + $0x69] sm:$0xff] %vm422, %v399
      %489 = vst.msk [vmem:[%s478 + $0x79] sm:$0xff] %vm422, %v400
      %490 = vst.msk [vmem:[%s478 + $0x81] sm:$0xff] %vm422, %v401
      %491 = vst.msk [vmem:[%s478 + $0x91] sm:$0xff] %vm422, %v402
      %492 = vst.msk [vmem:[%s478 + $0x99] sm:$0xff] %vm422, %v403
      %493 = vst.msk [vmem:[%s478 + $0xa9] sm:$0xff] %vm422, %v404
      %494 = vst.msk [vmem:[%s478 + $0xb1] sm:$0xff] %vm422, %v405
      %495 = vst.msk [vmem:[%s478 + $0xc1] sm:$0xff] %vm422, %v406
      %496 = vst.msk [vmem:[%s478 + $0xc9] sm:$0xff] %vm422, %v407
      %497 = vst.msk [vmem:[%s478 + $0xd9] sm:$0xff] %vm422, %v408
      %498 = vst.msk [vmem:[%s478 + $0xe1] sm:$0xff] %vm422, %v409
      %499 = vst.msk [vmem:[%s478 + $0xf1] sm:$0xff] %vm422, %v410
      %500 = vst.msk [vmem:[%s478 + $0xf9] sm:$0xff] %vm422, %v411
      %501 = vst.msk [vmem:[%s478 + $0x109] sm:$0xff] %vm422, %v412
      %502 = vst.msk [vmem:[%s478 + $0x111] sm:$0xff] %vm422, %v413
      %503 = vst.msk [vmem:[%s478 + $0x121] sm:$0xff] %vm422, %v414
      %504 = vst.msk [vmem:[%s478 + $0x129] sm:$0xff] %vm422, %v415
      %505 = vst.msk [vmem:[%s478 + $0x139] sm:$0xff] %vm422, %v416
      %506 = vst.msk [vmem:[%s478 + $0x141] sm:$0xff] %vm422, %v417
      %507 = vst.msk [vmem:[%s478 + $0x151] sm:$0xff] %vm422, %v418
      %508 = vst.msk [vmem:[%s478 + $0x159] sm:$0xff] %vm422, %v419
      %509 = vst.msk [vmem:[%s478 + $0x169] sm:$0xff] %vm422, %v420
      %510 = vst.msk [vmem:[%s478 + $0x171] sm:$0xff] %vm422, %v421
      %v511 = vld [vmem:[#allocation2] sm:$0xff]
      %v512 = vld [vmem:[#allocation2 + $0x8] sm:$0xff]
      %v513 = vld [vmem:[#allocation2 + $0x10] sm:$0x3]
      %v514 = vld [vmem:[#allocation2 + $0x18] sm:$0xff]
      %v515 = vld [vmem:[#allocation2 + $0x20] sm:$0xff]
      %v516 = vld [vmem:[#allocation2 + $0x28] sm:$0x3]
      %v517 = vld [vmem:[#allocation2 + $0x30] sm:$0xff]
      %v518 = vld [vmem:[#allocation2 + $0x38] sm:$0xff]
      %v519 = vld [vmem:[#allocation2 + $0x40] sm:$0x3]
      %v520 = vld [vmem:[#allocation2 + $0x48] sm:$0xff]
      %v521 = vld [vmem:[#allocation2 + $0x50] sm:$0xff]
      %v522 = vld [vmem:[#allocation2 + $0x58] sm:$0x3]
      %v523 = vld [vmem:[#allocation2 + $0x60] sm:$0xff]
      %v524 = vld [vmem:[#allocation2 + $0x68] sm:$0xff]
      %v525 = vld [vmem:[#allocation2 + $0x70] sm:$0x3]
      %v526 = vld [vmem:[#allocation2 + $0x78] sm:$0xff]
      %v527 = vld [vmem:[#allocation2 + $0x80] sm:$0xff]
      %v528 = vld [vmem:[#allocation2 + $0x88] sm:$0x3]
      %v529 = vld [vmem:[#allocation2 + $0x90] sm:$0xff]
      %v530 = vld [vmem:[#allocation2 + $0x98] sm:$0xff]
      %v531 = vld [vmem:[#allocation2 + $0xa0] sm:$0x3]
      %v532 = vld [vmem:[#allocation2 + $0xa8] sm:$0xff]
      %v533 = vld [vmem:[#allocation2 + $0xb0] sm:$0xff]
      %v534 = vld [vmem:[#allocation2 + $0xb8] sm:$0x3]
      %v535 = vld [vmem:[#allocation2 + $0xc0] sm:$0xff]
      %v536 = vld [vmem:[#allocation2 + $0xc8] sm:$0xff]
      %v537 = vld [vmem:[#allocation2 + $0xd0] sm:$0x3]
      %v538 = vld [vmem:[#allocation2 + $0xd8] sm:$0xff]
      %v539 = vld [vmem:[#allocation2 + $0xe0] sm:$0xff]
      %v540 = vld [vmem:[#allocation2 + $0xe8] sm:$0x3]
      %v541 = vld [vmem:[#allocation2 + $0xf0] sm:$0xff]
      %v542 = vld [vmem:[#allocation2 + $0xf8] sm:$0xff]
      %v543 = vld [vmem:[#allocation2 + $0x100] sm:$0x3]
      %v544 = vld [vmem:[#allocation2 + $0x108] sm:$0xff]
      %v545 = vld [vmem:[#allocation2 + $0x110] sm:$0xff]
      %v546 = vld [vmem:[#allocation2 + $0x118] sm:$0x3]
      %v547 = vld [vmem:[#allocation2 + $0x120] sm:$0xff]
      %v548 = vld [vmem:[#allocation2 + $0x128] sm:$0xff]
      %v549 = vld [vmem:[#allocation2 + $0x130] sm:$0x3]
      %v550 = vld [vmem:[#allocation2 + $0x138] sm:$0xff]
      %v551 = vld [vmem:[#allocation2 + $0x140] sm:$0xff]
      %v552 = vld [vmem:[#allocation2 + $0x148] sm:$0x3]
      %v553 = vld [vmem:[#allocation2 + $0x150] sm:$0xff]
      %v554 = vld [vmem:[#allocation2 + $0x158] sm:$0xff]
      %v555 = vld [vmem:[#allocation2 + $0x160] sm:$0x3]
      %v556 = vld [vmem:[#allocation2 + $0x168] sm:$0xff]
      %v557 = vld [vmem:[#allocation2 + $0x170] sm:$0xff]
      %v558 = vld [vmem:[#allocation2 + $0x178] sm:$0x3]
      %v559 = vld [vmem:[#allocation2 + $0x180] sm:$0xff]
      %v560 = vld [vmem:[#allocation2 + $0x188] sm:$0xff]
      %v561 = vld [vmem:[#allocation2 + $0x190] sm:$0x3]
      %v562 = vld [vmem:[#allocation2 + $0x198] sm:$0xff]
      %v563 = vld [vmem:[#allocation2 + $0x1a0] sm:$0xff]
      %v564 = vld [vmem:[#allocation2 + $0x1a8] sm:$0x3]
      %v565 = vld [vmem:[%s1] sm:$0x7]
      %v566 = vld [vmem:[%s1 + $0x4] sm:$0x7]
      %v567 = vld [vmem:[%s1 + $0x8] sm:$0x7]
      %v568 = vperm.slane %v565, 0
      %v569 = vmul.f32 %v511, %v568
      %v570 = vmul.f32 %v512, %v568
      %v571 = vmul.f32 %v514, %v568
      %v572 = vmul.f32 %v515, %v568
      %v573 = vmul.f32 %v517, %v568
      %v574 = vmul.f32 %v518, %v568
      %v575 = vmul.f32 %v520, %v568
      %v576 = vmul.f32 %v521, %v568
      %v577 = vmul.f32 %v523, %v568
      %v578 = vmul.f32 %v524, %v568
      %v579 = vmul.f32 %v526, %v568
      %v580 = vmul.f32 %v527, %v568
      %v581 = vmul.f32 %v529, %v568
      %v582 = vmul.f32 %v530, %v568
      %v583 = vmul.f32 %v532, %v568
      %v584 = vmul.f32 %v533, %v568
      %v585 = vmul.f32 %v535, %v568
      %v586 = vmul.f32 %v536, %v568
      %v587 = vmul.f32 %v538, %v568
      %v588 = vmul.f32 %v539, %v568
      %v589 = vmul.f32 %v541, %v568
      %v590 = vmul.f32 %v542, %v568
      %v591 = vmul.f32 %v544, %v568
      %v592 = vmul.f32 %v545, %v568
      %v593 = vmul.f32 %v547, %v568
      %v594 = vmul.f32 %v548, %v568
      %v595 = vmul.f32 %v550, %v568
      %v596 = vmul.f32 %v551, %v568
      %v597 = vmul.f32 %v553, %v568
      %v598 = vmul.f32 %v554, %v568
      %v599 = vmul.f32 %v556, %v568
      %v600 = vmul.f32 %v557, %v568
      %v601 = vadd.f32 %v569, 0.0
      %v602 = vadd.f32 %v570, 0.0
      %v603 = vadd.f32 %v571, 0.0
      %v604 = vadd.f32 %v572, 0.0
      %v605 = vadd.f32 %v573, 0.0
      %v606 = vadd.f32 %v574, 0.0
      %v607 = vadd.f32 %v575, 0.0
      %v608 = vadd.f32 %v576, 0.0
      %v609 = vadd.f32 %v577, 0.0
      %v610 = vadd.f32 %v578, 0.0
      %v611 = vadd.f32 %v579, 0.0
      %v612 = vadd.f32 %v580, 0.0
      %v613 = vadd.f32 %v581, 0.0
      %v614 = vadd.f32 %v582, 0.0
      %v615 = vadd.f32 %v583, 0.0
      %v616 = vadd.f32 %v584, 0.0
      %v617 = vadd.f32 %v585, 0.0
      %v618 = vadd.f32 %v586, 0.0
      %v619 = vadd.f32 %v587, 0.0
      %v620 = vadd.f32 %v588, 0.0
      %v621 = vadd.f32 %v589, 0.0
      %v622 = vadd.f32 %v590, 0.0
      %v623 = vadd.f32 %v591, 0.0
      %v624 = vadd.f32 %v592, 0.0
      %v625 = vadd.f32 %v593, 0.0
      %v626 = vadd.f32 %v594, 0.0
      %v627 = vadd.f32 %v595, 0.0
      %v628 = vadd.f32 %v596, 0.0
      %v629 = vadd.f32 %v597, 0.0
      %v630 = vadd.f32 %v598, 0.0
      %v631 = vadd.f32 %v599, 0.0
      %v632 = vadd.f32 %v600, 0.0
      %v633 = vperm.slane %v565, 1
      %v634 = vmul.f32 %v511, %v633
      %v635 = vmul.f32 %v512, %v633
      %v636 = vmul.f32 %v513, %v633
      %v637 = vmul.f32 %v514, %v633
      %v638 = vmul.f32 %v515, %v633
      %v639 = vmul.f32 %v516, %v633
      %v640 = vmul.f32 %v517, %v633
      %v641 = vmul.f32 %v518, %v633
      %v642 = vmul.f32 %v519, %v633
      %v643 = vmul.f32 %v520, %v633
      %v644 = vmul.f32 %v521, %v633
      %v645 = vmul.f32 %v522, %v633
      %v646 = vmul.f32 %v523, %v633
      %v647 = vmul.f32 %v524, %v633
      %v648 = vmul.f32 %v525, %v633
      %v649 = vmul.f32 %v526, %v633
      %v650 = vmul.f32 %v527, %v633
      %v651 = vmul.f32 %v528, %v633
      %v652 = vmul.f32 %v529, %v633
      %v653 = vmul.f32 %v530, %v633
      %v654 = vmul.f32 %v531, %v633
      %v655 = vmul.f32 %v532, %v633
      %v656 = vmul.f32 %v533, %v633
      %v657 = vmul.f32 %v534, %v633
      %v658 = vmul.f32 %v535, %v633
      %v659 = vmul.f32 %v536, %v633
      %v660 = vmul.f32 %v537, %v633
      %v661 = vmul.f32 %v538, %v633
      %v662 = vmul.f32 %v539, %v633
      %v663 = vmul.f32 %v540, %v633
      %v664 = vmul.f32 %v541, %v633
      %v665 = vmul.f32 %v542, %v633
      %v666 = vmul.f32 %v543, %v633
      %v667 = vmul.f32 %v544, %v633
      %v668 = vmul.f32 %v545, %v633
      %v669 = vmul.f32 %v546, %v633
      %v670 = vmul.f32 %v547, %v633
      %v671 = vmul.f32 %v548, %v633
      %v672 = vmul.f32 %v549, %v633
      %v673 = vmul.f32 %v550, %v633
      %v674 = vmul.f32 %v551, %v633
      %v675 = vmul.f32 %v552, %v633
      %v676 = vmul.f32 %v553, %v633
      %v677 = vmul.f32 %v554, %v633
      %v678 = vmul.f32 %v555, %v633
      %v679 = vmul.f32 %v556, %v633
      %v680 = vmul.f32 %v557, %v633
      %v681 = vmul.f32 %v558, %v633
      %vm730 = vcmask 1046528
      %v731 = vrot.slane %v634, 1
      %v732 = vrot.slane %v635, 1
      %v733 = vsel %vm730, %v731, %v732
      %v734 = vrot.slane %v636, 1
      %v735 = vsel %vm730, %v732, %v734
      %v736 = vrot.slane %v637, 1
      %v737 = vrot.slane %v638, 1
      %v738 = vsel %vm730, %v736, %v737
      %v739 = vrot.slane %v639, 1
      %v740 = vsel %vm730, %v737, %v739
      %v741 = vrot.slane %v640, 1
      %v742 = vrot.slane %v641, 1
      %v743 = vsel %vm730, %v741, %v742
      %v744 = vrot.slane %v642, 1
      %v745 = vsel %vm730, %v742, %v744
      %v746 = vrot.slane %v643, 1
      %v747 = vrot.slane %v644, 1
      %v748 = vsel %vm730, %v746, %v747
      %v749 = vrot.slane %v645, 1
      %v750 = vsel %vm730, %v747, %v749
      %v751 = vrot.slane %v646, 1
      %v752 = vrot.slane %v647, 1
      %v753 = vsel %vm730, %v751, %v752
      %v754 = vrot.slane %v648, 1
      %v755 = vsel %vm730, %v752, %v754
      %v756 = vrot.slane %v649, 1
      %v757 = vrot.slane %v650, 1
      %v758 = vsel %vm730, %v756, %v757
      %v759 = vrot.slane %v651, 1
      %v760 = vsel %vm730, %v757, %v759
      %v761 = vrot.slane %v652, 1
      %v762 = vrot.slane %v653, 1
      %v763 = vsel %vm730, %v761, %v762
      %v764 = vrot.slane %v654, 1
      %v765 = vsel %vm730, %v762, %v764
      %v766 = vrot.slane %v655, 1
      %v767 = vrot.slane %v656, 1
      %v768 = vsel %vm730, %v766, %v767
      %v769 = vrot.slane %v657, 1
      %v770 = vsel %vm730, %v767, %v769
      %v771 = vrot.slane %v658, 1
      %v772 = vrot.slane %v659, 1
      %v773 = vsel %vm730, %v771, %v772
      %v774 = vrot.slane %v660, 1
      %v775 = vsel %vm730, %v772, %v774
      %v776 = vrot.slane %v661, 1
      %v777 = vrot.slane %v662, 1
      %v778 = vsel %vm730, %v776, %v777
      %v779 = vrot.slane %v663, 1
      %v780 = vsel %vm730, %v777, %v779
      %v781 = vrot.slane %v664, 1
      %v782 = vrot.slane %v665, 1
      %v783 = vsel %vm730, %v781, %v782
      %v784 = vrot.slane %v666, 1
      %v785 = vsel %vm730, %v782, %v784
      %v786 = vrot.slane %v667, 1
      %v787 = vrot.slane %v668, 1
      %v788 = vsel %vm730, %v786, %v787
      %v789 = vrot.slane %v669, 1
      %v790 = vsel %vm730, %v787, %v789
      %v791 = vrot.slane %v670, 1
      %v792 = vrot.slane %v671, 1
      %v793 = vsel %vm730, %v791, %v792
      %v794 = vrot.slane %v672, 1
      %v795 = vsel %vm730, %v792, %v794
      %v796 = vrot.slane %v673, 1
      %v797 = vrot.slane %v674, 1
      %v798 = vsel %vm730, %v796, %v797
      %v799 = vrot.slane %v675, 1
      %v800 = vsel %vm730, %v797, %v799
      %v801 = vrot.slane %v676, 1
      %v802 = vrot.slane %v677, 1
      %v803 = vsel %vm730, %v801, %v802
      %v804 = vrot.slane %v678, 1
      %v805 = vsel %vm730, %v802, %v804
      %v806 = vrot.slane %v679, 1
      %v807 = vrot.slane %v680, 1
      %v808 = vsel %vm730, %v806, %v807
      %v809 = vrot.slane %v681, 1
      %v810 = vsel %vm730, %v807, %v809
      %v843 = vadd.f32 %v601, %v733
      %v844 = vadd.f32 %v602, %v735
      %v845 = vadd.f32 %v603, %v738
      %v846 = vadd.f32 %v604, %v740
      %v847 = vadd.f32 %v605, %v743
      %v848 = vadd.f32 %v606, %v745
      %v849 = vadd.f32 %v607, %v748
      %v850 = vadd.f32 %v608, %v750
      %v851 = vadd.f32 %v609, %v753
      %v852 = vadd.f32 %v610, %v755
      %v853 = vadd.f32 %v611, %v758
      %v854 = vadd.f32 %v612, %v760
      %v855 = vadd.f32 %v613, %v763
      %v856 = vadd.f32 %v614, %v765
      %v857 = vadd.f32 %v615, %v768
      %v858 = vadd.f32 %v616, %v770
      %v859 = vadd.f32 %v617, %v773
      %v860 = vadd.f32 %v618, %v775
      %v861 = vadd.f32 %v619, %v778
      %v862 = vadd.f32 %v620, %v780
      %v863 = vadd.f32 %v621, %v783
      %v864 = vadd.f32 %v622, %v785
      %v865 = vadd.f32 %v623, %v788
      %v866 = vadd.f32 %v624, %v790
      %v867 = vadd.f32 %v625, %v793
      %v868 = vadd.f32 %v626, %v795
      %v869 = vadd.f32 %v627, %v798
      %v870 = vadd.f32 %v628, %v800
      %v871 = vadd.f32 %v629, %v803
      %v872 = vadd.f32 %v630, %v805
      %v873 = vadd.f32 %v631, %v808
      %v874 = vadd.f32 %v632, %v810
      %v875 = vperm.slane %v565, 2
      %v876 = vmul.f32 %v511, %v875
      %v877 = vmul.f32 %v512, %v875
      %v878 = vmul.f32 %v513, %v875
      %v879 = vmul.f32 %v514, %v875
      %v880 = vmul.f32 %v515, %v875
      %v881 = vmul.f32 %v516, %v875
      %v882 = vmul.f32 %v517, %v875
      %v883 = vmul.f32 %v518, %v875
      %v884 = vmul.f32 %v519, %v875
      %v885 = vmul.f32 %v520, %v875
      %v886 = vmul.f32 %v521, %v875
      %v887 = vmul.f32 %v522, %v875
      %v888 = vmul.f32 %v523, %v875
      %v889 = vmul.f32 %v524, %v875
      %v890 = vmul.f32 %v525, %v875
      %v891 = vmul.f32 %v526, %v875
      %v892 = vmul.f32 %v527, %v875
      %v893 = vmul.f32 %v528, %v875
      %v894 = vmul.f32 %v529, %v875
      %v895 = vmul.f32 %v530, %v875
      %v896 = vmul.f32 %v531, %v875
      %v897 = vmul.f32 %v532, %v875
      %v898 = vmul.f32 %v533, %v875
      %v899 = vmul.f32 %v534, %v875
      %v900 = vmul.f32 %v535, %v875
      %v901 = vmul.f32 %v536, %v875
      %v902 = vmul.f32 %v537, %v875
      %v903 = vmul.f32 %v538, %v875
      %v904 = vmul.f32 %v539, %v875
      %v905 = vmul.f32 %v540, %v875
      %v906 = vmul.f32 %v541, %v875
      %v907 = vmul.f32 %v542, %v875
      %v908 = vmul.f32 %v543, %v875
      %v909 = vmul.f32 %v544, %v875
      %v910 = vmul.f32 %v545, %v875
      %v911 = vmul.f32 %v546, %v875
      %v912 = vmul.f32 %v547, %v875
      %v913 = vmul.f32 %v548, %v875
      %v914 = vmul.f32 %v549, %v875
      %v915 = vmul.f32 %v550, %v875
      %v916 = vmul.f32 %v551, %v875
      %v917 = vmul.f32 %v552, %v875
      %v918 = vmul.f32 %v553, %v875
      %v919 = vmul.f32 %v554, %v875
      %v920 = vmul.f32 %v555, %v875
      %v921 = vmul.f32 %v556, %v875
      %v922 = vmul.f32 %v557, %v875
      %v923 = vmul.f32 %v558, %v875
      %vm972 = vcmask 1045504
      %v973 = vrot.slane %v876, 2
      %v974 = vrot.slane %v877, 2
      %v975 = vsel %vm972, %v973, %v974
      %v976 = vrot.slane %v878, 2
      %v977 = vsel %vm972, %v974, %v976
      %v978 = vrot.slane %v879, 2
      %v979 = vrot.slane %v880, 2
      %v980 = vsel %vm972, %v978, %v979
      %v981 = vrot.slane %v881, 2
      %v982 = vsel %vm972, %v979, %v981
      %v983 = vrot.slane %v882, 2
      %v984 = vrot.slane %v883, 2
      %v985 = vsel %vm972, %v983, %v984
      %v986 = vrot.slane %v884, 2
      %v987 = vsel %vm972, %v984, %v986
      %v988 = vrot.slane %v885, 2
      %v989 = vrot.slane %v886, 2
      %v990 = vsel %vm972, %v988, %v989
      %v991 = vrot.slane %v887, 2
      %v992 = vsel %vm972, %v989, %v991
      %v993 = vrot.slane %v888, 2
      %v994 = vrot.slane %v889, 2
      %v995 = vsel %vm972, %v993, %v994
      %v996 = vrot.slane %v890, 2
      %v997 = vsel %vm972, %v994, %v996
      %v998 = vrot.slane %v891, 2
      %v999 = vrot.slane %v892, 2
      %v1000 = vsel %vm972, %v998, %v999
      %v1001 = vrot.slane %v893, 2
      %v1002 = vsel %vm972, %v999, %v1001
      %v1003 = vrot.slane %v894, 2
      %v1004 = vrot.slane %v895, 2
      %v1005 = vsel %vm972, %v1003, %v1004
      %v1006 = vrot.slane %v896, 2
      %v1007 = vsel %vm972, %v1004, %v1006
      %v1008 = vrot.slane %v897, 2
      %v1009 = vrot.slane %v898, 2
      %v1010 = vsel %vm972, %v1008, %v1009
      %v1011 = vrot.slane %v899, 2
      %v1012 = vsel %vm972, %v1009, %v1011
      %v1013 = vrot.slane %v900, 2
      %v1014 = vrot.slane %v901, 2
      %v1015 = vsel %vm972, %v1013, %v1014
      %v1016 = vrot.slane %v902, 2
      %v1017 = vsel %vm972, %v1014, %v1016
      %v1018 = vrot.slane %v903, 2
      %v1019 = vrot.slane %v904, 2
      %v1020 = vsel %vm972, %v1018, %v1019
      %v1021 = vrot.slane %v905, 2
      %v1022 = vsel %vm972, %v1019, %v1021
      %v1023 = vrot.slane %v906, 2
      %v1024 = vrot.slane %v907, 2
      %v1025 = vsel %vm972, %v1023, %v1024
      %v1026 = vrot.slane %v908, 2
      %v1027 = vsel %vm972, %v1024, %v1026
      %v1028 = vrot.slane %v909, 2
      %v1029 = vrot.slane %v910, 2
      %v1030 = vsel %vm972, %v1028, %v1029
      %v1031 = vrot.slane %v911, 2
      %v1032 = vsel %vm972, %v1029, %v1031
      %v1033 = vrot.slane %v912, 2
      %v1034 = vrot.slane %v913, 2
      %v1035 = vsel %vm972, %v1033, %v1034
      %v1036 = vrot.slane %v914, 2
      %v1037 = vsel %vm972, %v1034, %v1036
      %v1038 = vrot.slane %v915, 2
      %v1039 = vrot.slane %v916, 2
      %v1040 = vsel %vm972, %v1038, %v1039
      %v1041 = vrot.slane %v917, 2
      %v1042 = vsel %vm972, %v1039, %v1041
      %v1043 = vrot.slane %v918, 2
      %v1044 = vrot.slane %v919, 2
      %v1045 = vsel %vm972, %v1043, %v1044
      %v1046 = vrot.slane %v920, 2
      %v1047 = vsel %vm972, %v1044, %v1046
      %v1048 = vrot.slane %v921, 2
      %v1049 = vrot.slane %v922, 2
      %v1050 = vsel %vm972, %v1048, %v1049
      %v1051 = vrot.slane %v923, 2
      %v1052 = vsel %vm972, %v1049, %v1051
      %v1085 = vadd.f32 %v843, %v975
      %v1086 = vadd.f32 %v844, %v977
      %v1087 = vadd.f32 %v845, %v980
      %v1088 = vadd.f32 %v846, %v982
      %v1089 = vadd.f32 %v847, %v985
      %v1090 = vadd.f32 %v848, %v987
      %v1091 = vadd.f32 %v849, %v990
      %v1092 = vadd.f32 %v850, %v992
      %v1093 = vadd.f32 %v851, %v995
      %v1094 = vadd.f32 %v852, %v997
      %v1095 = vadd.f32 %v853, %v1000
      %v1096 = vadd.f32 %v854, %v1002
      %v1097 = vadd.f32 %v855, %v1005
      %v1098 = vadd.f32 %v856, %v1007
      %v1099 = vadd.f32 %v857, %v1010
      %v1100 = vadd.f32 %v858, %v1012
      %v1101 = vadd.f32 %v859, %v1015
      %v1102 = vadd.f32 %v860, %v1017
      %v1103 = vadd.f32 %v861, %v1020
      %v1104 = vadd.f32 %v862, %v1022
      %v1105 = vadd.f32 %v863, %v1025
      %v1106 = vadd.f32 %v864, %v1027
      %v1107 = vadd.f32 %v865, %v1030
      %v1108 = vadd.f32 %v866, %v1032
      %v1109 = vadd.f32 %v867, %v1035
      %v1110 = vadd.f32 %v868, %v1037
      %v1111 = vadd.f32 %v869, %v1040
      %v1112 = vadd.f32 %v870, %v1042
      %v1113 = vadd.f32 %v871, %v1045
      %v1114 = vadd.f32 %v872, %v1047
      %v1115 = vadd.f32 %v873, %v1050
      %v1116 = vadd.f32 %v874, %v1052
      %v1117 = vperm.slane %v566, 0
      %v1118 = vmul.f32 %v514, %v1117
      %v1119 = vmul.f32 %v515, %v1117
      %v1120 = vmul.f32 %v517, %v1117
      %v1121 = vmul.f32 %v518, %v1117
      %v1122 = vmul.f32 %v520, %v1117
      %v1123 = vmul.f32 %v521, %v1117
      %v1124 = vmul.f32 %v523, %v1117
      %v1125 = vmul.f32 %v524, %v1117
      %v1126 = vmul.f32 %v526, %v1117
      %v1127 = vmul.f32 %v527, %v1117
      %v1128 = vmul.f32 %v529, %v1117
      %v1129 = vmul.f32 %v530, %v1117
      %v1130 = vmul.f32 %v532, %v1117
      %v1131 = vmul.f32 %v533, %v1117
      %v1132 = vmul.f32 %v535, %v1117
      %v1133 = vmul.f32 %v536, %v1117
      %v1134 = vmul.f32 %v538, %v1117
      %v1135 = vmul.f32 %v539, %v1117
      %v1136 = vmul.f32 %v541, %v1117
      %v1137 = vmul.f32 %v542, %v1117
      %v1138 = vmul.f32 %v544, %v1117
      %v1139 = vmul.f32 %v545, %v1117
      %v1140 = vmul.f32 %v547, %v1117
      %v1141 = vmul.f32 %v548, %v1117
      %v1142 = vmul.f32 %v550, %v1117
      %v1143 = vmul.f32 %v551, %v1117
      %v1144 = vmul.f32 %v553, %v1117
      %v1145 = vmul.f32 %v554, %v1117
      %v1146 = vmul.f32 %v556, %v1117
      %v1147 = vmul.f32 %v557, %v1117
      %v1148 = vmul.f32 %v559, %v1117
      %v1149 = vmul.f32 %v560, %v1117
      %v1150 = vadd.f32 %v1085, %v1118
      %v1151 = vadd.f32 %v1086, %v1119
      %v1152 = vadd.f32 %v1087, %v1120
      %v1153 = vadd.f32 %v1088, %v1121
      %v1154 = vadd.f32 %v1089, %v1122
      %v1155 = vadd.f32 %v1090, %v1123
      %v1156 = vadd.f32 %v1091, %v1124
      %v1157 = vadd.f32 %v1092, %v1125
      %v1158 = vadd.f32 %v1093, %v1126
      %v1159 = vadd.f32 %v1094, %v1127
      %v1160 = vadd.f32 %v1095, %v1128
      %v1161 = vadd.f32 %v1096, %v1129
      %v1162 = vadd.f32 %v1097, %v1130
      %v1163 = vadd.f32 %v1098, %v1131
      %v1164 = vadd.f32 %v1099, %v1132
      %v1165 = vadd.f32 %v1100, %v1133
      %v1166 = vadd.f32 %v1101, %v1134
      %v1167 = vadd.f32 %v1102, %v1135
      %v1168 = vadd.f32 %v1103, %v1136
      %v1169 = vadd.f32 %v1104, %v1137
      %v1170 = vadd.f32 %v1105, %v1138
      %v1171 = vadd.f32 %v1106, %v1139
      %v1172 = vadd.f32 %v1107, %v1140
      %v1173 = vadd.f32 %v1108, %v1141
      %v1174 = vadd.f32 %v1109, %v1142
      %v1175 = vadd.f32 %v1110, %v1143
      %v1176 = vadd.f32 %v1111, %v1144
      %v1177 = vadd.f32 %v1112, %v1145
      %v1178 = vadd.f32 %v1113, %v1146
      %v1179 = vadd.f32 %v1114, %v1147
      %v1180 = vadd.f32 %v1115, %v1148
      %v1181 = vadd.f32 %v1116, %v1149
      %v1182 = vperm.slane %v566, 1
      %v1183 = vmul.f32 %v514, %v1182
      %v1184 = vmul.f32 %v515, %v1182
      %v1185 = vmul.f32 %v516, %v1182
      %v1186 = vmul.f32 %v517, %v1182
      %v1187 = vmul.f32 %v518, %v1182
      %v1188 = vmul.f32 %v519, %v1182
      %v1189 = vmul.f32 %v520, %v1182
      %v1190 = vmul.f32 %v521, %v1182
      %v1191 = vmul.f32 %v522, %v1182
      %v1192 = vmul.f32 %v523, %v1182
      %v1193 = vmul.f32 %v524, %v1182
      %v1194 = vmul.f32 %v525, %v1182
      %v1195 = vmul.f32 %v526, %v1182
      %v1196 = vmul.f32 %v527, %v1182
      %v1197 = vmul.f32 %v528, %v1182
      %v1198 = vmul.f32 %v529, %v1182
      %v1199 = vmul.f32 %v530, %v1182
      %v1200 = vmul.f32 %v531, %v1182
      %v1201 = vmul.f32 %v532, %v1182
      %v1202 = vmul.f32 %v533, %v1182
      %v1203 = vmul.f32 %v534, %v1182
      %v1204 = vmul.f32 %v535, %v1182
      %v1205 = vmul.f32 %v536, %v1182
      %v1206 = vmul.f32 %v537, %v1182
      %v1207 = vmul.f32 %v538, %v1182
      %v1208 = vmul.f32 %v539, %v1182
      %v1209 = vmul.f32 %v540, %v1182
      %v1210 = vmul.f32 %v541, %v1182
      %v1211 = vmul.f32 %v542, %v1182
      %v1212 = vmul.f32 %v543, %v1182
      %v1213 = vmul.f32 %v544, %v1182
      %v1214 = vmul.f32 %v545, %v1182
      %v1215 = vmul.f32 %v546, %v1182
      %v1216 = vmul.f32 %v547, %v1182
      %v1217 = vmul.f32 %v548, %v1182
      %v1218 = vmul.f32 %v549, %v1182
      %v1219 = vmul.f32 %v550, %v1182
      %v1220 = vmul.f32 %v551, %v1182
      %v1221 = vmul.f32 %v552, %v1182
      %v1222 = vmul.f32 %v553, %v1182
      %v1223 = vmul.f32 %v554, %v1182
      %v1224 = vmul.f32 %v555, %v1182
      %v1225 = vmul.f32 %v556, %v1182
      %v1226 = vmul.f32 %v557, %v1182
      %v1227 = vmul.f32 %v558, %v1182
      %v1228 = vmul.f32 %v559, %v1182
      %v1229 = vmul.f32 %v560, %v1182
      %v1230 = vmul.f32 %v561, %v1182
      %v1279 = vrot.slane %v1183, 1
      %v1280 = vrot.slane %v1184, 1
      %v1281 = vsel %vm730, %v1279, %v1280
      %v1282 = vrot.slane %v1185, 1
      %v1283 = vsel %vm730, %v1280, %v1282
      %v1284 = vrot.slane %v1186, 1
      %v1285 = vrot.slane %v1187, 1
      %v1286 = vsel %vm730, %v1284, %v1285
      %v1287 = vrot.slane %v1188, 1
      %v1288 = vsel %vm730, %v1285, %v1287
      %v1289 = vrot.slane %v1189, 1
      %v1290 = vrot.slane %v1190, 1
      %v1291 = vsel %vm730, %v1289, %v1290
      %v1292 = vrot.slane %v1191, 1
      %v1293 = vsel %vm730, %v1290, %v1292
      %v1294 = vrot.slane %v1192, 1
      %v1295 = vrot.slane %v1193, 1
      %v1296 = vsel %vm730, %v1294, %v1295
      %v1297 = vrot.slane %v1194, 1
      %v1298 = vsel %vm730, %v1295, %v1297
      %v1299 = vrot.slane %v1195, 1
      %v1300 = vrot.slane %v1196, 1
      %v1301 = vsel %vm730, %v1299, %v1300
      %v1302 = vrot.slane %v1197, 1
      %v1303 = vsel %vm730, %v1300, %v1302
      %v1304 = vrot.slane %v1198, 1
      %v1305 = vrot.slane %v1199, 1
      %v1306 = vsel %vm730, %v1304, %v1305
      %v1307 = vrot.slane %v1200, 1
      %v1308 = vsel %vm730, %v1305, %v1307
      %v1309 = vrot.slane %v1201, 1
      %v1310 = vrot.slane %v1202, 1
      %v1311 = vsel %vm730, %v1309, %v1310
      %v1312 = vrot.slane %v1203, 1
      %v1313 = vsel %vm730, %v1310, %v1312
      %v1314 = vrot.slane %v1204, 1
      %v1315 = vrot.slane %v1205, 1
      %v1316 = vsel %vm730, %v1314, %v1315
      %v1317 = vrot.slane %v1206, 1
      %v1318 = vsel %vm730, %v1315, %v1317
      %v1319 = vrot.slane %v1207, 1
      %v1320 = vrot.slane %v1208, 1
      %v1321 = vsel %vm730, %v1319, %v1320
      %v1322 = vrot.slane %v1209, 1
      %v1323 = vsel %vm730, %v1320, %v1322
      %v1324 = vrot.slane %v1210, 1
      %v1325 = vrot.slane %v1211, 1
      %v1326 = vsel %vm730, %v1324, %v1325
      %v1327 = vrot.slane %v1212, 1
      %v1328 = vsel %vm730, %v1325, %v1327
      %v1329 = vrot.slane %v1213, 1
      %v1330 = vrot.slane %v1214, 1
      %v1331 = vsel %vm730, %v1329, %v1330
      %v1332 = vrot.slane %v1215, 1
      %v1333 = vsel %vm730, %v1330, %v1332
      %v1334 = vrot.slane %v1216, 1
      %v1335 = vrot.slane %v1217, 1
      %v1336 = vsel %vm730, %v1334, %v1335
      %v1337 = vrot.slane %v1218, 1
      %v1338 = vsel %vm730, %v1335, %v1337
      %v1339 = vrot.slane %v1219, 1
      %v1340 = vrot.slane %v1220, 1
      %v1341 = vsel %vm730, %v1339, %v1340
      %v1342 = vrot.slane %v1221, 1
      %v1343 = vsel %vm730, %v1340, %v1342
      %v1344 = vrot.slane %v1222, 1
      %v1345 = vrot.slane %v1223, 1
      %v1346 = vsel %vm730, %v1344, %v1345
      %v1347 = vrot.slane %v1224, 1
      %v1348 = vsel %vm730, %v1345, %v1347
      %v1349 = vrot.slane %v1225, 1
      %v1350 = vrot.slane %v1226, 1
      %v1351 = vsel %vm730, %v1349, %v1350
      %v1352 = vrot.slane %v1227, 1
      %v1353 = vsel %vm730, %v1350, %v1352
      %v1354 = vrot.slane %v1228, 1
      %v1355 = vrot.slane %v1229, 1
      %v1356 = vsel %vm730, %v1354, %v1355
      %v1357 = vrot.slane %v1230, 1
      %v1358 = vsel %vm730, %v1355, %v1357
      %v1391 = vadd.f32 %v1150, %v1281
      %v1392 = vadd.f32 %v1151, %v1283
      %v1393 = vadd.f32 %v1152, %v1286
      %v1394 = vadd.f32 %v1153, %v1288
      %v1395 = vadd.f32 %v1154, %v1291
      %v1396 = vadd.f32 %v1155, %v1293
      %v1397 = vadd.f32 %v1156, %v1296
      %v1398 = vadd.f32 %v1157, %v1298
      %v1399 = vadd.f32 %v1158, %v1301
      %v1400 = vadd.f32 %v1159, %v1303
      %v1401 = vadd.f32 %v1160, %v1306
      %v1402 = vadd.f32 %v1161, %v1308
      %v1403 = vadd.f32 %v1162, %v1311
      %v1404 = vadd.f32 %v1163, %v1313
      %v1405 = vadd.f32 %v1164, %v1316
      %v1406 = vadd.f32 %v1165, %v1318
      %v1407 = vadd.f32 %v1166, %v1321
      %v1408 = vadd.f32 %v1167, %v1323
      %v1409 = vadd.f32 %v1168, %v1326
      %v1410 = vadd.f32 %v1169, %v1328
      %v1411 = vadd.f32 %v1170, %v1331
      %v1412 = vadd.f32 %v1171, %v1333
      %v1413 = vadd.f32 %v1172, %v1336
      %v1414 = vadd.f32 %v1173, %v1338
      %v1415 = vadd.f32 %v1174, %v1341
      %v1416 = vadd.f32 %v1175, %v1343
      %v1417 = vadd.f32 %v1176, %v1346
      %v1418 = vadd.f32 %v1177, %v1348
      %v1419 = vadd.f32 %v1178, %v1351
      %v1420 = vadd.f32 %v1179, %v1353
      %v1421 = vadd.f32 %v1180, %v1356
      %v1422 = vadd.f32 %v1181, %v1358
      %v1423 = vperm.slane %v566, 2
      %v1424 = vmul.f32 %v514, %v1423
      %v1425 = vmul.f32 %v515, %v1423
      %v1426 = vmul.f32 %v516, %v1423
      %v1427 = vmul.f32 %v517, %v1423
      %v1428 = vmul.f32 %v518, %v1423
      %v1429 = vmul.f32 %v519, %v1423
      %v1430 = vmul.f32 %v520, %v1423
      %v1431 = vmul.f32 %v521, %v1423
      %v1432 = vmul.f32 %v522, %v1423
      %v1433 = vmul.f32 %v523, %v1423
      %v1434 = vmul.f32 %v524, %v1423
      %v1435 = vmul.f32 %v525, %v1423
      %v1436 = vmul.f32 %v526, %v1423
      %v1437 = vmul.f32 %v527, %v1423
      %v1438 = vmul.f32 %v528, %v1423
      %v1439 = vmul.f32 %v529, %v1423
      %v1440 = vmul.f32 %v530, %v1423
      %v1441 = vmul.f32 %v531, %v1423
      %v1442 = vmul.f32 %v532, %v1423
      %v1443 = vmul.f32 %v533, %v1423
      %v1444 = vmul.f32 %v534, %v1423
      %v1445 = vmul.f32 %v535, %v1423
      %v1446 = vmul.f32 %v536, %v1423
      %v1447 = vmul.f32 %v537, %v1423
      %v1448 = vmul.f32 %v538, %v1423
      %v1449 = vmul.f32 %v539, %v1423
      %v1450 = vmul.f32 %v540, %v1423
      %v1451 = vmul.f32 %v541, %v1423
      %v1452 = vmul.f32 %v542, %v1423
      %v1453 = vmul.f32 %v543, %v1423
      %v1454 = vmul.f32 %v544, %v1423
      %v1455 = vmul.f32 %v545, %v1423
      %v1456 = vmul.f32 %v546, %v1423
      %v1457 = vmul.f32 %v547, %v1423
      %v1458 = vmul.f32 %v548, %v1423
      %v1459 = vmul.f32 %v549, %v1423
      %v1460 = vmul.f32 %v550, %v1423
      %v1461 = vmul.f32 %v551, %v1423
      %v1462 = vmul.f32 %v552, %v1423
      %v1463 = vmul.f32 %v553, %v1423
      %v1464 = vmul.f32 %v554, %v1423
      %v1465 = vmul.f32 %v555, %v1423
      %v1466 = vmul.f32 %v556, %v1423
      %v1467 = vmul.f32 %v557, %v1423
      %v1468 = vmul.f32 %v558, %v1423
      %v1469 = vmul.f32 %v559, %v1423
      %v1470 = vmul.f32 %v560, %v1423
      %v1471 = vmul.f32 %v561, %v1423
      %v1520 = vrot.slane %v1424, 2
      %v1521 = vrot.slane %v1425, 2
      %v1522 = vsel %vm972, %v1520, %v1521
      %v1523 = vrot.slane %v1426, 2
      %v1524 = vsel %vm972, %v1521, %v1523
      %v1525 = vrot.slane %v1427, 2
      %v1526 = vrot.slane %v1428, 2
      %v1527 = vsel %vm972, %v1525, %v1526
      %v1528 = vrot.slane %v1429, 2
      %v1529 = vsel %vm972, %v1526, %v1528
      %v1530 = vrot.slane %v1430, 2
      %v1531 = vrot.slane %v1431, 2
      %v1532 = vsel %vm972, %v1530, %v1531
      %v1533 = vrot.slane %v1432, 2
      %v1534 = vsel %vm972, %v1531, %v1533
      %v1535 = vrot.slane %v1433, 2
      %v1536 = vrot.slane %v1434, 2
      %v1537 = vsel %vm972, %v1535, %v1536
      %v1538 = vrot.slane %v1435, 2
      %v1539 = vsel %vm972, %v1536, %v1538
      %v1540 = vrot.slane %v1436, 2
      %v1541 = vrot.slane %v1437, 2
      %v1542 = vsel %vm972, %v1540, %v1541
      %v1543 = vrot.slane %v1438, 2
      %v1544 = vsel %vm972, %v1541, %v1543
      %v1545 = vrot.slane %v1439, 2
      %v1546 = vrot.slane %v1440, 2
      %v1547 = vsel %vm972, %v1545, %v1546
      %v1548 = vrot.slane %v1441, 2
      %v1549 = vsel %vm972, %v1546, %v1548
      %v1550 = vrot.slane %v1442, 2
      %v1551 = vrot.slane %v1443, 2
      %v1552 = vsel %vm972, %v1550, %v1551
      %v1553 = vrot.slane %v1444, 2
      %v1554 = vsel %vm972, %v1551, %v1553
      %v1555 = vrot.slane %v1445, 2
      %v1556 = vrot.slane %v1446, 2
      %v1557 = vsel %vm972, %v1555, %v1556
      %v1558 = vrot.slane %v1447, 2
      %v1559 = vsel %vm972, %v1556, %v1558
      %v1560 = vrot.slane %v1448, 2
      %v1561 = vrot.slane %v1449, 2
      %v1562 = vsel %vm972, %v1560, %v1561
      %v1563 = vrot.slane %v1450, 2
      %v1564 = vsel %vm972, %v1561, %v1563
      %v1565 = vrot.slane %v1451, 2
      %v1566 = vrot.slane %v1452, 2
      %v1567 = vsel %vm972, %v1565, %v1566
      %v1568 = vrot.slane %v1453, 2
      %v1569 = vsel %vm972, %v1566, %v1568
      %v1570 = vrot.slane %v1454, 2
      %v1571 = vrot.slane %v1455, 2
      %v1572 = vsel %vm972, %v1570, %v1571
      %v1573 = vrot.slane %v1456, 2
      %v1574 = vsel %vm972, %v1571, %v1573
      %v1575 = vrot.slane %v1457, 2
      %v1576 = vrot.slane %v1458, 2
      %v1577 = vsel %vm972, %v1575, %v1576
      %v1578 = vrot.slane %v1459, 2
      %v1579 = vsel %vm972, %v1576, %v1578
      %v1580 = vrot.slane %v1460, 2
      %v1581 = vrot.slane %v1461, 2
      %v1582 = vsel %vm972, %v1580, %v1581
      %v1583 = vrot.slane %v1462, 2
      %v1584 = vsel %vm972, %v1581, %v1583
      %v1585 = vrot.slane %v1463, 2
      %v1586 = vrot.slane %v1464, 2
      %v1587 = vsel %vm972, %v1585, %v1586
      %v1588 = vrot.slane %v1465, 2
      %v1589 = vsel %vm972, %v1586, %v1588
      %v1590 = vrot.slane %v1466, 2
      %v1591 = vrot.slane %v1467, 2
      %v1592 = vsel %vm972, %v1590, %v1591
      %v1593 = vrot.slane %v1468, 2
      %v1594 = vsel %vm972, %v1591, %v1593
      %v1595 = vrot.slane %v1469, 2
      %v1596 = vrot.slane %v1470, 2
      %v1597 = vsel %vm972, %v1595, %v1596
      %v1598 = vrot.slane %v1471, 2
      %v1599 = vsel %vm972, %v1596, %v1598
      %v1632 = vadd.f32 %v1391, %v1522
      %v1633 = vadd.f32 %v1392, %v1524
      %v1634 = vadd.f32 %v1393, %v1527
      %v1635 = vadd.f32 %v1394, %v1529
      %v1636 = vadd.f32 %v1395, %v1532
      %v1637 = vadd.f32 %v1396, %v1534
      %v1638 = vadd.f32 %v1397, %v1537
      %v1639 = vadd.f32 %v1398, %v1539
      %v1640 = vadd.f32 %v1399, %v1542
      %v1641 = vadd.f32 %v1400, %v1544
      %v1642 = vadd.f32 %v1401, %v1547
      %v1643 = vadd.f32 %v1402, %v1549
      %v1644 = vadd.f32 %v1403, %v1552
      %v1645 = vadd.f32 %v1404, %v1554
      %v1646 = vadd.f32 %v1405, %v1557
      %v1647 = vadd.f32 %v1406, %v1559
      %v1648 = vadd.f32 %v1407, %v1562
      %v1649 = vadd.f32 %v1408, %v1564
      %v1650 = vadd.f32 %v1409, %v1567
      %v1651 = vadd.f32 %v1410, %v1569
      %v1652 = vadd.f32 %v1411, %v1572
      %v1653 = vadd.f32 %v1412, %v1574
      %v1654 = vadd.f32 %v1413, %v1577
      %v1655 = vadd.f32 %v1414, %v1579
      %v1656 = vadd.f32 %v1415, %v1582
      %v1657 = vadd.f32 %v1416, %v1584
      %v1658 = vadd.f32 %v1417, %v1587
      %v1659 = vadd.f32 %v1418, %v1589
      %v1660 = vadd.f32 %v1419, %v1592
      %v1661 = vadd.f32 %v1420, %v1594
      %v1662 = vadd.f32 %v1421, %v1597
      %v1663 = vadd.f32 %v1422, %v1599
      %v1664 = vperm.slane %v567, 0
      %v1665 = vmul.f32 %v517, %v1664
      %v1666 = vmul.f32 %v518, %v1664
      %v1667 = vmul.f32 %v520, %v1664
      %v1668 = vmul.f32 %v521, %v1664
      %v1669 = vmul.f32 %v523, %v1664
      %v1670 = vmul.f32 %v524, %v1664
      %v1671 = vmul.f32 %v526, %v1664
      %v1672 = vmul.f32 %v527, %v1664
      %v1673 = vmul.f32 %v529, %v1664
      %v1674 = vmul.f32 %v530, %v1664
      %v1675 = vmul.f32 %v532, %v1664
      %v1676 = vmul.f32 %v533, %v1664
      %v1677 = vmul.f32 %v535, %v1664
      %v1678 = vmul.f32 %v536, %v1664
      %v1679 = vmul.f32 %v538, %v1664
      %v1680 = vmul.f32 %v539, %v1664
      %v1681 = vmul.f32 %v541, %v1664
      %v1682 = vmul.f32 %v542, %v1664
      %v1683 = vmul.f32 %v544, %v1664
      %v1684 = vmul.f32 %v545, %v1664
      %v1685 = vmul.f32 %v547, %v1664
      %v1686 = vmul.f32 %v548, %v1664
      %v1687 = vmul.f32 %v550, %v1664
      %v1688 = vmul.f32 %v551, %v1664
      %v1689 = vmul.f32 %v553, %v1664
      %v1690 = vmul.f32 %v554, %v1664
      %v1691 = vmul.f32 %v556, %v1664
      %v1692 = vmul.f32 %v557, %v1664
      %v1693 = vmul.f32 %v559, %v1664
      %v1694 = vmul.f32 %v560, %v1664
      %v1695 = vmul.f32 %v562, %v1664
      %v1696 = vmul.f32 %v563, %v1664
      %v1697 = vadd.f32 %v1632, %v1665
      %v1698 = vadd.f32 %v1633, %v1666
      %v1699 = vadd.f32 %v1634, %v1667
      %v1700 = vadd.f32 %v1635, %v1668
      %v1701 = vadd.f32 %v1636, %v1669
      %v1702 = vadd.f32 %v1637, %v1670
      %v1703 = vadd.f32 %v1638, %v1671
      %v1704 = vadd.f32 %v1639, %v1672
      %v1705 = vadd.f32 %v1640, %v1673
      %v1706 = vadd.f32 %v1641, %v1674
      %v1707 = vadd.f32 %v1642, %v1675
      %v1708 = vadd.f32 %v1643, %v1676
      %v1709 = vadd.f32 %v1644, %v1677
      %v1710 = vadd.f32 %v1645, %v1678
      %v1711 = vadd.f32 %v1646, %v1679
      %v1712 = vadd.f32 %v1647, %v1680
      %v1713 = vadd.f32 %v1648, %v1681
      %v1714 = vadd.f32 %v1649, %v1682
      %v1715 = vadd.f32 %v1650, %v1683
      %v1716 = vadd.f32 %v1651, %v1684
      %v1717 = vadd.f32 %v1652, %v1685
      %v1718 = vadd.f32 %v1653, %v1686
      %v1719 = vadd.f32 %v1654, %v1687
      %v1720 = vadd.f32 %v1655, %v1688
      %v1721 = vadd.f32 %v1656, %v1689
      %v1722 = vadd.f32 %v1657, %v1690
      %v1723 = vadd.f32 %v1658, %v1691
      %v1724 = vadd.f32 %v1659, %v1692
      %v1725 = vadd.f32 %v1660, %v1693
      %v1726 = vadd.f32 %v1661, %v1694
      %v1727 = vadd.f32 %v1662, %v1695
      %v1728 = vadd.f32 %v1663, %v1696
      %v1729 = vperm.slane %v567, 1
      %v1730 = vmul.f32 %v517, %v1729
      %v1731 = vmul.f32 %v518, %v1729
      %v1732 = vmul.f32 %v519, %v1729
      %v1733 = vmul.f32 %v520, %v1729
      %v1734 = vmul.f32 %v521, %v1729
      %v1735 = vmul.f32 %v522, %v1729
      %v1736 = vmul.f32 %v523, %v1729
      %v1737 = vmul.f32 %v524, %v1729
      %v1738 = vmul.f32 %v525, %v1729
      %v1739 = vmul.f32 %v526, %v1729
      %v1740 = vmul.f32 %v527, %v1729
      %v1741 = vmul.f32 %v528, %v1729
      %v1742 = vmul.f32 %v529, %v1729
      %v1743 = vmul.f32 %v530, %v1729
      %v1744 = vmul.f32 %v531, %v1729
      %v1745 = vmul.f32 %v532, %v1729
      %v1746 = vmul.f32 %v533, %v1729
      %v1747 = vmul.f32 %v534, %v1729
      %v1748 = vmul.f32 %v535, %v1729
      %v1749 = vmul.f32 %v536, %v1729
      %v1750 = vmul.f32 %v537, %v1729
      %v1751 = vmul.f32 %v538, %v1729
      %v1752 = vmul.f32 %v539, %v1729
      %v1753 = vmul.f32 %v540, %v1729
      %v1754 = vmul.f32 %v541, %v1729
      %v1755 = vmul.f32 %v542, %v1729
      %v1756 = vmul.f32 %v543, %v1729
      %v1757 = vmul.f32 %v544, %v1729
      %v1758 = vmul.f32 %v545, %v1729
      %v1759 = vmul.f32 %v546, %v1729
      %v1760 = vmul.f32 %v547, %v1729
      %v1761 = vmul.f32 %v548, %v1729
      %v1762 = vmul.f32 %v549, %v1729
      %v1763 = vmul.f32 %v550, %v1729
      %v1764 = vmul.f32 %v551, %v1729
      %v1765 = vmul.f32 %v552, %v1729
      %v1766 = vmul.f32 %v553, %v1729
      %v1767 = vmul.f32 %v554, %v1729
      %v1768 = vmul.f32 %v555, %v1729
      %v1769 = vmul.f32 %v556, %v1729
      %v1770 = vmul.f32 %v557, %v1729
      %v1771 = vmul.f32 %v558, %v1729
      %v1772 = vmul.f32 %v559, %v1729
      %v1773 = vmul.f32 %v560, %v1729
      %v1774 = vmul.f32 %v561, %v1729
      %v1775 = vmul.f32 %v562, %v1729
      %v1776 = vmul.f32 %v563, %v1729
      %v1777 = vmul.f32 %v564, %v1729
      %v1826 = vrot.slane %v1730, 1
      %v1827 = vrot.slane %v1731, 1
      %v1828 = vsel %vm730, %v1826, %v1827
      %v1829 = vrot.slane %v1732, 1
      %v1830 = vsel %vm730, %v1827, %v1829
      %v1831 = vrot.slane %v1733, 1
      %v1832 = vrot.slane %v1734, 1
      %v1833 = vsel %vm730, %v1831, %v1832
      %v1834 = vrot.slane %v1735, 1
      %v1835 = vsel %vm730, %v1832, %v1834
      %v1836 = vrot.slane %v1736, 1
      %v1837 = vrot.slane %v1737, 1
      %v1838 = vsel %vm730, %v1836, %v1837
      %v1839 = vrot.slane %v1738, 1
      %v1840 = vsel %vm730, %v1837, %v1839
      %v1841 = vrot.slane %v1739, 1
      %v1842 = vrot.slane %v1740, 1
      %v1843 = vsel %vm730, %v1841, %v1842
      %v1844 = vrot.slane %v1741, 1
      %v1845 = vsel %vm730, %v1842, %v1844
      %v1846 = vrot.slane %v1742, 1
      %v1847 = vrot.slane %v1743, 1
      %v1848 = vsel %vm730, %v1846, %v1847
      %v1849 = vrot.slane %v1744, 1
      %v1850 = vsel %vm730, %v1847, %v1849
      %v1851 = vrot.slane %v1745, 1
      %v1852 = vrot.slane %v1746, 1
      %v1853 = vsel %vm730, %v1851, %v1852
      %v1854 = vrot.slane %v1747, 1
      %v1855 = vsel %vm730, %v1852, %v1854
      %v1856 = vrot.slane %v1748, 1
      %v1857 = vrot.slane %v1749, 1
      %v1858 = vsel %vm730, %v1856, %v1857
      %v1859 = vrot.slane %v1750, 1
      %v1860 = vsel %vm730, %v1857, %v1859
      %v1861 = vrot.slane %v1751, 1
      %v1862 = vrot.slane %v1752, 1
      %v1863 = vsel %vm730, %v1861, %v1862
      %v1864 = vrot.slane %v1753, 1
      %v1865 = vsel %vm730, %v1862, %v1864
      %v1866 = vrot.slane %v1754, 1
      %v1867 = vrot.slane %v1755, 1
      %v1868 = vsel %vm730, %v1866, %v1867
      %v1869 = vrot.slane %v1756, 1
      %v1870 = vsel %vm730, %v1867, %v1869
      %v1871 = vrot.slane %v1757, 1
      %v1872 = vrot.slane %v1758, 1
      %v1873 = vsel %vm730, %v1871, %v1872
      %v1874 = vrot.slane %v1759, 1
      %v1875 = vsel %vm730, %v1872, %v1874
      %v1876 = vrot.slane %v1760, 1
      %v1877 = vrot.slane %v1761, 1
      %v1878 = vsel %vm730, %v1876, %v1877
      %v1879 = vrot.slane %v1762, 1
      %v1880 = vsel %vm730, %v1877, %v1879
      %v1881 = vrot.slane %v1763, 1
      %v1882 = vrot.slane %v1764, 1
      %v1883 = vsel %vm730, %v1881, %v1882
      %v1884 = vrot.slane %v1765, 1
      %v1885 = vsel %vm730, %v1882, %v1884
      %v1886 = vrot.slane %v1766, 1
      %v1887 = vrot.slane %v1767, 1
      %v1888 = vsel %vm730, %v1886, %v1887
      %v1889 = vrot.slane %v1768, 1
      %v1890 = vsel %vm730, %v1887, %v1889
      %v1891 = vrot.slane %v1769, 1
      %v1892 = vrot.slane %v1770, 1
      %v1893 = vsel %vm730, %v1891, %v1892
      %v1894 = vrot.slane %v1771, 1
      %v1895 = vsel %vm730, %v1892, %v1894
      %v1896 = vrot.slane %v1772, 1
      %v1897 = vrot.slane %v1773, 1
      %v1898 = vsel %vm730, %v1896, %v1897
      %v1899 = vrot.slane %v1774, 1
      %v1900 = vsel %vm730, %v1897, %v1899
      %v1901 = vrot.slane %v1775, 1
      %v1902 = vrot.slane %v1776, 1
      %v1903 = vsel %vm730, %v1901, %v1902
      %v1904 = vrot.slane %v1777, 1
      %v1905 = vsel %vm730, %v1902, %v1904
      %v1938 = vadd.f32 %v1697, %v1828
      %v1939 = vadd.f32 %v1698, %v1830
      %v1940 = vadd.f32 %v1699, %v1833
      %v1941 = vadd.f32 %v1700, %v1835
      %v1942 = vadd.f32 %v1701, %v1838
      %v1943 = vadd.f32 %v1702, %v1840
      %v1944 = vadd.f32 %v1703, %v1843
      %v1945 = vadd.f32 %v1704, %v1845
      %v1946 = vadd.f32 %v1705, %v1848
      %v1947 = vadd.f32 %v1706, %v1850
      %v1948 = vadd.f32 %v1707, %v1853
      %v1949 = vadd.f32 %v1708, %v1855
      %v1950 = vadd.f32 %v1709, %v1858
      %v1951 = vadd.f32 %v1710, %v1860
      %v1952 = vadd.f32 %v1711, %v1863
      %v1953 = vadd.f32 %v1712, %v1865
      %v1954 = vadd.f32 %v1713, %v1868
      %v1955 = vadd.f32 %v1714, %v1870
      %v1956 = vadd.f32 %v1715, %v1873
      %v1957 = vadd.f32 %v1716, %v1875
      %v1958 = vadd.f32 %v1717, %v1878
      %v1959 = vadd.f32 %v1718, %v1880
      %v1960 = vadd.f32 %v1719, %v1883
      %v1961 = vadd.f32 %v1720, %v1885
      %v1962 = vadd.f32 %v1721, %v1888
      %v1963 = vadd.f32 %v1722, %v1890
      %v1964 = vadd.f32 %v1723, %v1893
      %v1965 = vadd.f32 %v1724, %v1895
      %v1966 = vadd.f32 %v1725, %v1898
      %v1967 = vadd.f32 %v1726, %v1900
      %v1968 = vadd.f32 %v1727, %v1903
      %v1969 = vadd.f32 %v1728, %v1905
      %v1970 = vperm.slane %v567, 2
      %v1971 = vmul.f32 %v517, %v1970
      %v1972 = vmul.f32 %v518, %v1970
      %v1973 = vmul.f32 %v519, %v1970
      %v1974 = vmul.f32 %v520, %v1970
      %v1975 = vmul.f32 %v521, %v1970
      %v1976 = vmul.f32 %v522, %v1970
      %v1977 = vmul.f32 %v523, %v1970
      %v1978 = vmul.f32 %v524, %v1970
      %v1979 = vmul.f32 %v525, %v1970
      %v1980 = vmul.f32 %v526, %v1970
      %v1981 = vmul.f32 %v527, %v1970
      %v1982 = vmul.f32 %v528, %v1970
      %v1983 = vmul.f32 %v529, %v1970
      %v1984 = vmul.f32 %v530, %v1970
      %v1985 = vmul.f32 %v531, %v1970
      %v1986 = vmul.f32 %v532, %v1970
      %v1987 = vmul.f32 %v533, %v1970
      %v1988 = vmul.f32 %v534, %v1970
      %v1989 = vmul.f32 %v535, %v1970
      %v1990 = vmul.f32 %v536, %v1970
      %v1991 = vmul.f32 %v537, %v1970
      %v1992 = vmul.f32 %v538, %v1970
      %v1993 = vmul.f32 %v539, %v1970
      %v1994 = vmul.f32 %v540, %v1970
      %v1995 = vmul.f32 %v541, %v1970
      %v1996 = vmul.f32 %v542, %v1970
      %v1997 = vmul.f32 %v543, %v1970
      %v1998 = vmul.f32 %v544, %v1970
      %v1999 = vmul.f32 %v545, %v1970
      %v2000 = vmul.f32 %v546, %v1970
      %v2001 = vmul.f32 %v547, %v1970
      %v2002 = vmul.f32 %v548, %v1970
      %v2003 = vmul.f32 %v549, %v1970
      %v2004 = vmul.f32 %v550, %v1970
      %v2005 = vmul.f32 %v551, %v1970
      %v2006 = vmul.f32 %v552, %v1970
      %v2007 = vmul.f32 %v553, %v1970
      %v2008 = vmul.f32 %v554, %v1970
      %v2009 = vmul.f32 %v555, %v1970
      %v2010 = vmul.f32 %v556, %v1970
      %v2011 = vmul.f32 %v557, %v1970
      %v2012 = vmul.f32 %v558, %v1970
      %v2013 = vmul.f32 %v559, %v1970
      %v2014 = vmul.f32 %v560, %v1970
      %v2015 = vmul.f32 %v561, %v1970
      %v2016 = vmul.f32 %v562, %v1970
      %v2017 = vmul.f32 %v563, %v1970
      %v2018 = vmul.f32 %v564, %v1970
      %v2067 = vrot.slane %v1971, 2
      %v2068 = vrot.slane %v1972, 2
      %v2069 = vsel %vm972, %v2067, %v2068
      %v2070 = vrot.slane %v1973, 2
      %v2071 = vsel %vm972, %v2068, %v2070
      %v2072 = vrot.slane %v1974, 2
      %v2073 = vrot.slane %v1975, 2
      %v2074 = vsel %vm972, %v2072, %v2073
      %v2075 = vrot.slane %v1976, 2
      %v2076 = vsel %vm972, %v2073, %v2075
      %v2077 = vrot.slane %v1977, 2
      %v2078 = vrot.slane %v1978, 2
      %v2079 = vsel %vm972, %v2077, %v2078
      %v2080 = vrot.slane %v1979, 2
      %v2081 = vsel %vm972, %v2078, %v2080
      %v2082 = vrot.slane %v1980, 2
      %v2083 = vrot.slane %v1981, 2
      %v2084 = vsel %vm972, %v2082, %v2083
      %v2085 = vrot.slane %v1982, 2
      %v2086 = vsel %vm972, %v2083, %v2085
      %v2087 = vrot.slane %v1983, 2
      %v2088 = vrot.slane %v1984, 2
      %v2089 = vsel %vm972, %v2087, %v2088
      %v2090 = vrot.slane %v1985, 2
      %v2091 = vsel %vm972, %v2088, %v2090
      %v2092 = vrot.slane %v1986, 2
      %v2093 = vrot.slane %v1987, 2
      %v2094 = vsel %vm972, %v2092, %v2093
      %v2095 = vrot.slane %v1988, 2
      %v2096 = vsel %vm972, %v2093, %v2095
      %v2097 = vrot.slane %v1989, 2
      %v2098 = vrot.slane %v1990, 2
      %v2099 = vsel %vm972, %v2097, %v2098
      %v2100 = vrot.slane %v1991, 2
      %v2101 = vsel %vm972, %v2098, %v2100
      %v2102 = vrot.slane %v1992, 2
      %v2103 = vrot.slane %v1993, 2
      %v2104 = vsel %vm972, %v2102, %v2103
      %v2105 = vrot.slane %v1994, 2
      %v2106 = vsel %vm972, %v2103, %v2105
      %v2107 = vrot.slane %v1995, 2
      %v2108 = vrot.slane %v1996, 2
      %v2109 = vsel %vm972, %v2107, %v2108
      %v2110 = vrot.slane %v1997, 2
      %v2111 = vsel %vm972, %v2108, %v2110
      %v2112 = vrot.slane %v1998, 2
      %v2113 = vrot.slane %v1999, 2
      %v2114 = vsel %vm972, %v2112, %v2113
      %v2115 = vrot.slane %v2000, 2
      %v2116 = vsel %vm972, %v2113, %v2115
      %v2117 = vrot.slane %v2001, 2
      %v2118 = vrot.slane %v2002, 2
      %v2119 = vsel %vm972, %v2117, %v2118
      %v2120 = vrot.slane %v2003, 2
      %v2121 = vsel %vm972, %v2118, %v2120
      %v2122 = vrot.slane %v2004, 2
      %v2123 = vrot.slane %v2005, 2
      %v2124 = vsel %vm972, %v2122, %v2123
      %v2125 = vrot.slane %v2006, 2
      %v2126 = vsel %vm972, %v2123, %v2125
      %v2127 = vrot.slane %v2007, 2
      %v2128 = vrot.slane %v2008, 2
      %v2129 = vsel %vm972, %v2127, %v2128
      %v2130 = vrot.slane %v2009, 2
      %v2131 = vsel %vm972, %v2128, %v2130
      %v2132 = vrot.slane %v2010, 2
      %v2133 = vrot.slane %v2011, 2
      %v2134 = vsel %vm972, %v2132, %v2133
      %v2135 = vrot.slane %v2012, 2
      %v2136 = vsel %vm972, %v2133, %v2135
      %v2137 = vrot.slane %v2013, 2
      %v2138 = vrot.slane %v2014, 2
      %v2139 = vsel %vm972, %v2137, %v2138
      %v2140 = vrot.slane %v2015, 2
      %v2141 = vsel %vm972, %v2138, %v2140
      %v2142 = vrot.slane %v2016, 2
      %v2143 = vrot.slane %v2017, 2
      %v2144 = vsel %vm972, %v2142, %v2143
      %v2145 = vrot.slane %v2018, 2
      %v2146 = vsel %vm972, %v2143, %v2145
      %v2179 = vadd.f32 %v1938, %v2069
      %v2180 = vadd.f32 %v1939, %v2071
      %v2181 = vadd.f32 %v1940, %v2074
      %v2182 = vadd.f32 %v1941, %v2076
      %v2183 = vadd.f32 %v1942, %v2079
      %v2184 = vadd.f32 %v1943, %v2081
      %v2185 = vadd.f32 %v1944, %v2084
      %v2186 = vadd.f32 %v1945, %v2086
      %v2187 = vadd.f32 %v1946, %v2089
      %v2188 = vadd.f32 %v1947, %v2091
      %v2189 = vadd.f32 %v1948, %v2094
      %v2190 = vadd.f32 %v1949, %v2096
      %v2191 = vadd.f32 %v1950, %v2099
      %v2192 = vadd.f32 %v1951, %v2101
      %v2193 = vadd.f32 %v1952, %v2104
      %v2194 = vadd.f32 %v1953, %v2106
      %v2195 = vadd.f32 %v1954, %v2109
      %v2196 = vadd.f32 %v1955, %v2111
      %v2197 = vadd.f32 %v1956, %v2114
      %v2198 = vadd.f32 %v1957, %v2116
      %v2199 = vadd.f32 %v1958, %v2119
      %v2200 = vadd.f32 %v1959, %v2121
      %v2201 = vadd.f32 %v1960, %v2124
      %v2202 = vadd.f32 %v1961, %v2126
      %v2203 = vadd.f32 %v1962, %v2129
      %v2204 = vadd.f32 %v1963, %v2131
      %v2205 = vadd.f32 %v1964, %v2134
      %v2206 = vadd.f32 %v1965, %v2136
      %v2207 = vadd.f32 %v1966, %v2139
      %v2208 = vadd.f32 %v1967, %v2141
      %v2209 = vadd.f32 %v1968, %v2144
      %v2210 = vadd.f32 %v1969, %v2146
      %v2211 = vld [vmem:[%s2] sm:$0xf]
      %v2212 = vld [vmem:[%s3] sm:$0x1]
      %v2214 = vperm.slane %v2212, 0
      %v2217 = vsel %vm422, %v2179, 0
      %v2220 = vsel %vm422, %v2180, 0
      %v2223 = vsel %vm422, %v2181, 0
      %v2226 = vsel %vm422, %v2182, 0
      %v2229 = vsel %vm422, %v2183, 0
      %v2232 = vsel %vm422, %v2184, 0
      %v2235 = vsel %vm422, %v2185, 0
      %v2238 = vsel %vm422, %v2186, 0
      %v2241 = vsel %vm422, %v2187, 0
      %v2244 = vsel %vm422, %v2188, 0
      %v2247 = vsel %vm422, %v2189, 0
      %v2250 = vsel %vm422, %v2190, 0
      %v2253 = vsel %vm422, %v2191, 0
      %v2256 = vsel %vm422, %v2192, 0
      %v2259 = vsel %vm422, %v2193, 0
      %v2262 = vsel %vm422, %v2194, 0
      %v2265 = vsel %vm422, %v2195, 0
      %v2268 = vsel %vm422, %v2196, 0
      %v2271 = vsel %vm422, %v2197, 0
      %v2274 = vsel %vm422, %v2198, 0
      %v2277 = vsel %vm422, %v2199, 0
      %v2280 = vsel %vm422, %v2200, 0
      %v2283 = vsel %vm422, %v2201, 0
      %v2286 = vsel %vm422, %v2202, 0
      %v2289 = vsel %vm422, %v2203, 0
      %v2292 = vsel %vm422, %v2204, 0
      %v2295 = vsel %vm422, %v2205, 0
      %v2298 = vsel %vm422, %v2206, 0
      %v2301 = vsel %vm422, %v2207, 0
      %v2304 = vsel %vm422, %v2208, 0
      %v2307 = vsel %vm422, %v2209, 0
      %v2310 = vsel %vm422, %v2210, 0
      %vm2312 = vcmask 1043456
      %v2314 = vsel %vm2312, %v2211, 0
      %2316 = vmatpush.msra.mxu0 0.0
      %2317 = vmatpush.msra.mxu0 0.0
      %2318 = vmatpush.msra.mxu0 0.0
      %2319 = vmatpush.msra.mxu0 0.0
      %2320 = vmatpush.msra.mxu0 0.0
      %2321 = vmatpush.msra.mxu0 0.0
      %2322 = vmatpush.msra.mxu0 0.0
      %2323 = vmatpush.msra.mxu0 0.0
      %2324 = vmatpush.msra.mxu0 0.0
      %2325 = vmatpush.msra.mxu0 0.0
      %2326 = vmatpush.msra.mxu0 0.0
      %2327 = vmatpush.msra.mxu0 0.0
      %2328 = vmatpush.msra.mxu0 0.0
      %2329 = vmatpush.msra.mxu0 0.0
      %2330 = vmatpush.msra.mxu0 0.0
      %2331 = vmatpush.msra.mxu0 %v2314
      %2332 = vmatmul.f32.gmra.mxu0 %v2217
      %v2333 = vpop.f32.mrf.mxu0
      %v2334 = vadd.f32 %v2214, %v2333
      %2335 = vmatmul.f32.gmra.mxu0 %v2220
      %v2336 = vpop.f32.mrf.mxu0
      %v2337 = vadd.f32 %v2214, %v2336
      %2338 = vmatmul.f32.gmra.mxu0 %v2223
      %v2339 = vpop.f32.mrf.mxu0
      %v2340 = vadd.f32 %v2214, %v2339
      %2341 = vmatmul.f32.gmra.mxu0 %v2226
      %v2342 = vpop.f32.mrf.mxu0
      %v2343 = vadd.f32 %v2214, %v2342
      %2344 = vmatmul.f32.gmra.mxu0 %v2229
      %v2345 = vpop.f32.mrf.mxu0
      %v2346 = vadd.f32 %v2214, %v2345
      %2347 = vmatmul.f32.gmra.mxu0 %v2232
      %v2348 = vpop.f32.mrf.mxu0
      %v2349 = vadd.f32 %v2214, %v2348
      %2350 = vmatmul.f32.gmra.mxu0 %v2235
      %v2351 = vpop.f32.mrf.mxu0
      %v2352 = vadd.f32 %v2214, %v2351
      %2353 = vmatmul.f32.gmra.mxu0 %v2238
      %v2354 = vpop.f32.mrf.mxu0
      %v2355 = vadd.f32 %v2214, %v2354
      %2356 = vmatmul.f32.gmra.mxu0 %v2241
      %v2357 = vpop.f32.mrf.mxu0
      %v2358 = vadd.f32 %v2214, %v2357
      %2359 = vmatmul.f32.gmra.mxu0 %v2244
      %v2360 = vpop.f32.mrf.mxu0
      %v2361 = vadd.f32 %v2214, %v2360
      %2362 = vmatmul.f32.gmra.mxu0 %v2247
      %v2363 = vpop.f32.mrf.mxu0
      %v2364 = vadd.f32 %v2214, %v2363
      %2365 = vmatmul.f32.gmra.mxu0 %v2250
      %v2366 = vpop.f32.mrf.mxu0
      %v2367 = vadd.f32 %v2214, %v2366
      %2368 = vmatmul.f32.gmra.mxu0 %v2253
      %v2369 = vpop.f32.mrf.mxu0
      %v2370 = vadd.f32 %v2214, %v2369
      %2371 = vmatmul.f32.gmra.mxu0 %v2256
      %v2372 = vpop.f32.mrf.mxu0
      %v2373 = vadd.f32 %v2214, %v2372
      %2374 = vmatmul.f32.gmra.mxu0 %v2259
      %v2375 = vpop.f32.mrf.mxu0
      %v2376 = vadd.f32 %v2214, %v2375
      %2377 = vmatmul.f32.gmra.mxu0 %v2262
      %v2378 = vpop.f32.mrf.mxu0
      %v2379 = vadd.f32 %v2214, %v2378
      %2380 = vmatmul.f32.gmra.mxu0 %v2265
      %v2381 = vpop.f32.mrf.mxu0
      %v2382 = vadd.f32 %v2214, %v2381
      %2383 = vmatmul.f32.gmra.mxu0 %v2268
      %v2384 = vpop.f32.mrf.mxu0
      %v2385 = vadd.f32 %v2214, %v2384
      %2386 = vmatmul.f32.gmra.mxu0 %v2271
      %v2387 = vpop.f32.mrf.mxu0
      %v2388 = vadd.f32 %v2214, %v2387
      %2389 = vmatmul.f32.gmra.mxu0 %v2274
      %v2390 = vpop.f32.mrf.mxu0
      %v2391 = vadd.f32 %v2214, %v2390
      %2392 = vmatmul.f32.gmra.mxu0 %v2277
      %v2393 = vpop.f32.mrf.mxu0
      %v2394 = vadd.f32 %v2214, %v2393
      %2395 = vmatmul.f32.gmra.mxu0 %v2280
      %v2396 = vpop.f32.mrf.mxu0
      %v2397 = vadd.f32 %v2214, %v2396
      %2398 = vmatmul.f32.gmra.mxu0 %v2283
      %v2399 = vpop.f32.mrf.mxu0
      %v2400 = vadd.f32 %v2214, %v2399
      %2401 = vmatmul.f32.gmra.mxu0 %v2286
      %v2402 = vpop.f32.mrf.mxu0
      %v2403 = vadd.f32 %v2214, %v2402
      %2404 = vmatmul.f32.gmra.mxu0 %v2289
      %v2405 = vpop.f32.mrf.mxu0
      %v2406 = vadd.f32 %v2214, %v2405
      %2407 = vmatmul.f32.gmra.mxu0 %v2292
      %v2408 = vpop.f32.mrf.mxu0
      %v2409 = vadd.f32 %v2214, %v2408
      %2410 = vmatmul.f32.gmra.mxu0 %v2295
      %v2411 = vpop.f32.mrf.mxu0
      %v2412 = vadd.f32 %v2214, %v2411
      %2413 = vmatmul.f32.gmra.mxu0 %v2298
      %v2414 = vpop.f32.mrf.mxu0
      %v2415 = vadd.f32 %v2214, %v2414
      %2416 = vmatmul.f32.gmra.mxu0 %v2301
      %v2417 = vpop.f32.mrf.mxu0
      %v2418 = vadd.f32 %v2214, %v2417
      %2419 = vmatmul.f32.gmra.mxu0 %v2304
      %v2420 = vpop.f32.mrf.mxu0
      %v2421 = vadd.f32 %v2214, %v2420
      %2422 = vmatmul.f32.gmra.mxu0 %v2307
      %v2423 = vpop.f32.mrf.mxu0
      %v2424 = vadd.f32 %v2214, %v2423
      %2425 = vmatmul.f32.gmra.mxu0 %v2310
      %v2426 = vpop.f32.mrf.mxu0
      %v2427 = vadd.f32 %v2214, %v2426
      %2428 = vdwg.mxu0
      %v2429 = vmax.f32 %v2334, 0.0
      %v2430 = vmax.f32 %v2337, 0.0
      %v2431 = vmax.f32 %v2340, 0.0
      %v2432 = vmax.f32 %v2343, 0.0
      %v2433 = vmax.f32 %v2346, 0.0
      %v2434 = vmax.f32 %v2349, 0.0
      %v2435 = vmax.f32 %v2352, 0.0
      %v2436 = vmax.f32 %v2355, 0.0
      %v2437 = vmax.f32 %v2358, 0.0
      %v2438 = vmax.f32 %v2361, 0.0
      %v2439 = vmax.f32 %v2364, 0.0
      %v2440 = vmax.f32 %v2367, 0.0
      %v2441 = vmax.f32 %v2370, 0.0
      %v2442 = vmax.f32 %v2373, 0.0
      %v2443 = vmax.f32 %v2376, 0.0
      %v2444 = vmax.f32 %v2379, 0.0
      %v2445 = vmax.f32 %v2382, 0.0
      %v2446 = vmax.f32 %v2385, 0.0
      %v2447 = vmax.f32 %v2388, 0.0
      %v2448 = vmax.f32 %v2391, 0.0
      %v2449 = vmax.f32 %v2394, 0.0
      %v2450 = vmax.f32 %v2397, 0.0
      %v2451 = vmax.f32 %v2400, 0.0
      %v2452 = vmax.f32 %v2403, 0.0
      %v2453 = vmax.f32 %v2406, 0.0
      %v2454 = vmax.f32 %v2409, 0.0
      %v2455 = vmax.f32 %v2412, 0.0
      %v2456 = vmax.f32 %v2415, 0.0
      %v2457 = vmax.f32 %v2418, 0.0
      %v2458 = vmax.f32 %v2421, 0.0
      %v2459 = vmax.f32 %v2424, 0.0
      %v2460 = vmax.f32 %v2427, 0.0
      %vm2461 = vcmask 64512
      %2462 = vst.msk [vmem:[#allocation3] sm:$0xff] %vm2461, 0.0
      %2463 = vst.msk [vmem:[#allocation3 + $0x8] sm:$0xff] %vm2461, 0.0
      %vm2464 = vcmask 58368
      %2465 = vst.msk [vmem:[#allocation3 + $0x10] sm:$0x3] %vm2464, 0.0
      %2466 = vst.msk [vmem:[#allocation3 + $0x18] sm:$0xff] %vm2461, 0.0
      %2467 = vst.msk [vmem:[#allocation3 + $0x20] sm:$0xff] %vm2461, 0.0
      %2468 = vst.msk [vmem:[#allocation3 + $0x28] sm:$0x3] %vm2464, 0.0
      %2469 = vst.msk [vmem:[#allocation3 + $0x30] sm:$0xff] %vm2461, 0.0
      %2470 = vst.msk [vmem:[#allocation3 + $0x38] sm:$0xff] %vm2461, 0.0
      %2471 = vst.msk [vmem:[#allocation3 + $0x40] sm:$0x3] %vm2464, 0.0
      %2472 = vst.msk [vmem:[#allocation3 + $0x48] sm:$0xff] %vm2461, 0.0
      %2473 = vst.msk [vmem:[#allocation3 + $0x50] sm:$0xff] %vm2461, 0.0
      %2474 = vst.msk [vmem:[#allocation3 + $0x58] sm:$0x3] %vm2464, 0.0
      %2475 = vst.msk [vmem:[#allocation3 + $0x60] sm:$0xff] %vm2461, 0.0
      %2476 = vst.msk [vmem:[#allocation3 + $0x68] sm:$0xff] %vm2461, 0.0
      %2477 = vst.msk [vmem:[#allocation3 + $0x70] sm:$0x3] %vm2464, 0.0
      %2478 = vst.msk [vmem:[#allocation3 + $0x78] sm:$0xff] %vm2461, 0.0
      %2479 = vst.msk [vmem:[#allocation3 + $0x80] sm:$0xff] %vm2461, 0.0
      %2480 = vst.msk [vmem:[#allocation3 + $0x88] sm:$0x3] %vm2464, 0.0
      %2481 = vst.msk [vmem:[#allocation3 + $0x90] sm:$0xff] %vm2461, 0.0
      %2482 = vst.msk [vmem:[#allocation3 + $0x98] sm:$0xff] %vm2461, 0.0
      %2483 = vst.msk [vmem:[#allocation3 + $0xa0] sm:$0x3] %vm2464, 0.0
      %2484 = vst.msk [vmem:[#allocation3 + $0xa8] sm:$0xff] %vm2461, 0.0
      %2485 = vst.msk [vmem:[#allocation3 + $0xb0] sm:$0xff] %vm2461, 0.0
      %2486 = vst.msk [vmem:[#allocation3 + $0xb8] sm:$0x3] %vm2464, 0.0
      %2487 = vst.msk [vmem:[#allocation3 + $0xc0] sm:$0xff] %vm2461, 0.0
      %2488 = vst.msk [vmem:[#allocation3 + $0xc8] sm:$0xff] %vm2461, 0.0
      %2489 = vst.msk [vmem:[#allocation3 + $0xd0] sm:$0x3] %vm2464, 0.0
      %2490 = vst.msk [vmem:[#allocation3 + $0xd8] sm:$0xff] %vm2461, 0.0
      %2491 = vst.msk [vmem:[#allocation3 + $0xe0] sm:$0xff] %vm2461, 0.0
      %2492 = vst.msk [vmem:[#allocation3 + $0xe8] sm:$0x3] %vm2464, 0.0
      %2493 = vst.msk [vmem:[#allocation3 + $0xf0] sm:$0xff] %vm2461, 0.0
      %2494 = vst.msk [vmem:[#allocation3 + $0xf8] sm:$0xff] %vm2461, 0.0
      %2495 = vst.msk [vmem:[#allocation3 + $0x100] sm:$0x3] %vm2464, 0.0
      %2496 = vst.msk [vmem:[#allocation3 + $0x108] sm:$0xff] %vm2461, 0.0
      %2497 = vst.msk [vmem:[#allocation3 + $0x110] sm:$0xff] %vm2461, 0.0
      %2498 = vst.msk [vmem:[#allocation3 + $0x118] sm:$0x3] %vm2464, 0.0
      %2499 = vst.msk [vmem:[#allocation3 + $0x120] sm:$0xff] %vm2461, 0.0
      %2500 = vst.msk [vmem:[#allocation3 + $0x128] sm:$0xff] %vm2461, 0.0
      %2501 = vst.msk [vmem:[#allocation3 + $0x130] sm:$0x3] %vm2464, 0.0
      %2502 = vst.msk [vmem:[#allocation3 + $0x138] sm:$0xff] %vm2461, 0.0
      %2503 = vst.msk [vmem:[#allocation3 + $0x140] sm:$0xff] %vm2461, 0.0
      %2504 = vst.msk [vmem:[#allocation3 + $0x148] sm:$0x3] %vm2464, 0.0
      %2505 = vst.msk [vmem:[#allocation3 + $0x150] sm:$0xff] %vm2461, 0.0
      %2506 = vst.msk [vmem:[#allocation3 + $0x158] sm:$0xff] %vm2461, 0.0
      %2507 = vst.msk [vmem:[#allocation3 + $0x160] sm:$0x3] %vm2464, 0.0
      %2508 = vst.msk [vmem:[#allocation3 + $0x168] sm:$0xff] %vm2461, 0.0
      %2509 = vst.msk [vmem:[#allocation3 + $0x170] sm:$0xff] %vm2461, 0.0
      %2510 = vst.msk [vmem:[#allocation3 + $0x178] sm:$0x3] %vm2464, 0.0
      %2511 = vst.msk [vmem:[#allocation3 + $0x180] sm:$0xff] %vm2461, 0.0
      %2512 = vst.msk [vmem:[#allocation3 + $0x188] sm:$0xff] %vm2461, 0.0
      %2513 = vst.msk [vmem:[#allocation3 + $0x190] sm:$0x3] %vm2464, 0.0
      %2514 = vst.msk [vmem:[#allocation3 + $0x198] sm:$0xff] %vm2461, 0.0
      %2515 = vst.msk [vmem:[#allocation3 + $0x1a0] sm:$0xff] %vm2461, 0.0
      %2516 = vst.msk [vmem:[#allocation3 + $0x1a8] sm:$0x3] %vm2464, 0.0
      %s2517 = scalar_lea.vmem [#allocation3], 24
      %2518 = vst.msk [vmem:[%s2517 + $0x1] sm:$0xff] %vm2461, %v2429
      %2519 = vst.msk [vmem:[%s2517 + $0x9] sm:$0xff] %vm2461, %v2430
      %2520 = vst.msk [vmem:[%s2517 + $0x19] sm:$0xff] %vm2461, %v2431
      %2521 = vst.msk [vmem:[%s2517 + $0x21] sm:$0xff] %vm2461, %v2432
      %2522 = vst.msk [vmem:[%s2517 + $0x31] sm:$0xff] %vm2461, %v2433
      %2523 = vst.msk [vmem:[%s2517 + $0x39] sm:$0xff] %vm2461, %v2434
      %2524 = vst.msk [vmem:[%s2517 + $0x49] sm:$0xff] %vm2461, %v2435
      %2525 = vst.msk [vmem:[%s2517 + $0x51] sm:$0xff] %vm2461, %v2436
      %2526 = vst.msk [vmem:[%s2517 + $0x61] sm:$0xff] %vm2461, %v2437
      %2527 = vst.msk [vmem:[%s2517 + $0x69] sm:$0xff] %vm2461, %v2438
      %2528 = vst.msk [vmem:[%s2517 + $0x79] sm:$0xff] %vm2461, %v2439
      %2529 = vst.msk [vmem:[%s2517 + $0x81] sm:$0xff] %vm2461, %v2440
      %2530 = vst.msk [vmem:[%s2517 + $0x91] sm:$0xff] %vm2461, %v2441
      %2531 = vst.msk [vmem:[%s2517 + $0x99] sm:$0xff] %vm2461, %v2442
      %2532 = vst.msk [vmem:[%s2517 + $0xa9] sm:$0xff] %vm2461, %v2443
      %2533 = vst.msk [vmem:[%s2517 + $0xb1] sm:$0xff] %vm2461, %v2444
      %2534 = vst.msk [vmem:[%s2517 + $0xc1] sm:$0xff] %vm2461, %v2445
      %2535 = vst.msk [vmem:[%s2517 + $0xc9] sm:$0xff] %vm2461, %v2446
      %2536 = vst.msk [vmem:[%s2517 + $0xd9] sm:$0xff] %vm2461, %v2447
      %2537 = vst.msk [vmem:[%s2517 + $0xe1] sm:$0xff] %vm2461, %v2448
      %2538 = vst.msk [vmem:[%s2517 + $0xf1] sm:$0xff] %vm2461, %v2449
      %2539 = vst.msk [vmem:[%s2517 + $0xf9] sm:$0xff] %vm2461, %v2450
      %2540 = vst.msk [vmem:[%s2517 + $0x109] sm:$0xff] %vm2461, %v2451
      %2541 = vst.msk [vmem:[%s2517 + $0x111] sm:$0xff] %vm2461, %v2452
      %2542 = vst.msk [vmem:[%s2517 + $0x121] sm:$0xff] %vm2461, %v2453
      %2543 = vst.msk [vmem:[%s2517 + $0x129] sm:$0xff] %vm2461, %v2454
      %2544 = vst.msk [vmem:[%s2517 + $0x139] sm:$0xff] %vm2461, %v2455
      %2545 = vst.msk [vmem:[%s2517 + $0x141] sm:$0xff] %vm2461, %v2456
      %2546 = vst.msk [vmem:[%s2517 + $0x151] sm:$0xff] %vm2461, %v2457
      %2547 = vst.msk [vmem:[%s2517 + $0x159] sm:$0xff] %vm2461, %v2458
      %2548 = vst.msk [vmem:[%s2517 + $0x169] sm:$0xff] %vm2461, %v2459
      %2549 = vst.msk [vmem:[%s2517 + $0x171] sm:$0xff] %vm2461, %v2460
      %v2550 = vld [vmem:[#allocation3] sm:$0xff]
      %v2551 = vld [vmem:[#allocation3 + $0x8] sm:$0xff]
      %v2552 = vld [vmem:[#allocation3 + $0x10] sm:$0x3]
      %v2553 = vld [vmem:[#allocation3 + $0x18] sm:$0xff]
      %v2554 = vld [vmem:[#allocation3 + $0x20] sm:$0xff]
      %v2555 = vld [vmem:[#allocation3 + $0x28] sm:$0x3]
      %v2556 = vld [vmem:[#allocation3 + $0x30] sm:$0xff]
      %v2557 = vld [vmem:[#allocation3 + $0x38] sm:$0xff]
      %v2558 = vld [vmem:[#allocation3 + $0x40] sm:$0x3]
      %v2559 = vld [vmem:[#allocation3 + $0x48] sm:$0xff]
      %v2560 = vld [vmem:[#allocation3 + $0x50] sm:$0xff]
      %v2561 = vld [vmem:[#allocation3 + $0x58] sm:$0x3]
      %v2562 = vld [vmem:[#allocation3 + $0x60] sm:$0xff]
      %v2563 = vld [vmem:[#allocation3 + $0x68] sm:$0xff]
      %v2564 = vld [vmem:[#allocation3 + $0x70] sm:$0x3]
      %v2565 = vld [vmem:[#allocation3 + $0x78] sm:$0xff]
      %v2566 = vld [vmem:[#allocation3 + $0x80] sm:$0xff]
      %v2567 = vld [vmem:[#allocation3 + $0x88] sm:$0x3]
      %v2568 = vld [vmem:[#allocation3 + $0x90] sm:$0xff]
      %v2569 = vld [vmem:[#allocation3 + $0x98] sm:$0xff]
      %v2570 = vld [vmem:[#allocation3 + $0xa0] sm:$0x3]
      %v2571 = vld [vmem:[#allocation3 + $0xa8] sm:$0xff]
      %v2572 = vld [vmem:[#allocation3 + $0xb0] sm:$0xff]
      %v2573 = vld [vmem:[#allocation3 + $0xb8] sm:$0x3]
      %v2574 = vld [vmem:[#allocation3 + $0xc0] sm:$0xff]
      %v2575 = vld [vmem:[#allocation3 + $0xc8] sm:$0xff]
      %v2576 = vld [vmem:[#allocation3 + $0xd0] sm:$0x3]
      %v2577 = vld [vmem:[#allocation3 + $0xd8] sm:$0xff]
      %v2578 = vld [vmem:[#allocation3 + $0xe0] sm:$0xff]
      %v2579 = vld [vmem:[#allocation3 + $0xe8] sm:$0x3]
      %v2580 = vld [vmem:[#allocation3 + $0xf0] sm:$0xff]
      %v2581 = vld [vmem:[#allocation3 + $0xf8] sm:$0xff]
      %v2582 = vld [vmem:[#allocation3 + $0x100] sm:$0x3]
      %v2583 = vld [vmem:[#allocation3 + $0x108] sm:$0xff]
      %v2584 = vld [vmem:[#allocation3 + $0x110] sm:$0xff]
      %v2585 = vld [vmem:[#allocation3 + $0x118] sm:$0x3]
      %v2586 = vld [vmem:[#allocation3 + $0x120] sm:$0xff]
      %v2587 = vld [vmem:[#allocation3 + $0x128] sm:$0xff]
      %v2588 = vld [vmem:[#allocation3 + $0x130] sm:$0x3]
      %v2589 = vld [vmem:[#allocation3 + $0x138] sm:$0xff]
      %v2590 = vld [vmem:[#allocation3 + $0x140] sm:$0xff]
      %v2591 = vld [vmem:[#allocation3 + $0x148] sm:$0x3]
      %v2592 = vld [vmem:[#allocation3 + $0x150] sm:$0xff]
      %v2593 = vld [vmem:[#allocation3 + $0x158] sm:$0xff]
      %v2594 = vld [vmem:[#allocation3 + $0x160] sm:$0x3]
      %v2595 = vld [vmem:[#allocation3 + $0x168] sm:$0xff]
      %v2596 = vld [vmem:[#allocation3 + $0x170] sm:$0xff]
      %v2597 = vld [vmem:[#allocation3 + $0x178] sm:$0x3]
      %v2598 = vld [vmem:[#allocation3 + $0x180] sm:$0xff]
      %v2599 = vld [vmem:[#allocation3 + $0x188] sm:$0xff]
      %v2600 = vld [vmem:[#allocation3 + $0x190] sm:$0x3]
      %v2601 = vld [vmem:[#allocation3 + $0x198] sm:$0xff]
      %v2602 = vld [vmem:[#allocation3 + $0x1a0] sm:$0xff]
      %v2603 = vld [vmem:[#allocation3 + $0x1a8] sm:$0x3]
      %v2604 = vld [vmem:[%s4] sm:$0x7]
      %v2605 = vld [vmem:[%s4 + $0x4] sm:$0x7]
      %v2606 = vld [vmem:[%s4 + $0x8] sm:$0x7]
      %v2607 = vperm.slane %v2604, 0
      %v2608 = vmul.f32 %v2550, %v2607
      %v2609 = vmul.f32 %v2551, %v2607
      %v2610 = vmul.f32 %v2553, %v2607
      %v2611 = vmul.f32 %v2554, %v2607
      %v2612 = vmul.f32 %v2556, %v2607
      %v2613 = vmul.f32 %v2557, %v2607
      %v2614 = vmul.f32 %v2559, %v2607
      %v2615 = vmul.f32 %v2560, %v2607
      %v2616 = vmul.f32 %v2562, %v2607
      %v2617 = vmul.f32 %v2563, %v2607
      %v2618 = vmul.f32 %v2565, %v2607
      %v2619 = vmul.f32 %v2566, %v2607
      %v2620 = vmul.f32 %v2568, %v2607
      %v2621 = vmul.f32 %v2569, %v2607
      %v2622 = vmul.f32 %v2571, %v2607
      %v2623 = vmul.f32 %v2572, %v2607
      %v2624 = vmul.f32 %v2574, %v2607
      %v2625 = vmul.f32 %v2575, %v2607
      %v2626 = vmul.f32 %v2577, %v2607
      %v2627 = vmul.f32 %v2578, %v2607
      %v2628 = vmul.f32 %v2580, %v2607
      %v2629 = vmul.f32 %v2581, %v2607
      %v2630 = vmul.f32 %v2583, %v2607
      %v2631 = vmul.f32 %v2584, %v2607
      %v2632 = vmul.f32 %v2586, %v2607
      %v2633 = vmul.f32 %v2587, %v2607
      %v2634 = vmul.f32 %v2589, %v2607
      %v2635 = vmul.f32 %v2590, %v2607
      %v2636 = vmul.f32 %v2592, %v2607
      %v2637 = vmul.f32 %v2593, %v2607
      %v2638 = vmul.f32 %v2595, %v2607
      %v2639 = vmul.f32 %v2596, %v2607
      %v2640 = vadd.f32 %v2608, 0.0
      %v2641 = vadd.f32 %v2609, 0.0
      %v2642 = vadd.f32 %v2610, 0.0
      %v2643 = vadd.f32 %v2611, 0.0
      %v2644 = vadd.f32 %v2612, 0.0
      %v2645 = vadd.f32 %v2613, 0.0
      %v2646 = vadd.f32 %v2614, 0.0
      %v2647 = vadd.f32 %v2615, 0.0
      %v2648 = vadd.f32 %v2616, 0.0
      %v2649 = vadd.f32 %v2617, 0.0
      %v2650 = vadd.f32 %v2618, 0.0
      %v2651 = vadd.f32 %v2619, 0.0
      %v2652 = vadd.f32 %v2620, 0.0
      %v2653 = vadd.f32 %v2621, 0.0
      %v2654 = vadd.f32 %v2622, 0.0
      %v2655 = vadd.f32 %v2623, 0.0
      %v2656 = vadd.f32 %v2624, 0.0
      %v2657 = vadd.f32 %v2625, 0.0
      %v2658 = vadd.f32 %v2626, 0.0
      %v2659 = vadd.f32 %v2627, 0.0
      %v2660 = vadd.f32 %v2628, 0.0
      %v2661 = vadd.f32 %v2629, 0.0
      %v2662 = vadd.f32 %v2630, 0.0
      %v2663 = vadd.f32 %v2631, 0.0
      %v2664 = vadd.f32 %v2632, 0.0
      %v2665 = vadd.f32 %v2633, 0.0
      %v2666 = vadd.f32 %v2634, 0.0
      %v2667 = vadd.f32 %v2635, 0.0
      %v2668 = vadd.f32 %v2636, 0.0
      %v2669 = vadd.f32 %v2637, 0.0
      %v2670 = vadd.f32 %v2638, 0.0
      %v2671 = vadd.f32 %v2639, 0.0
      %v2672 = vperm.slane %v2604, 1
      %v2673 = vmul.f32 %v2550, %v2672
      %v2674 = vmul.f32 %v2551, %v2672
      %v2675 = vmul.f32 %v2552, %v2672
      %v2676 = vmul.f32 %v2553, %v2672
      %v2677 = vmul.f32 %v2554, %v2672
      %v2678 = vmul.f32 %v2555, %v2672
      %v2679 = vmul.f32 %v2556, %v2672
      %v2680 = vmul.f32 %v2557, %v2672
      %v2681 = vmul.f32 %v2558, %v2672
      %v2682 = vmul.f32 %v2559, %v2672
      %v2683 = vmul.f32 %v2560, %v2672
      %v2684 = vmul.f32 %v2561, %v2672
      %v2685 = vmul.f32 %v2562, %v2672
      %v2686 = vmul.f32 %v2563, %v2672
      %v2687 = vmul.f32 %v2564, %v2672
      %v2688 = vmul.f32 %v2565, %v2672
      %v2689 = vmul.f32 %v2566, %v2672
      %v2690 = vmul.f32 %v2567, %v2672
      %v2691 = vmul.f32 %v2568, %v2672
      %v2692 = vmul.f32 %v2569, %v2672
      %v2693 = vmul.f32 %v2570, %v2672
      %v2694 = vmul.f32 %v2571, %v2672
      %v2695 = vmul.f32 %v2572, %v2672
      %v2696 = vmul.f32 %v2573, %v2672
      %v2697 = vmul.f32 %v2574, %v2672
      %v2698 = vmul.f32 %v2575, %v2672
      %v2699 = vmul.f32 %v2576, %v2672
      %v2700 = vmul.f32 %v2577, %v2672
      %v2701 = vmul.f32 %v2578, %v2672
      %v2702 = vmul.f32 %v2579, %v2672
      %v2703 = vmul.f32 %v2580, %v2672
      %v2704 = vmul.f32 %v2581, %v2672
      %v2705 = vmul.f32 %v2582, %v2672
      %v2706 = vmul.f32 %v2583, %v2672
      %v2707 = vmul.f32 %v2584, %v2672
      %v2708 = vmul.f32 %v2585, %v2672
      %v2709 = vmul.f32 %v2586, %v2672
      %v2710 = vmul.f32 %v2587, %v2672
      %v2711 = vmul.f32 %v2588, %v2672
      %v2712 = vmul.f32 %v2589, %v2672
      %v2713 = vmul.f32 %v2590, %v2672
      %v2714 = vmul.f32 %v2591, %v2672
      %v2715 = vmul.f32 %v2592, %v2672
      %v2716 = vmul.f32 %v2593, %v2672
      %v2717 = vmul.f32 %v2594, %v2672
      %v2718 = vmul.f32 %v2595, %v2672
      %v2719 = vmul.f32 %v2596, %v2672
      %v2720 = vmul.f32 %v2597, %v2672
      %v2769 = vrot.slane %v2673, 1
      %v2770 = vrot.slane %v2674, 1
      %v2771 = vsel %vm730, %v2769, %v2770
      %v2772 = vrot.slane %v2675, 1
      %v2773 = vsel %vm730, %v2770, %v2772
      %v2774 = vrot.slane %v2676, 1
      %v2775 = vrot.slane %v2677, 1
      %v2776 = vsel %vm730, %v2774, %v2775
      %v2777 = vrot.slane %v2678, 1
      %v2778 = vsel %vm730, %v2775, %v2777
      %v2779 = vrot.slane %v2679, 1
      %v2780 = vrot.slane %v2680, 1
      %v2781 = vsel %vm730, %v2779, %v2780
      %v2782 = vrot.slane %v2681, 1
      %v2783 = vsel %vm730, %v2780, %v2782
      %v2784 = vrot.slane %v2682, 1
      %v2785 = vrot.slane %v2683, 1
      %v2786 = vsel %vm730, %v2784, %v2785
      %v2787 = vrot.slane %v2684, 1
      %v2788 = vsel %vm730, %v2785, %v2787
      %v2789 = vrot.slane %v2685, 1
      %v2790 = vrot.slane %v2686, 1
      %v2791 = vsel %vm730, %v2789, %v2790
      %v2792 = vrot.slane %v2687, 1
      %v2793 = vsel %vm730, %v2790, %v2792
      %v2794 = vrot.slane %v2688, 1
      %v2795 = vrot.slane %v2689, 1
      %v2796 = vsel %vm730, %v2794, %v2795
      %v2797 = vrot.slane %v2690, 1
      %v2798 = vsel %vm730, %v2795, %v2797
      %v2799 = vrot.slane %v2691, 1
      %v2800 = vrot.slane %v2692, 1
      %v2801 = vsel %vm730, %v2799, %v2800
      %v2802 = vrot.slane %v2693, 1
      %v2803 = vsel %vm730, %v2800, %v2802
      %v2804 = vrot.slane %v2694, 1
      %v2805 = vrot.slane %v2695, 1
      %v2806 = vsel %vm730, %v2804, %v2805
      %v2807 = vrot.slane %v2696, 1
      %v2808 = vsel %vm730, %v2805, %v2807
      %v2809 = vrot.slane %v2697, 1
      %v2810 = vrot.slane %v2698, 1
      %v2811 = vsel %vm730, %v2809, %v2810
      %v2812 = vrot.slane %v2699, 1
      %v2813 = vsel %vm730, %v2810, %v2812
      %v2814 = vrot.slane %v2700, 1
      %v2815 = vrot.slane %v2701, 1
      %v2816 = vsel %vm730, %v2814, %v2815
      %v2817 = vrot.slane %v2702, 1
      %v2818 = vsel %vm730, %v2815, %v2817
      %v2819 = vrot.slane %v2703, 1
      %v2820 = vrot.slane %v2704, 1
      %v2821 = vsel %vm730, %v2819, %v2820
      %v2822 = vrot.slane %v2705, 1
      %v2823 = vsel %vm730, %v2820, %v2822
      %v2824 = vrot.slane %v2706, 1
      %v2825 = vrot.slane %v2707, 1
      %v2826 = vsel %vm730, %v2824, %v2825
      %v2827 = vrot.slane %v2708, 1
      %v2828 = vsel %vm730, %v2825, %v2827
      %v2829 = vrot.slane %v2709, 1
      %v2830 = vrot.slane %v2710, 1
      %v2831 = vsel %vm730, %v2829, %v2830
      %v2832 = vrot.slane %v2711, 1
      %v2833 = vsel %vm730, %v2830, %v2832
      %v2834 = vrot.slane %v2712, 1
      %v2835 = vrot.slane %v2713, 1
      %v2836 = vsel %vm730, %v2834, %v2835
      %v2837 = vrot.slane %v2714, 1
      %v2838 = vsel %vm730, %v2835, %v2837
      %v2839 = vrot.slane %v2715, 1
      %v2840 = vrot.slane %v2716, 1
      %v2841 = vsel %vm730, %v2839, %v2840
      %v2842 = vrot.slane %v2717, 1
      %v2843 = vsel %vm730, %v2840, %v2842
      %v2844 = vrot.slane %v2718, 1
      %v2845 = vrot.slane %v2719, 1
      %v2846 = vsel %vm730, %v2844, %v2845
      %v2847 = vrot.slane %v2720, 1
      %v2848 = vsel %vm730, %v2845, %v2847
      %v2881 = vadd.f32 %v2640, %v2771
      %v2882 = vadd.f32 %v2641, %v2773
      %v2883 = vadd.f32 %v2642, %v2776
      %v2884 = vadd.f32 %v2643, %v2778
      %v2885 = vadd.f32 %v2644, %v2781
      %v2886 = vadd.f32 %v2645, %v2783
      %v2887 = vadd.f32 %v2646, %v2786
      %v2888 = vadd.f32 %v2647, %v2788
      %v2889 = vadd.f32 %v2648, %v2791
      %v2890 = vadd.f32 %v2649, %v2793
      %v2891 = vadd.f32 %v2650, %v2796
      %v2892 = vadd.f32 %v2651, %v2798
      %v2893 = vadd.f32 %v2652, %v2801
      %v2894 = vadd.f32 %v2653, %v2803
      %v2895 = vadd.f32 %v2654, %v2806
      %v2896 = vadd.f32 %v2655, %v2808
      %v2897 = vadd.f32 %v2656, %v2811
      %v2898 = vadd.f32 %v2657, %v2813
      %v2899 = vadd.f32 %v2658, %v2816
      %v2900 = vadd.f32 %v2659, %v2818
      %v2901 = vadd.f32 %v2660, %v2821
      %v2902 = vadd.f32 %v2661, %v2823
      %v2903 = vadd.f32 %v2662, %v2826
      %v2904 = vadd.f32 %v2663, %v2828
      %v2905 = vadd.f32 %v2664, %v2831
      %v2906 = vadd.f32 %v2665, %v2833
      %v2907 = vadd.f32 %v2666, %v2836
      %v2908 = vadd.f32 %v2667, %v2838
      %v2909 = vadd.f32 %v2668, %v2841
      %v2910 = vadd.f32 %v2669, %v2843
      %v2911 = vadd.f32 %v2670, %v2846
      %v2912 = vadd.f32 %v2671, %v2848
      %v2913 = vperm.slane %v2604, 2
      %v2914 = vmul.f32 %v2550, %v2913
      %v2915 = vmul.f32 %v2551, %v2913
      %v2916 = vmul.f32 %v2552, %v2913
      %v2917 = vmul.f32 %v2553, %v2913
      %v2918 = vmul.f32 %v2554, %v2913
      %v2919 = vmul.f32 %v2555, %v2913
      %v2920 = vmul.f32 %v2556, %v2913
      %v2921 = vmul.f32 %v2557, %v2913
      %v2922 = vmul.f32 %v2558, %v2913
      %v2923 = vmul.f32 %v2559, %v2913
      %v2924 = vmul.f32 %v2560, %v2913
      %v2925 = vmul.f32 %v2561, %v2913
      %v2926 = vmul.f32 %v2562, %v2913
      %v2927 = vmul.f32 %v2563, %v2913
      %v2928 = vmul.f32 %v2564, %v2913
      %v2929 = vmul.f32 %v2565, %v2913
      %v2930 = vmul.f32 %v2566, %v2913
      %v2931 = vmul.f32 %v2567, %v2913
      %v2932 = vmul.f32 %v2568, %v2913
      %v2933 = vmul.f32 %v2569, %v2913
      %v2934 = vmul.f32 %v2570, %v2913
      %v2935 = vmul.f32 %v2571, %v2913
      %v2936 = vmul.f32 %v2572, %v2913
      %v2937 = vmul.f32 %v2573, %v2913
      %v2938 = vmul.f32 %v2574, %v2913
      %v2939 = vmul.f32 %v2575, %v2913
      %v2940 = vmul.f32 %v2576, %v2913
      %v2941 = vmul.f32 %v2577, %v2913
      %v2942 = vmul.f32 %v2578, %v2913
      %v2943 = vmul.f32 %v2579, %v2913
      %v2944 = vmul.f32 %v2580, %v2913
      %v2945 = vmul.f32 %v2581, %v2913
      %v2946 = vmul.f32 %v2582, %v2913
      %v2947 = vmul.f32 %v2583, %v2913
      %v2948 = vmul.f32 %v2584, %v2913
      %v2949 = vmul.f32 %v2585, %v2913
      %v2950 = vmul.f32 %v2586, %v2913
      %v2951 = vmul.f32 %v2587, %v2913
      %v2952 = vmul.f32 %v2588, %v2913
      %v2953 = vmul.f32 %v2589, %v2913
      %v2954 = vmul.f32 %v2590, %v2913
      %v2955 = vmul.f32 %v2591, %v2913
      %v2956 = vmul.f32 %v2592, %v2913
      %v2957 = vmul.f32 %v2593, %v2913
      %v2958 = vmul.f32 %v2594, %v2913
      %v2959 = vmul.f32 %v2595, %v2913
      %v2960 = vmul.f32 %v2596, %v2913
      %v2961 = vmul.f32 %v2597, %v2913
      %v3010 = vrot.slane %v2914, 2
      %v3011 = vrot.slane %v2915, 2
      %v3012 = vsel %vm972, %v3010, %v3011
      %v3013 = vrot.slane %v2916, 2
      %v3014 = vsel %vm972, %v3011, %v3013
      %v3015 = vrot.slane %v2917, 2
      %v3016 = vrot.slane %v2918, 2
      %v3017 = vsel %vm972, %v3015, %v3016
      %v3018 = vrot.slane %v2919, 2
      %v3019 = vsel %vm972, %v3016, %v3018
      %v3020 = vrot.slane %v2920, 2
      %v3021 = vrot.slane %v2921, 2
      %v3022 = vsel %vm972, %v3020, %v3021
      %v3023 = vrot.slane %v2922, 2
      %v3024 = vsel %vm972, %v3021, %v3023
      %v3025 = vrot.slane %v2923, 2
      %v3026 = vrot.slane %v2924, 2
      %v3027 = vsel %vm972, %v3025, %v3026
      %v3028 = vrot.slane %v2925, 2
      %v3029 = vsel %vm972, %v3026, %v3028
      %v3030 = vrot.slane %v2926, 2
      %v3031 = vrot.slane %v2927, 2
      %v3032 = vsel %vm972, %v3030, %v3031
      %v3033 = vrot.slane %v2928, 2
      %v3034 = vsel %vm972, %v3031, %v3033
      %v3035 = vrot.slane %v2929, 2
      %v3036 = vrot.slane %v2930, 2
      %v3037 = vsel %vm972, %v3035, %v3036
      %v3038 = vrot.slane %v2931, 2
      %v3039 = vsel %vm972, %v3036, %v3038
      %v3040 = vrot.slane %v2932, 2
      %v3041 = vrot.slane %v2933, 2
      %v3042 = vsel %vm972, %v3040, %v3041
      %v3043 = vrot.slane %v2934, 2
      %v3044 = vsel %vm972, %v3041, %v3043
      %v3045 = vrot.slane %v2935, 2
      %v3046 = vrot.slane %v2936, 2
      %v3047 = vsel %vm972, %v3045, %v3046
      %v3048 = vrot.slane %v2937, 2
      %v3049 = vsel %vm972, %v3046, %v3048
      %v3050 = vrot.slane %v2938, 2
      %v3051 = vrot.slane %v2939, 2
      %v3052 = vsel %vm972, %v3050, %v3051
      %v3053 = vrot.slane %v2940, 2
      %v3054 = vsel %vm972, %v3051, %v3053
      %v3055 = vrot.slane %v2941, 2
      %v3056 = vrot.slane %v2942, 2
      %v3057 = vsel %vm972, %v3055, %v3056
      %v3058 = vrot.slane %v2943, 2
      %v3059 = vsel %vm972, %v3056, %v3058
      %v3060 = vrot.slane %v2944, 2
      %v3061 = vrot.slane %v2945, 2
      %v3062 = vsel %vm972, %v3060, %v3061
      %v3063 = vrot.slane %v2946, 2
      %v3064 = vsel %vm972, %v3061, %v3063
      %v3065 = vrot.slane %v2947, 2
      %v3066 = vrot.slane %v2948, 2
      %v3067 = vsel %vm972, %v3065, %v3066
      %v3068 = vrot.slane %v2949, 2
      %v3069 = vsel %vm972, %v3066, %v3068
      %v3070 = vrot.slane %v2950, 2
      %v3071 = vrot.slane %v2951, 2
      %v3072 = vsel %vm972, %v3070, %v3071
      %v3073 = vrot.slane %v2952, 2
      %v3074 = vsel %vm972, %v3071, %v3073
      %v3075 = vrot.slane %v2953, 2
      %v3076 = vrot.slane %v2954, 2
      %v3077 = vsel %vm972, %v3075, %v3076
      %v3078 = vrot.slane %v2955, 2
      %v3079 = vsel %vm972, %v3076, %v3078
      %v3080 = vrot.slane %v2956, 2
      %v3081 = vrot.slane %v2957, 2
      %v3082 = vsel %vm972, %v3080, %v3081
      %v3083 = vrot.slane %v2958, 2
      %v3084 = vsel %vm972, %v3081, %v3083
      %v3085 = vrot.slane %v2959, 2
      %v3086 = vrot.slane %v2960, 2
      %v3087 = vsel %vm972, %v3085, %v3086
      %v3088 = vrot.slane %v2961, 2
      %v3089 = vsel %vm972, %v3086, %v3088
      %v3122 = vadd.f32 %v2881, %v3012
      %v3123 = vadd.f32 %v2882, %v3014
      %v3124 = vadd.f32 %v2883, %v3017
      %v3125 = vadd.f32 %v2884, %v3019
      %v3126 = vadd.f32 %v2885, %v3022
      %v3127 = vadd.f32 %v2886, %v3024
      %v3128 = vadd.f32 %v2887, %v3027
      %v3129 = vadd.f32 %v2888, %v3029
      %v3130 = vadd.f32 %v2889, %v3032
      %v3131 = vadd.f32 %v2890, %v3034
      %v3132 = vadd.f32 %v2891, %v3037
      %v3133 = vadd.f32 %v2892, %v3039
      %v3134 = vadd.f32 %v2893, %v3042
      %v3135 = vadd.f32 %v2894, %v3044
      %v3136 = vadd.f32 %v2895, %v3047
      %v3137 = vadd.f32 %v2896, %v3049
      %v3138 = vadd.f32 %v2897, %v3052
      %v3139 = vadd.f32 %v2898, %v3054
      %v3140 = vadd.f32 %v2899, %v3057
      %v3141 = vadd.f32 %v2900, %v3059
      %v3142 = vadd.f32 %v2901, %v3062
      %v3143 = vadd.f32 %v2902, %v3064
      %v3144 = vadd.f32 %v2903, %v3067
      %v3145 = vadd.f32 %v2904, %v3069
      %v3146 = vadd.f32 %v2905, %v3072
      %v3147 = vadd.f32 %v2906, %v3074
      %v3148 = vadd.f32 %v2907, %v3077
      %v3149 = vadd.f32 %v2908, %v3079
      %v3150 = vadd.f32 %v2909, %v3082
      %v3151 = vadd.f32 %v2910, %v3084
      %v3152 = vadd.f32 %v2911, %v3087
      %v3153 = vadd.f32 %v2912, %v3089
      %v3154 = vperm.slane %v2605, 0
      %v3155 = vmul.f32 %v2553, %v3154
      %v3156 = vmul.f32 %v2554, %v3154
      %v3157 = vmul.f32 %v2556, %v3154
      %v3158 = vmul.f32 %v2557, %v3154
      %v3159 = vmul.f32 %v2559, %v3154
      %v3160 = vmul.f32 %v2560, %v3154
      %v3161 = vmul.f32 %v2562, %v3154
      %v3162 = vmul.f32 %v2563, %v3154
      %v3163 = vmul.f32 %v2565, %v3154
      %v3164 = vmul.f32 %v2566, %v3154
      %v3165 = vmul.f32 %v2568, %v3154
      %v3166 = vmul.f32 %v2569, %v3154
      %v3167 = vmul.f32 %v2571, %v3154
      %v3168 = vmul.f32 %v2572, %v3154
      %v3169 = vmul.f32 %v2574, %v3154
      %v3170 = vmul.f32 %v2575, %v3154
      %v3171 = vmul.f32 %v2577, %v3154
      %v3172 = vmul.f32 %v2578, %v3154
      %v3173 = vmul.f32 %v2580, %v3154
      %v3174 = vmul.f32 %v2581, %v3154
      %v3175 = vmul.f32 %v2583, %v3154
      %v3176 = vmul.f32 %v2584, %v3154
      %v3177 = vmul.f32 %v2586, %v3154
      %v3178 = vmul.f32 %v2587, %v3154
      %v3179 = vmul.f32 %v2589, %v3154
      %v3180 = vmul.f32 %v2590, %v3154
      %v3181 = vmul.f32 %v2592, %v3154
      %v3182 = vmul.f32 %v2593, %v3154
      %v3183 = vmul.f32 %v2595, %v3154
      %v3184 = vmul.f32 %v2596, %v3154
      %v3185 = vmul.f32 %v2598, %v3154
      %v3186 = vmul.f32 %v2599, %v3154
      %v3187 = vadd.f32 %v3122, %v3155
      %v3188 = vadd.f32 %v3123, %v3156
      %v3189 = vadd.f32 %v3124, %v3157
      %v3190 = vadd.f32 %v3125, %v3158
      %v3191 = vadd.f32 %v3126, %v3159
      %v3192 = vadd.f32 %v3127, %v3160
      %v3193 = vadd.f32 %v3128, %v3161
      %v3194 = vadd.f32 %v3129, %v3162
      %v3195 = vadd.f32 %v3130, %v3163
      %v3196 = vadd.f32 %v3131, %v3164
      %v3197 = vadd.f32 %v3132, %v3165
      %v3198 = vadd.f32 %v3133, %v3166
      %v3199 = vadd.f32 %v3134, %v3167
      %v3200 = vadd.f32 %v3135, %v3168
      %v3201 = vadd.f32 %v3136, %v3169
      %v3202 = vadd.f32 %v3137, %v3170
      %v3203 = vadd.f32 %v3138, %v3171
      %v3204 = vadd.f32 %v3139, %v3172
      %v3205 = vadd.f32 %v3140, %v3173
      %v3206 = vadd.f32 %v3141, %v3174
      %v3207 = vadd.f32 %v3142, %v3175
      %v3208 = vadd.f32 %v3143, %v3176
      %v3209 = vadd.f32 %v3144, %v3177
      %v3210 = vadd.f32 %v3145, %v3178
      %v3211 = vadd.f32 %v3146, %v3179
      %v3212 = vadd.f32 %v3147, %v3180
      %v3213 = vadd.f32 %v3148, %v3181
      %v3214 = vadd.f32 %v3149, %v3182
      %v3215 = vadd.f32 %v3150, %v3183
      %v3216 = vadd.f32 %v3151, %v3184
      %v3217 = vadd.f32 %v3152, %v3185
      %v3218 = vadd.f32 %v3153, %v3186
      %v3219 = vperm.slane %v2605, 1
      %v3220 = vmul.f32 %v2553, %v3219
      %v3221 = vmul.f32 %v2554, %v3219
      %v3222 = vmul.f32 %v2555, %v3219
      %v3223 = vmul.f32 %v2556, %v3219
      %v3224 = vmul.f32 %v2557, %v3219
      %v3225 = vmul.f32 %v2558, %v3219
      %v3226 = vmul.f32 %v2559, %v3219
      %v3227 = vmul.f32 %v2560, %v3219
      %v3228 = vmul.f32 %v2561, %v3219
      %v3229 = vmul.f32 %v2562, %v3219
      %v3230 = vmul.f32 %v2563, %v3219
      %v3231 = vmul.f32 %v2564, %v3219
      %v3232 = vmul.f32 %v2565, %v3219
      %v3233 = vmul.f32 %v2566, %v3219
      %v3234 = vmul.f32 %v2567, %v3219
      %v3235 = vmul.f32 %v2568, %v3219
      %v3236 = vmul.f32 %v2569, %v3219
      %v3237 = vmul.f32 %v2570, %v3219
      %v3238 = vmul.f32 %v2571, %v3219
      %v3239 = vmul.f32 %v2572, %v3219
      %v3240 = vmul.f32 %v2573, %v3219
      %v3241 = vmul.f32 %v2574, %v3219
      %v3242 = vmul.f32 %v2575, %v3219
      %v3243 = vmul.f32 %v2576, %v3219
      %v3244 = vmul.f32 %v2577, %v3219
      %v3245 = vmul.f32 %v2578, %v3219
      %v3246 = vmul.f32 %v2579, %v3219
      %v3247 = vmul.f32 %v2580, %v3219
      %v3248 = vmul.f32 %v2581, %v3219
      %v3249 = vmul.f32 %v2582, %v3219
      %v3250 = vmul.f32 %v2583, %v3219
      %v3251 = vmul.f32 %v2584, %v3219
      %v3252 = vmul.f32 %v2585, %v3219
      %v3253 = vmul.f32 %v2586, %v3219
      %v3254 = vmul.f32 %v2587, %v3219
      %v3255 = vmul.f32 %v2588, %v3219
      %v3256 = vmul.f32 %v2589, %v3219
      %v3257 = vmul.f32 %v2590, %v3219
      %v3258 = vmul.f32 %v2591, %v3219
      %v3259 = vmul.f32 %v2592, %v3219
      %v3260 = vmul.f32 %v2593, %v3219
      %v3261 = vmul.f32 %v2594, %v3219
      %v3262 = vmul.f32 %v2595, %v3219
      %v3263 = vmul.f32 %v2596, %v3219
      %v3264 = vmul.f32 %v2597, %v3219
      %v3265 = vmul.f32 %v2598, %v3219
      %v3266 = vmul.f32 %v2599, %v3219
      %v3267 = vmul.f32 %v2600, %v3219
      %v3316 = vrot.slane %v3220, 1
      %v3317 = vrot.slane %v3221, 1
      %v3318 = vsel %vm730, %v3316, %v3317
      %v3319 = vrot.slane %v3222, 1
      %v3320 = vsel %vm730, %v3317, %v3319
      %v3321 = vrot.slane %v3223, 1
      %v3322 = vrot.slane %v3224, 1
      %v3323 = vsel %vm730, %v3321, %v3322
      %v3324 = vrot.slane %v3225, 1
      %v3325 = vsel %vm730, %v3322, %v3324
      %v3326 = vrot.slane %v3226, 1
      %v3327 = vrot.slane %v3227, 1
      %v3328 = vsel %vm730, %v3326, %v3327
      %v3329 = vrot.slane %v3228, 1
      %v3330 = vsel %vm730, %v3327, %v3329
      %v3331 = vrot.slane %v3229, 1
      %v3332 = vrot.slane %v3230, 1
      %v3333 = vsel %vm730, %v3331, %v3332
      %v3334 = vrot.slane %v3231, 1
      %v3335 = vsel %vm730, %v3332, %v3334
      %v3336 = vrot.slane %v3232, 1
      %v3337 = vrot.slane %v3233, 1
      %v3338 = vsel %vm730, %v3336, %v3337
      %v3339 = vrot.slane %v3234, 1
      %v3340 = vsel %vm730, %v3337, %v3339
      %v3341 = vrot.slane %v3235, 1
      %v3342 = vrot.slane %v3236, 1
      %v3343 = vsel %vm730, %v3341, %v3342
      %v3344 = vrot.slane %v3237, 1
      %v3345 = vsel %vm730, %v3342, %v3344
      %v3346 = vrot.slane %v3238, 1
      %v3347 = vrot.slane %v3239, 1
      %v3348 = vsel %vm730, %v3346, %v3347
      %v3349 = vrot.slane %v3240, 1
      %v3350 = vsel %vm730, %v3347, %v3349
      %v3351 = vrot.slane %v3241, 1
      %v3352 = vrot.slane %v3242, 1
      %v3353 = vsel %vm730, %v3351, %v3352
      %v3354 = vrot.slane %v3243, 1
      %v3355 = vsel %vm730, %v3352, %v3354
      %v3356 = vrot.slane %v3244, 1
      %v3357 = vrot.slane %v3245, 1
      %v3358 = vsel %vm730, %v3356, %v3357
      %v3359 = vrot.slane %v3246, 1
      %v3360 = vsel %vm730, %v3357, %v3359
      %v3361 = vrot.slane %v3247, 1
      %v3362 = vrot.slane %v3248, 1
      %v3363 = vsel %vm730, %v3361, %v3362
      %v3364 = vrot.slane %v3249, 1
      %v3365 = vsel %vm730, %v3362, %v3364
      %v3366 = vrot.slane %v3250, 1
      %v3367 = vrot.slane %v3251, 1
      %v3368 = vsel %vm730, %v3366, %v3367
      %v3369 = vrot.slane %v3252, 1
      %v3370 = vsel %vm730, %v3367, %v3369
      %v3371 = vrot.slane %v3253, 1
      %v3372 = vrot.slane %v3254, 1
      %v3373 = vsel %vm730, %v3371, %v3372
      %v3374 = vrot.slane %v3255, 1
      %v3375 = vsel %vm730, %v3372, %v3374
      %v3376 = vrot.slane %v3256, 1
      %v3377 = vrot.slane %v3257, 1
      %v3378 = vsel %vm730, %v3376, %v3377
      %v3379 = vrot.slane %v3258, 1
      %v3380 = vsel %vm730, %v3377, %v3379
      %v3381 = vrot.slane %v3259, 1
      %v3382 = vrot.slane %v3260, 1
      %v3383 = vsel %vm730, %v3381, %v3382
      %v3384 = vrot.slane %v3261, 1
      %v3385 = vsel %vm730, %v3382, %v3384
      %v3386 = vrot.slane %v3262, 1
      %v3387 = vrot.slane %v3263, 1
      %v3388 = vsel %vm730, %v3386, %v3387
      %v3389 = vrot.slane %v3264, 1
      %v3390 = vsel %vm730, %v3387, %v3389
      %v3391 = vrot.slane %v3265, 1
      %v3392 = vrot.slane %v3266, 1
      %v3393 = vsel %vm730, %v3391, %v3392
      %v3394 = vrot.slane %v3267, 1
      %v3395 = vsel %vm730, %v3392, %v3394
      %v3428 = vadd.f32 %v3187, %v3318
      %v3429 = vadd.f32 %v3188, %v3320
      %v3430 = vadd.f32 %v3189, %v3323
      %v3431 = vadd.f32 %v3190, %v3325
      %v3432 = vadd.f32 %v3191, %v3328
      %v3433 = vadd.f32 %v3192, %v3330
      %v3434 = vadd.f32 %v3193, %v3333
      %v3435 = vadd.f32 %v3194, %v3335
      %v3436 = vadd.f32 %v3195, %v3338
      %v3437 = vadd.f32 %v3196, %v3340
      %v3438 = vadd.f32 %v3197, %v3343
      %v3439 = vadd.f32 %v3198, %v3345
      %v3440 = vadd.f32 %v3199, %v3348
      %v3441 = vadd.f32 %v3200, %v3350
      %v3442 = vadd.f32 %v3201, %v3353
      %v3443 = vadd.f32 %v3202, %v3355
      %v3444 = vadd.f32 %v3203, %v3358
      %v3445 = vadd.f32 %v3204, %v3360
      %v3446 = vadd.f32 %v3205, %v3363
      %v3447 = vadd.f32 %v3206, %v3365
      %v3448 = vadd.f32 %v3207, %v3368
      %v3449 = vadd.f32 %v3208, %v3370
      %v3450 = vadd.f32 %v3209, %v3373
      %v3451 = vadd.f32 %v3210, %v3375
      %v3452 = vadd.f32 %v3211, %v3378
      %v3453 = vadd.f32 %v3212, %v3380
      %v3454 = vadd.f32 %v3213, %v3383
      %v3455 = vadd.f32 %v3214, %v3385
      %v3456 = vadd.f32 %v3215, %v3388
      %v3457 = vadd.f32 %v3216, %v3390
      %v3458 = vadd.f32 %v3217, %v3393
      %v3459 = vadd.f32 %v3218, %v3395
      %v3460 = vperm.slane %v2605, 2
      %v3461 = vmul.f32 %v2553, %v3460
      %v3462 = vmul.f32 %v2554, %v3460
      %v3463 = vmul.f32 %v2555, %v3460
      %v3464 = vmul.f32 %v2556, %v3460
      %v3465 = vmul.f32 %v2557, %v3460
      %v3466 = vmul.f32 %v2558, %v3460
      %v3467 = vmul.f32 %v2559, %v3460
      %v3468 = vmul.f32 %v2560, %v3460
      %v3469 = vmul.f32 %v2561, %v3460
      %v3470 = vmul.f32 %v2562, %v3460
      %v3471 = vmul.f32 %v2563, %v3460
      %v3472 = vmul.f32 %v2564, %v3460
      %v3473 = vmul.f32 %v2565, %v3460
      %v3474 = vmul.f32 %v2566, %v3460
      %v3475 = vmul.f32 %v2567, %v3460
      %v3476 = vmul.f32 %v2568, %v3460
      %v3477 = vmul.f32 %v2569, %v3460
      %v3478 = vmul.f32 %v2570, %v3460
      %v3479 = vmul.f32 %v2571, %v3460
      %v3480 = vmul.f32 %v2572, %v3460
      %v3481 = vmul.f32 %v2573, %v3460
      %v3482 = vmul.f32 %v2574, %v3460
      %v3483 = vmul.f32 %v2575, %v3460
      %v3484 = vmul.f32 %v2576, %v3460
      %v3485 = vmul.f32 %v2577, %v3460
      %v3486 = vmul.f32 %v2578, %v3460
      %v3487 = vmul.f32 %v2579, %v3460
      %v3488 = vmul.f32 %v2580, %v3460
      %v3489 = vmul.f32 %v2581, %v3460
      %v3490 = vmul.f32 %v2582, %v3460
      %v3491 = vmul.f32 %v2583, %v3460
      %v3492 = vmul.f32 %v2584, %v3460
      %v3493 = vmul.f32 %v2585, %v3460
      %v3494 = vmul.f32 %v2586, %v3460
      %v3495 = vmul.f32 %v2587, %v3460
      %v3496 = vmul.f32 %v2588, %v3460
      %v3497 = vmul.f32 %v2589, %v3460
      %v3498 = vmul.f32 %v2590, %v3460
      %v3499 = vmul.f32 %v2591, %v3460
      %v3500 = vmul.f32 %v2592, %v3460
      %v3501 = vmul.f32 %v2593, %v3460
      %v3502 = vmul.f32 %v2594, %v3460
      %v3503 = vmul.f32 %v2595, %v3460
      %v3504 = vmul.f32 %v2596, %v3460
      %v3505 = vmul.f32 %v2597, %v3460
      %v3506 = vmul.f32 %v2598, %v3460
      %v3507 = vmul.f32 %v2599, %v3460
      %v3508 = vmul.f32 %v2600, %v3460
      %v3557 = vrot.slane %v3461, 2
      %v3558 = vrot.slane %v3462, 2
      %v3559 = vsel %vm972, %v3557, %v3558
      %v3560 = vrot.slane %v3463, 2
      %v3561 = vsel %vm972, %v3558, %v3560
      %v3562 = vrot.slane %v3464, 2
      %v3563 = vrot.slane %v3465, 2
      %v3564 = vsel %vm972, %v3562, %v3563
      %v3565 = vrot.slane %v3466, 2
      %v3566 = vsel %vm972, %v3563, %v3565
      %v3567 = vrot.slane %v3467, 2
      %v3568 = vrot.slane %v3468, 2
      %v3569 = vsel %vm972, %v3567, %v3568
      %v3570 = vrot.slane %v3469, 2
      %v3571 = vsel %vm972, %v3568, %v3570
      %v3572 = vrot.slane %v3470, 2
      %v3573 = vrot.slane %v3471, 2
      %v3574 = vsel %vm972, %v3572, %v3573
      %v3575 = vrot.slane %v3472, 2
      %v3576 = vsel %vm972, %v3573, %v3575
      %v3577 = vrot.slane %v3473, 2
      %v3578 = vrot.slane %v3474, 2
      %v3579 = vsel %vm972, %v3577, %v3578
      %v3580 = vrot.slane %v3475, 2
      %v3581 = vsel %vm972, %v3578, %v3580
      %v3582 = vrot.slane %v3476, 2
      %v3583 = vrot.slane %v3477, 2
      %v3584 = vsel %vm972, %v3582, %v3583
      %v3585 = vrot.slane %v3478, 2
      %v3586 = vsel %vm972, %v3583, %v3585
      %v3587 = vrot.slane %v3479, 2
      %v3588 = vrot.slane %v3480, 2
      %v3589 = vsel %vm972, %v3587, %v3588
      %v3590 = vrot.slane %v3481, 2
      %v3591 = vsel %vm972, %v3588, %v3590
      %v3592 = vrot.slane %v3482, 2
      %v3593 = vrot.slane %v3483, 2
      %v3594 = vsel %vm972, %v3592, %v3593
      %v3595 = vrot.slane %v3484, 2
      %v3596 = vsel %vm972, %v3593, %v3595
      %v3597 = vrot.slane %v3485, 2
      %v3598 = vrot.slane %v3486, 2
      %v3599 = vsel %vm972, %v3597, %v3598
      %v3600 = vrot.slane %v3487, 2
      %v3601 = vsel %vm972, %v3598, %v3600
      %v3602 = vrot.slane %v3488, 2
      %v3603 = vrot.slane %v3489, 2
      %v3604 = vsel %vm972, %v3602, %v3603
      %v3605 = vrot.slane %v3490, 2
      %v3606 = vsel %vm972, %v3603, %v3605
      %v3607 = vrot.slane %v3491, 2
      %v3608 = vrot.slane %v3492, 2
      %v3609 = vsel %vm972, %v3607, %v3608
      %v3610 = vrot.slane %v3493, 2
      %v3611 = vsel %vm972, %v3608, %v3610
      %v3612 = vrot.slane %v3494, 2
      %v3613 = vrot.slane %v3495, 2
      %v3614 = vsel %vm972, %v3612, %v3613
      %v3615 = vrot.slane %v3496, 2
      %v3616 = vsel %vm972, %v3613, %v3615
      %v3617 = vrot.slane %v3497, 2
      %v3618 = vrot.slane %v3498, 2
      %v3619 = vsel %vm972, %v3617, %v3618
      %v3620 = vrot.slane %v3499, 2
      %v3621 = vsel %vm972, %v3618, %v3620
      %v3622 = vrot.slane %v3500, 2
      %v3623 = vrot.slane %v3501, 2
      %v3624 = vsel %vm972, %v3622, %v3623
      %v3625 = vrot.slane %v3502, 2
      %v3626 = vsel %vm972, %v3623, %v3625
      %v3627 = vrot.slane %v3503, 2
      %v3628 = vrot.slane %v3504, 2
      %v3629 = vsel %vm972, %v3627, %v3628
      %v3630 = vrot.slane %v3505, 2
      %v3631 = vsel %vm972, %v3628, %v3630
      %v3632 = vrot.slane %v3506, 2
      %v3633 = vrot.slane %v3507, 2
      %v3634 = vsel %vm972, %v3632, %v3633
      %v3635 = vrot.slane %v3508, 2
      %v3636 = vsel %vm972, %v3633, %v3635
      %v3669 = vadd.f32 %v3428, %v3559
      %v3670 = vadd.f32 %v3429, %v3561
      %v3671 = vadd.f32 %v3430, %v3564
      %v3672 = vadd.f32 %v3431, %v3566
      %v3673 = vadd.f32 %v3432, %v3569
      %v3674 = vadd.f32 %v3433, %v3571
      %v3675 = vadd.f32 %v3434, %v3574
      %v3676 = vadd.f32 %v3435, %v3576
      %v3677 = vadd.f32 %v3436, %v3579
      %v3678 = vadd.f32 %v3437, %v3581
      %v3679 = vadd.f32 %v3438, %v3584
      %v3680 = vadd.f32 %v3439, %v3586
      %v3681 = vadd.f32 %v3440, %v3589
      %v3682 = vadd.f32 %v3441, %v3591
      %v3683 = vadd.f32 %v3442, %v3594
      %v3684 = vadd.f32 %v3443, %v3596
      %v3685 = vadd.f32 %v3444, %v3599
      %v3686 = vadd.f32 %v3445, %v3601
      %v3687 = vadd.f32 %v3446, %v3604
      %v3688 = vadd.f32 %v3447, %v3606
      %v3689 = vadd.f32 %v3448, %v3609
      %v3690 = vadd.f32 %v3449, %v3611
      %v3691 = vadd.f32 %v3450, %v3614
      %v3692 = vadd.f32 %v3451, %v3616
      %v3693 = vadd.f32 %v3452, %v3619
      %v3694 = vadd.f32 %v3453, %v3621
      %v3695 = vadd.f32 %v3454, %v3624
      %v3696 = vadd.f32 %v3455, %v3626
      %v3697 = vadd.f32 %v3456, %v3629
      %v3698 = vadd.f32 %v3457, %v3631
      %v3699 = vadd.f32 %v3458, %v3634
      %v3700 = vadd.f32 %v3459, %v3636
      %v3701 = vperm.slane %v2606, 0
      %v3702 = vmul.f32 %v2556, %v3701
      %v3703 = vmul.f32 %v2557, %v3701
      %v3704 = vmul.f32 %v2559, %v3701
      %v3705 = vmul.f32 %v2560, %v3701
      %v3706 = vmul.f32 %v2562, %v3701
      %v3707 = vmul.f32 %v2563, %v3701
      %v3708 = vmul.f32 %v2565, %v3701
      %v3709 = vmul.f32 %v2566, %v3701
      %v3710 = vmul.f32 %v2568, %v3701
      %v3711 = vmul.f32 %v2569, %v3701
      %v3712 = vmul.f32 %v2571, %v3701
      %v3713 = vmul.f32 %v2572, %v3701
      %v3714 = vmul.f32 %v2574, %v3701
      %v3715 = vmul.f32 %v2575, %v3701
      %v3716 = vmul.f32 %v2577, %v3701
      %v3717 = vmul.f32 %v2578, %v3701
      %v3718 = vmul.f32 %v2580, %v3701
      %v3719 = vmul.f32 %v2581, %v3701
      %v3720 = vmul.f32 %v2583, %v3701
      %v3721 = vmul.f32 %v2584, %v3701
      %v3722 = vmul.f32 %v2586, %v3701
      %v3723 = vmul.f32 %v2587, %v3701
      %v3724 = vmul.f32 %v2589, %v3701
      %v3725 = vmul.f32 %v2590, %v3701
      %v3726 = vmul.f32 %v2592, %v3701
      %v3727 = vmul.f32 %v2593, %v3701
      %v3728 = vmul.f32 %v2595, %v3701
      %v3729 = vmul.f32 %v2596, %v3701
      %v3730 = vmul.f32 %v2598, %v3701
      %v3731 = vmul.f32 %v2599, %v3701
      %v3732 = vmul.f32 %v2601, %v3701
      %v3733 = vmul.f32 %v2602, %v3701
      %v3734 = vadd.f32 %v3669, %v3702
      %v3735 = vadd.f32 %v3670, %v3703
      %v3736 = vadd.f32 %v3671, %v3704
      %v3737 = vadd.f32 %v3672, %v3705
      %v3738 = vadd.f32 %v3673, %v3706
      %v3739 = vadd.f32 %v3674, %v3707
      %v3740 = vadd.f32 %v3675, %v3708
      %v3741 = vadd.f32 %v3676, %v3709
      %v3742 = vadd.f32 %v3677, %v3710
      %v3743 = vadd.f32 %v3678, %v3711
      %v3744 = vadd.f32 %v3679, %v3712
      %v3745 = vadd.f32 %v3680, %v3713
      %v3746 = vadd.f32 %v3681, %v3714
      %v3747 = vadd.f32 %v3682, %v3715
      %v3748 = vadd.f32 %v3683, %v3716
      %v3749 = vadd.f32 %v3684, %v3717
      %v3750 = vadd.f32 %v3685, %v3718
      %v3751 = vadd.f32 %v3686, %v3719
      %v3752 = vadd.f32 %v3687, %v3720
      %v3753 = vadd.f32 %v3688, %v3721
      %v3754 = vadd.f32 %v3689, %v3722
      %v3755 = vadd.f32 %v3690, %v3723
      %v3756 = vadd.f32 %v3691, %v3724
      %v3757 = vadd.f32 %v3692, %v3725
      %v3758 = vadd.f32 %v3693, %v3726
      %v3759 = vadd.f32 %v3694, %v3727
      %v3760 = vadd.f32 %v3695, %v3728
      %v3761 = vadd.f32 %v3696, %v3729
      %v3762 = vadd.f32 %v3697, %v3730
      %v3763 = vadd.f32 %v3698, %v3731
      %v3764 = vadd.f32 %v3699, %v3732
      %v3765 = vadd.f32 %v3700, %v3733
      %v3766 = vperm.slane %v2606, 1
      %v3767 = vmul.f32 %v2556, %v3766
      %v3768 = vmul.f32 %v2557, %v3766
      %v3769 = vmul.f32 %v2558, %v3766
      %v3770 = vmul.f32 %v2559, %v3766
      %v3771 = vmul.f32 %v2560, %v3766
      %v3772 = vmul.f32 %v2561, %v3766
      %v3773 = vmul.f32 %v2562, %v3766
      %v3774 = vmul.f32 %v2563, %v3766
      %v3775 = vmul.f32 %v2564, %v3766
      %v3776 = vmul.f32 %v2565, %v3766
      %v3777 = vmul.f32 %v2566, %v3766
      %v3778 = vmul.f32 %v2567, %v3766
      %v3779 = vmul.f32 %v2568, %v3766
      %v3780 = vmul.f32 %v2569, %v3766
      %v3781 = vmul.f32 %v2570, %v3766
      %v3782 = vmul.f32 %v2571, %v3766
      %v3783 = vmul.f32 %v2572, %v3766
      %v3784 = vmul.f32 %v2573, %v3766
      %v3785 = vmul.f32 %v2574, %v3766
      %v3786 = vmul.f32 %v2575, %v3766
      %v3787 = vmul.f32 %v2576, %v3766
      %v3788 = vmul.f32 %v2577, %v3766
      %v3789 = vmul.f32 %v2578, %v3766
      %v3790 = vmul.f32 %v2579, %v3766
      %v3791 = vmul.f32 %v2580, %v3766
      %v3792 = vmul.f32 %v2581, %v3766
      %v3793 = vmul.f32 %v2582, %v3766
      %v3794 = vmul.f32 %v2583, %v3766
      %v3795 = vmul.f32 %v2584, %v3766
      %v3796 = vmul.f32 %v2585, %v3766
      %v3797 = vmul.f32 %v2586, %v3766
      %v3798 = vmul.f32 %v2587, %v3766
      %v3799 = vmul.f32 %v2588, %v3766
      %v3800 = vmul.f32 %v2589, %v3766
      %v3801 = vmul.f32 %v2590, %v3766
      %v3802 = vmul.f32 %v2591, %v3766
      %v3803 = vmul.f32 %v2592, %v3766
      %v3804 = vmul.f32 %v2593, %v3766
      %v3805 = vmul.f32 %v2594, %v3766
      %v3806 = vmul.f32 %v2595, %v3766
      %v3807 = vmul.f32 %v2596, %v3766
      %v3808 = vmul.f32 %v2597, %v3766
      %v3809 = vmul.f32 %v2598, %v3766
      %v3810 = vmul.f32 %v2599, %v3766
      %v3811 = vmul.f32 %v2600, %v3766
      %v3812 = vmul.f32 %v2601, %v3766
      %v3813 = vmul.f32 %v2602, %v3766
      %v3814 = vmul.f32 %v2603, %v3766
      %v3863 = vrot.slane %v3767, 1
      %v3864 = vrot.slane %v3768, 1
      %v3865 = vsel %vm730, %v3863, %v3864
      %v3866 = vrot.slane %v3769, 1
      %v3867 = vsel %vm730, %v3864, %v3866
      %v3868 = vrot.slane %v3770, 1
      %v3869 = vrot.slane %v3771, 1
      %v3870 = vsel %vm730, %v3868, %v3869
      %v3871 = vrot.slane %v3772, 1
      %v3872 = vsel %vm730, %v3869, %v3871
      %v3873 = vrot.slane %v3773, 1
      %v3874 = vrot.slane %v3774, 1
      %v3875 = vsel %vm730, %v3873, %v3874
      %v3876 = vrot.slane %v3775, 1
      %v3877 = vsel %vm730, %v3874, %v3876
      %v3878 = vrot.slane %v3776, 1
      %v3879 = vrot.slane %v3777, 1
      %v3880 = vsel %vm730, %v3878, %v3879
      %v3881 = vrot.slane %v3778, 1
      %v3882 = vsel %vm730, %v3879, %v3881
      %v3883 = vrot.slane %v3779, 1
      %v3884 = vrot.slane %v3780, 1
      %v3885 = vsel %vm730, %v3883, %v3884
      %v3886 = vrot.slane %v3781, 1
      %v3887 = vsel %vm730, %v3884, %v3886
      %v3888 = vrot.slane %v3782, 1
      %v3889 = vrot.slane %v3783, 1
      %v3890 = vsel %vm730, %v3888, %v3889
      %v3891 = vrot.slane %v3784, 1
      %v3892 = vsel %vm730, %v3889, %v3891
      %v3893 = vrot.slane %v3785, 1
      %v3894 = vrot.slane %v3786, 1
      %v3895 = vsel %vm730, %v3893, %v3894
      %v3896 = vrot.slane %v3787, 1
      %v3897 = vsel %vm730, %v3894, %v3896
      %v3898 = vrot.slane %v3788, 1
      %v3899 = vrot.slane %v3789, 1
      %v3900 = vsel %vm730, %v3898, %v3899
      %v3901 = vrot.slane %v3790, 1
      %v3902 = vsel %vm730, %v3899, %v3901
      %v3903 = vrot.slane %v3791, 1
      %v3904 = vrot.slane %v3792, 1
      %v3905 = vsel %vm730, %v3903, %v3904
      %v3906 = vrot.slane %v3793, 1
      %v3907 = vsel %vm730, %v3904, %v3906
      %v3908 = vrot.slane %v3794, 1
      %v3909 = vrot.slane %v3795, 1
      %v3910 = vsel %vm730, %v3908, %v3909
      %v3911 = vrot.slane %v3796, 1
      %v3912 = vsel %vm730, %v3909, %v3911
      %v3913 = vrot.slane %v3797, 1
      %v3914 = vrot.slane %v3798, 1
      %v3915 = vsel %vm730, %v3913, %v3914
      %v3916 = vrot.slane %v3799, 1
      %v3917 = vsel %vm730, %v3914, %v3916
      %v3918 = vrot.slane %v3800, 1
      %v3919 = vrot.slane %v3801, 1
      %v3920 = vsel %vm730, %v3918, %v3919
      %v3921 = vrot.slane %v3802, 1
      %v3922 = vsel %vm730, %v3919, %v3921
      %v3923 = vrot.slane %v3803, 1
      %v3924 = vrot.slane %v3804, 1
      %v3925 = vsel %vm730, %v3923, %v3924
      %v3926 = vrot.slane %v3805, 1
      %v3927 = vsel %vm730, %v3924, %v3926
      %v3928 = vrot.slane %v3806, 1
      %v3929 = vrot.slane %v3807, 1
      %v3930 = vsel %vm730, %v3928, %v3929
      %v3931 = vrot.slane %v3808, 1
      %v3932 = vsel %vm730, %v3929, %v3931
      %v3933 = vrot.slane %v3809, 1
      %v3934 = vrot.slane %v3810, 1
      %v3935 = vsel %vm730, %v3933, %v3934
      %v3936 = vrot.slane %v3811, 1
      %v3937 = vsel %vm730, %v3934, %v3936
      %v3938 = vrot.slane %v3812, 1
      %v3939 = vrot.slane %v3813, 1
      %v3940 = vsel %vm730, %v3938, %v3939
      %v3941 = vrot.slane %v3814, 1
      %v3942 = vsel %vm730, %v3939, %v3941
      %v3975 = vadd.f32 %v3734, %v3865
      %v3976 = vadd.f32 %v3735, %v3867
      %v3977 = vadd.f32 %v3736, %v3870
      %v3978 = vadd.f32 %v3737, %v3872
      %v3979 = vadd.f32 %v3738, %v3875
      %v3980 = vadd.f32 %v3739, %v3877
      %v3981 = vadd.f32 %v3740, %v3880
      %v3982 = vadd.f32 %v3741, %v3882
      %v3983 = vadd.f32 %v3742, %v3885
      %v3984 = vadd.f32 %v3743, %v3887
      %v3985 = vadd.f32 %v3744, %v3890
      %v3986 = vadd.f32 %v3745, %v3892
      %v3987 = vadd.f32 %v3746, %v3895
      %v3988 = vadd.f32 %v3747, %v3897
      %v3989 = vadd.f32 %v3748, %v3900
      %v3990 = vadd.f32 %v3749, %v3902
      %v3991 = vadd.f32 %v3750, %v3905
      %v3992 = vadd.f32 %v3751, %v3907
      %v3993 = vadd.f32 %v3752, %v3910
      %v3994 = vadd.f32 %v3753, %v3912
      %v3995 = vadd.f32 %v3754, %v3915
      %v3996 = vadd.f32 %v3755, %v3917
      %v3997 = vadd.f32 %v3756, %v3920
      %v3998 = vadd.f32 %v3757, %v3922
      %v3999 = vadd.f32 %v3758, %v3925
      %v4000 = vadd.f32 %v3759, %v3927
      %v4001 = vadd.f32 %v3760, %v3930
      %v4002 = vadd.f32 %v3761, %v3932
      %v4003 = vadd.f32 %v3762, %v3935
      %v4004 = vadd.f32 %v3763, %v3937
      %v4005 = vadd.f32 %v3764, %v3940
      %v4006 = vadd.f32 %v3765, %v3942
      %v4007 = vperm.slane %v2606, 2
      %v4008 = vmul.f32 %v2556, %v4007
      %v4009 = vmul.f32 %v2557, %v4007
      %v4010 = vmul.f32 %v2558, %v4007
      %v4011 = vmul.f32 %v2559, %v4007
      %v4012 = vmul.f32 %v2560, %v4007
      %v4013 = vmul.f32 %v2561, %v4007
      %v4014 = vmul.f32 %v2562, %v4007
      %v4015 = vmul.f32 %v2563, %v4007
      %v4016 = vmul.f32 %v2564, %v4007
      %v4017 = vmul.f32 %v2565, %v4007
      %v4018 = vmul.f32 %v2566, %v4007
      %v4019 = vmul.f32 %v2567, %v4007
      %v4020 = vmul.f32 %v2568, %v4007
      %v4021 = vmul.f32 %v2569, %v4007
      %v4022 = vmul.f32 %v2570, %v4007
      %v4023 = vmul.f32 %v2571, %v4007
      %v4024 = vmul.f32 %v2572, %v4007
      %v4025 = vmul.f32 %v2573, %v4007
      %v4026 = vmul.f32 %v2574, %v4007
      %v4027 = vmul.f32 %v2575, %v4007
      %v4028 = vmul.f32 %v2576, %v4007
      %v4029 = vmul.f32 %v2577, %v4007
      %v4030 = vmul.f32 %v2578, %v4007
      %v4031 = vmul.f32 %v2579, %v4007
      %v4032 = vmul.f32 %v2580, %v4007
      %v4033 = vmul.f32 %v2581, %v4007
      %v4034 = vmul.f32 %v2582, %v4007
      %v4035 = vmul.f32 %v2583, %v4007
      %v4036 = vmul.f32 %v2584, %v4007
      %v4037 = vmul.f32 %v2585, %v4007
      %v4038 = vmul.f32 %v2586, %v4007
      %v4039 = vmul.f32 %v2587, %v4007
      %v4040 = vmul.f32 %v2588, %v4007
      %v4041 = vmul.f32 %v2589, %v4007
      %v4042 = vmul.f32 %v2590, %v4007
      %v4043 = vmul.f32 %v2591, %v4007
      %v4044 = vmul.f32 %v2592, %v4007
      %v4045 = vmul.f32 %v2593, %v4007
      %v4046 = vmul.f32 %v2594, %v4007
      %v4047 = vmul.f32 %v2595, %v4007
      %v4048 = vmul.f32 %v2596, %v4007
      %v4049 = vmul.f32 %v2597, %v4007
      %v4050 = vmul.f32 %v2598, %v4007
      %v4051 = vmul.f32 %v2599, %v4007
      %v4052 = vmul.f32 %v2600, %v4007
      %v4053 = vmul.f32 %v2601, %v4007
      %v4054 = vmul.f32 %v2602, %v4007
      %v4055 = vmul.f32 %v2603, %v4007
      %v4104 = vrot.slane %v4008, 2
      %v4105 = vrot.slane %v4009, 2
      %v4106 = vsel %vm972, %v4104, %v4105
      %v4107 = vrot.slane %v4010, 2
      %v4108 = vsel %vm972, %v4105, %v4107
      %v4109 = vrot.slane %v4011, 2
      %v4110 = vrot.slane %v4012, 2
      %v4111 = vsel %vm972, %v4109, %v4110
      %v4112 = vrot.slane %v4013, 2
      %v4113 = vsel %vm972, %v4110, %v4112
      %v4114 = vrot.slane %v4014, 2
      %v4115 = vrot.slane %v4015, 2
      %v4116 = vsel %vm972, %v4114, %v4115
      %v4117 = vrot.slane %v4016, 2
      %v4118 = vsel %vm972, %v4115, %v4117
      %v4119 = vrot.slane %v4017, 2
      %v4120 = vrot.slane %v4018, 2
      %v4121 = vsel %vm972, %v4119, %v4120
      %v4122 = vrot.slane %v4019, 2
      %v4123 = vsel %vm972, %v4120, %v4122
      %v4124 = vrot.slane %v4020, 2
      %v4125 = vrot.slane %v4021, 2
      %v4126 = vsel %vm972, %v4124, %v4125
      %v4127 = vrot.slane %v4022, 2
      %v4128 = vsel %vm972, %v4125, %v4127
      %v4129 = vrot.slane %v4023, 2
      %v4130 = vrot.slane %v4024, 2
      %v4131 = vsel %vm972, %v4129, %v4130
      %v4132 = vrot.slane %v4025, 2
      %v4133 = vsel %vm972, %v4130, %v4132
      %v4134 = vrot.slane %v4026, 2
      %v4135 = vrot.slane %v4027, 2
      %v4136 = vsel %vm972, %v4134, %v4135
      %v4137 = vrot.slane %v4028, 2
      %v4138 = vsel %vm972, %v4135, %v4137
      %v4139 = vrot.slane %v4029, 2
      %v4140 = vrot.slane %v4030, 2
      %v4141 = vsel %vm972, %v4139, %v4140
      %v4142 = vrot.slane %v4031, 2
      %v4143 = vsel %vm972, %v4140, %v4142
      %v4144 = vrot.slane %v4032, 2
      %v4145 = vrot.slane %v4033, 2
      %v4146 = vsel %vm972, %v4144, %v4145
      %v4147 = vrot.slane %v4034, 2
      %v4148 = vsel %vm972, %v4145, %v4147
      %v4149 = vrot.slane %v4035, 2
      %v4150 = vrot.slane %v4036, 2
      %v4151 = vsel %vm972, %v4149, %v4150
      %v4152 = vrot.slane %v4037, 2
      %v4153 = vsel %vm972, %v4150, %v4152
      %v4154 = vrot.slane %v4038, 2
      %v4155 = vrot.slane %v4039, 2
      %v4156 = vsel %vm972, %v4154, %v4155
      %v4157 = vrot.slane %v4040, 2
      %v4158 = vsel %vm972, %v4155, %v4157
      %v4159 = vrot.slane %v4041, 2
      %v4160 = vrot.slane %v4042, 2
      %v4161 = vsel %vm972, %v4159, %v4160
      %v4162 = vrot.slane %v4043, 2
      %v4163 = vsel %vm972, %v4160, %v4162
      %v4164 = vrot.slane %v4044, 2
      %v4165 = vrot.slane %v4045, 2
      %v4166 = vsel %vm972, %v4164, %v4165
      %v4167 = vrot.slane %v4046, 2
      %v4168 = vsel %vm972, %v4165, %v4167
      %v4169 = vrot.slane %v4047, 2
      %v4170 = vrot.slane %v4048, 2
      %v4171 = vsel %vm972, %v4169, %v4170
      %v4172 = vrot.slane %v4049, 2
      %v4173 = vsel %vm972, %v4170, %v4172
      %v4174 = vrot.slane %v4050, 2
      %v4175 = vrot.slane %v4051, 2
      %v4176 = vsel %vm972, %v4174, %v4175
      %v4177 = vrot.slane %v4052, 2
      %v4178 = vsel %vm972, %v4175, %v4177
      %v4179 = vrot.slane %v4053, 2
      %v4180 = vrot.slane %v4054, 2
      %v4181 = vsel %vm972, %v4179, %v4180
      %v4182 = vrot.slane %v4055, 2
      %v4183 = vsel %vm972, %v4180, %v4182
      %v4216 = vadd.f32 %v3975, %v4106
      %v4217 = vadd.f32 %v3976, %v4108
      %v4218 = vadd.f32 %v3977, %v4111
      %v4219 = vadd.f32 %v3978, %v4113
      %v4220 = vadd.f32 %v3979, %v4116
      %v4221 = vadd.f32 %v3980, %v4118
      %v4222 = vadd.f32 %v3981, %v4121
      %v4223 = vadd.f32 %v3982, %v4123
      %v4224 = vadd.f32 %v3983, %v4126
      %v4225 = vadd.f32 %v3984, %v4128
      %v4226 = vadd.f32 %v3985, %v4131
      %v4227 = vadd.f32 %v3986, %v4133
      %v4228 = vadd.f32 %v3987, %v4136
      %v4229 = vadd.f32 %v3988, %v4138
      %v4230 = vadd.f32 %v3989, %v4141
      %v4231 = vadd.f32 %v3990, %v4143
      %v4232 = vadd.f32 %v3991, %v4146
      %v4233 = vadd.f32 %v3992, %v4148
      %v4234 = vadd.f32 %v3993, %v4151
      %v4235 = vadd.f32 %v3994, %v4153
      %v4236 = vadd.f32 %v3995, %v4156
      %v4237 = vadd.f32 %v3996, %v4158
      %v4238 = vadd.f32 %v3997, %v4161
      %v4239 = vadd.f32 %v3998, %v4163
      %v4240 = vadd.f32 %v3999, %v4166
      %v4241 = vadd.f32 %v4000, %v4168
      %v4242 = vadd.f32 %v4001, %v4171
      %v4243 = vadd.f32 %v4002, %v4173
      %v4244 = vadd.f32 %v4003, %v4176
      %v4245 = vadd.f32 %v4004, %v4178
      %v4246 = vadd.f32 %v4005, %v4181
      %v4247 = vadd.f32 %v4006, %v4183
      %v4248 = vld [vmem:[%s5] sm:$0xff]
      %v4249 = vld [vmem:[%s6] sm:$0x1]
      %v4251 = vperm.slane %v4249, 0
      %v4254 = vsel %vm2461, %v4216, 0
      %v4257 = vsel %vm2461, %v4217, 0
      %v4260 = vsel %vm2461, %v4218, 0
      %v4263 = vsel %vm2461, %v4219, 0
      %v4266 = vsel %vm2461, %v4220, 0
      %v4269 = vsel %vm2461, %v4221, 0
      %v4272 = vsel %vm2461, %v4222, 0
      %v4275 = vsel %vm2461, %v4223, 0
      %v4278 = vsel %vm2461, %v4224, 0
      %v4281 = vsel %vm2461, %v4225, 0
      %v4284 = vsel %vm2461, %v4226, 0
      %v4287 = vsel %vm2461, %v4227, 0
      %v4290 = vsel %vm2461, %v4228, 0
      %v4293 = vsel %vm2461, %v4229, 0
      %v4296 = vsel %vm2461, %v4230, 0
      %v4299 = vsel %vm2461, %v4231, 0
      %v4302 = vsel %vm2461, %v4232, 0
      %v4305 = vsel %vm2461, %v4233, 0
      %v4308 = vsel %vm2461, %v4234, 0
      %v4311 = vsel %vm2461, %v4235, 0
      %v4314 = vsel %vm2461, %v4236, 0
      %v4317 = vsel %vm2461, %v4237, 0
      %v4320 = vsel %vm2461, %v4238, 0
      %v4323 = vsel %vm2461, %v4239, 0
      %v4326 = vsel %vm2461, %v4240, 0
      %v4329 = vsel %vm2461, %v4241, 0
      %v4332 = vsel %vm2461, %v4242, 0
      %v4335 = vsel %vm2461, %v4243, 0
      %v4338 = vsel %vm2461, %v4244, 0
      %v4341 = vsel %vm2461, %v4245, 0
      %v4344 = vsel %vm2461, %v4246, 0
      %v4347 = vsel %vm2461, %v4247, 0
      %4349 = vmatpush.msra.mxu0 0.0
      %4350 = vmatpush.msra.mxu0 0.0
      %4351 = vmatpush.msra.mxu0 0.0
      %4352 = vmatpush.msra.mxu0 0.0
      %4353 = vmatpush.msra.mxu0 0.0
      %4354 = vmatpush.msra.mxu0 0.0
      %4355 = vmatpush.msra.mxu0 0.0
      %4356 = vmatpush.msra.mxu0 0.0
      %4357 = vmatpush.msra.mxu0 0.0
      %4358 = vmatpush.msra.mxu0 0.0
      %4359 = vmatpush.msra.mxu0 0.0
      %4360 = vmatpush.msra.mxu0 0.0
      %4361 = vmatpush.msra.mxu0 0.0
      %4362 = vmatpush.msra.mxu0 0.0
      %4363 = vmatpush.msra.mxu0 0.0
      %4364 = vmatpush.msra.mxu0 %v4248
      %4365 = vmatmul.f32.gmra.mxu0 %v4254
      %v4366 = vpop.f32.mrf.mxu0
      %v4367 = vadd.f32 %v4251, %v4366
      %4368 = vmatmul.f32.gmra.mxu0 %v4257
      %v4369 = vpop.f32.mrf.mxu0
      %v4370 = vadd.f32 %v4251, %v4369
      %4371 = vmatmul.f32.gmra.mxu0 %v4260
      %v4372 = vpop.f32.mrf.mxu0
      %v4373 = vadd.f32 %v4251, %v4372
      %4374 = vmatmul.f32.gmra.mxu0 %v4263
      %v4375 = vpop.f32.mrf.mxu0
      %v4376 = vadd.f32 %v4251, %v4375
      %4377 = vmatmul.f32.gmra.mxu0 %v4266
      %v4378 = vpop.f32.mrf.mxu0
      %v4379 = vadd.f32 %v4251, %v4378
      %4380 = vmatmul.f32.gmra.mxu0 %v4269
      %v4381 = vpop.f32.mrf.mxu0
      %v4382 = vadd.f32 %v4251, %v4381
      %4383 = vmatmul.f32.gmra.mxu0 %v4272
      %v4384 = vpop.f32.mrf.mxu0
      %v4385 = vadd.f32 %v4251, %v4384
      %4386 = vmatmul.f32.gmra.mxu0 %v4275
      %v4387 = vpop.f32.mrf.mxu0
      %v4388 = vadd.f32 %v4251, %v4387
      %4389 = vmatmul.f32.gmra.mxu0 %v4278
      %v4390 = vpop.f32.mrf.mxu0
      %v4391 = vadd.f32 %v4251, %v4390
      %4392 = vmatmul.f32.gmra.mxu0 %v4281
      %v4393 = vpop.f32.mrf.mxu0
      %v4394 = vadd.f32 %v4251, %v4393
      %4395 = vmatmul.f32.gmra.mxu0 %v4284
      %v4396 = vpop.f32.mrf.mxu0
      %v4397 = vadd.f32 %v4251, %v4396
      %4398 = vmatmul.f32.gmra.mxu0 %v4287
      %v4399 = vpop.f32.mrf.mxu0
      %v4400 = vadd.f32 %v4251, %v4399
      %4401 = vmatmul.f32.gmra.mxu0 %v4290
      %v4402 = vpop.f32.mrf.mxu0
      %v4403 = vadd.f32 %v4251, %v4402
      %4404 = vmatmul.f32.gmra.mxu0 %v4293
      %v4405 = vpop.f32.mrf.mxu0
      %v4406 = vadd.f32 %v4251, %v4405
      %4407 = vmatmul.f32.gmra.mxu0 %v4296
      %v4408 = vpop.f32.mrf.mxu0
      %v4409 = vadd.f32 %v4251, %v4408
      %4410 = vmatmul.f32.gmra.mxu0 %v4299
      %v4411 = vpop.f32.mrf.mxu0
      %v4412 = vadd.f32 %v4251, %v4411
      %4413 = vmatmul.f32.gmra.mxu0 %v4302
      %v4414 = vpop.f32.mrf.mxu0
      %v4415 = vadd.f32 %v4251, %v4414
      %4416 = vmatmul.f32.gmra.mxu0 %v4305
      %v4417 = vpop.f32.mrf.mxu0
      %v4418 = vadd.f32 %v4251, %v4417
      %4419 = vmatmul.f32.gmra.mxu0 %v4308
      %v4420 = vpop.f32.mrf.mxu0
      %v4421 = vadd.f32 %v4251, %v4420
      %4422 = vmatmul.f32.gmra.mxu0 %v4311
      %v4423 = vpop.f32.mrf.mxu0
      %v4424 = vadd.f32 %v4251, %v4423
      %4425 = vmatmul.f32.gmra.mxu0 %v4314
      %v4426 = vpop.f32.mrf.mxu0
      %v4427 = vadd.f32 %v4251, %v4426
      %4428 = vmatmul.f32.gmra.mxu0 %v4317
      %v4429 = vpop.f32.mrf.mxu0
      %v4430 = vadd.f32 %v4251, %v4429
      %4431 = vmatmul.f32.gmra.mxu0 %v4320
      %v4432 = vpop.f32.mrf.mxu0
      %v4433 = vadd.f32 %v4251, %v4432
      %4434 = vmatmul.f32.gmra.mxu0 %v4323
      %v4435 = vpop.f32.mrf.mxu0
      %v4436 = vadd.f32 %v4251, %v4435
      %4437 = vmatmul.f32.gmra.mxu0 %v4326
      %v4438 = vpop.f32.mrf.mxu0
      %v4439 = vadd.f32 %v4251, %v4438
      %4440 = vmatmul.f32.gmra.mxu0 %v4329
      %v4441 = vpop.f32.mrf.mxu0
      %v4442 = vadd.f32 %v4251, %v4441
      %4443 = vmatmul.f32.gmra.mxu0 %v4332
      %v4444 = vpop.f32.mrf.mxu0
      %v4445 = vadd.f32 %v4251, %v4444
      %4446 = vmatmul.f32.gmra.mxu0 %v4335
      %v4447 = vpop.f32.mrf.mxu0
      %v4448 = vadd.f32 %v4251, %v4447
      %4449 = vmatmul.f32.gmra.mxu0 %v4338
      %v4450 = vpop.f32.mrf.mxu0
      %v4451 = vadd.f32 %v4251, %v4450
      %4452 = vmatmul.f32.gmra.mxu0 %v4341
      %v4453 = vpop.f32.mrf.mxu0
      %v4454 = vadd.f32 %v4251, %v4453
      %4455 = vmatmul.f32.gmra.mxu0 %v4344
      %v4456 = vpop.f32.mrf.mxu0
      %v4457 = vadd.f32 %v4251, %v4456
      %4458 = vmatmul.f32.gmra.mxu0 %v4347
      %v4459 = vpop.f32.mrf.mxu0
      %v4460 = vadd.f32 %v4251, %v4459
      %4461 = vdwg.mxu0
      %4462 = vst.msk [vmem:[#allocation3] sm:$0xff] %vm2461, -3.4028235e+38
      %4463 = vst.msk [vmem:[#allocation3 + $0x8] sm:$0xff] %vm2461, -3.4028235e+38
      %4464 = vst.msk [vmem:[#allocation3 + $0x10] sm:$0x3] %vm2464, -3.4028235e+38
      %4465 = vst.msk [vmem:[#allocation3 + $0x18] sm:$0xff] %vm2461, -3.4028235e+38
      %4466 = vst.msk [vmem:[#allocation3 + $0x20] sm:$0xff] %vm2461, -3.4028235e+38
      %4467 = vst.msk [vmem:[#allocation3 + $0x28] sm:$0x3] %vm2464, -3.4028235e+38
      %4468 = vst.msk [vmem:[#allocation3 + $0x30] sm:$0xff] %vm2461, -3.4028235e+38
      %4469 = vst.msk [vmem:[#allocation3 + $0x38] sm:$0xff] %vm2461, -3.4028235e+38
      %4470 = vst.msk [vmem:[#allocation3 + $0x40] sm:$0x3] %vm2464, -3.4028235e+38
      %4471 = vst.msk [vmem:[#allocation3 + $0x48] sm:$0xff] %vm2461, -3.4028235e+38
      %4472 = vst.msk [vmem:[#allocation3 + $0x50] sm:$0xff] %vm2461, -3.4028235e+38
      %4473 = vst.msk [vmem:[#allocation3 + $0x58] sm:$0x3] %vm2464, -3.4028235e+38
      %4474 = vst.msk [vmem:[#allocation3 + $0x60] sm:$0xff] %vm2461, -3.4028235e+38
      %4475 = vst.msk [vmem:[#allocation3 + $0x68] sm:$0xff] %vm2461, -3.4028235e+38
      %4476 = vst.msk [vmem:[#allocation3 + $0x70] sm:$0x3] %vm2464, -3.4028235e+38
      %4477 = vst.msk [vmem:[#allocation3 + $0x78] sm:$0xff] %vm2461, -3.4028235e+38
      %4478 = vst.msk [vmem:[#allocation3 + $0x80] sm:$0xff] %vm2461, -3.4028235e+38
      %4479 = vst.msk [vmem:[#allocation3 + $0x88] sm:$0x3] %vm2464, -3.4028235e+38
      %4480 = vst.msk [vmem:[#allocation3 + $0x90] sm:$0xff] %vm2461, -3.4028235e+38
      %4481 = vst.msk [vmem:[#allocation3 + $0x98] sm:$0xff] %vm2461, -3.4028235e+38
      %4482 = vst.msk [vmem:[#allocation3 + $0xa0] sm:$0x3] %vm2464, -3.4028235e+38
      %4483 = vst.msk [vmem:[#allocation3 + $0xa8] sm:$0xff] %vm2461, -3.4028235e+38
      %4484 = vst.msk [vmem:[#allocation3 + $0xb0] sm:$0xff] %vm2461, -3.4028235e+38
      %4485 = vst.msk [vmem:[#allocation3 + $0xb8] sm:$0x3] %vm2464, -3.4028235e+38
      %4486 = vst.msk [vmem:[#allocation3 + $0xc0] sm:$0xff] %vm2461, -3.4028235e+38
      %4487 = vst.msk [vmem:[#allocation3 + $0xc8] sm:$0xff] %vm2461, -3.4028235e+38
      %4488 = vst.msk [vmem:[#allocation3 + $0xd0] sm:$0x3] %vm2464, -3.4028235e+38
      %4489 = vst.msk [vmem:[#allocation3 + $0xd8] sm:$0xff] %vm2461, -3.4028235e+38
      %4490 = vst.msk [vmem:[#allocation3 + $0xe0] sm:$0xff] %vm2461, -3.4028235e+38
      %4491 = vst.msk [vmem:[#allocation3 + $0xe8] sm:$0x3] %vm2464, -3.4028235e+38
      %4492 = vst.msk [vmem:[#allocation3 + $0xf0] sm:$0xff] %vm2461, -3.4028235e+38
      %4493 = vst.msk [vmem:[#allocation3 + $0xf8] sm:$0xff] %vm2461, -3.4028235e+38
      %4494 = vst.msk [vmem:[#allocation3 + $0x100] sm:$0x3] %vm2464, -3.4028235e+38
      %4495 = vst.msk [vmem:[#allocation3 + $0x108] sm:$0xff] %vm2461, -3.4028235e+38
      %4496 = vst.msk [vmem:[#allocation3 + $0x110] sm:$0xff] %vm2461, -3.4028235e+38
      %4497 = vst.msk [vmem:[#allocation3 + $0x118] sm:$0x3] %vm2464, -3.4028235e+38
      %4498 = vst.msk [vmem:[#allocation3 + $0x120] sm:$0xff] %vm2461, -3.4028235e+38
      %4499 = vst.msk [vmem:[#allocation3 + $0x128] sm:$0xff] %vm2461, -3.4028235e+38
      %4500 = vst.msk [vmem:[#allocation3 + $0x130] sm:$0x3] %vm2464, -3.4028235e+38
      %4501 = vst.msk [vmem:[#allocation3 + $0x138] sm:$0xff] %vm2461, -3.4028235e+38
      %4502 = vst.msk [vmem:[#allocation3 + $0x140] sm:$0xff] %vm2461, -3.4028235e+38
      %4503 = vst.msk [vmem:[#allocation3 + $0x148] sm:$0x3] %vm2464, -3.4028235e+38
      %4504 = vst.msk [vmem:[#allocation3 + $0x150] sm:$0xff] %vm2461, -3.4028235e+38
      %4505 = vst.msk [vmem:[#allocation3 + $0x158] sm:$0xff] %vm2461, -3.4028235e+38
      %4506 = vst.msk [vmem:[#allocation3 + $0x160] sm:$0x3] %vm2464, -3.4028235e+38
      %4507 = vst.msk [vmem:[#allocation3 + $0x168] sm:$0xff] %vm2461, -3.4028235e+38
      %4508 = vst.msk [vmem:[#allocation3 + $0x170] sm:$0xff] %vm2461, -3.4028235e+38
      %4509 = vst.msk [vmem:[#allocation3 + $0x178] sm:$0x3] %vm2464, -3.4028235e+38
      %4510 = vst.msk [vmem:[#allocation3 + $0x180] sm:$0xff] %vm2461, -3.4028235e+38
      %4511 = vst.msk [vmem:[#allocation3 + $0x188] sm:$0xff] %vm2461, -3.4028235e+38
      %4512 = vst.msk [vmem:[#allocation3 + $0x190] sm:$0x3] %vm2464, -3.4028235e+38
      %4513 = vst.msk [vmem:[#allocation3 + $0x198] sm:$0xff] %vm2461, -3.4028235e+38
      %4514 = vst.msk [vmem:[#allocation3 + $0x1a0] sm:$0xff] %vm2461, -3.4028235e+38
      %4515 = vst.msk [vmem:[#allocation3 + $0x1a8] sm:$0x3] %vm2464, -3.4028235e+38
      %4516 = vst.msk [vmem:[%s2517 + $0x1] sm:$0xff] %vm2461, %v4367
      %4517 = vst.msk [vmem:[%s2517 + $0x9] sm:$0xff] %vm2461, %v4370
      %4518 = vst.msk [vmem:[%s2517 + $0x19] sm:$0xff] %vm2461, %v4373
      %4519 = vst.msk [vmem:[%s2517 + $0x21] sm:$0xff] %vm2461, %v4376
      %4520 = vst.msk [vmem:[%s2517 + $0x31] sm:$0xff] %vm2461, %v4379
      %4521 = vst.msk [vmem:[%s2517 + $0x39] sm:$0xff] %vm2461, %v4382
      %4522 = vst.msk [vmem:[%s2517 + $0x49] sm:$0xff] %vm2461, %v4385
      %4523 = vst.msk [vmem:[%s2517 + $0x51] sm:$0xff] %vm2461, %v4388
      %4524 = vst.msk [vmem:[%s2517 + $0x61] sm:$0xff] %vm2461, %v4391
      %4525 = vst.msk [vmem:[%s2517 + $0x69] sm:$0xff] %vm2461, %v4394
      %4526 = vst.msk [vmem:[%s2517 + $0x79] sm:$0xff] %vm2461, %v4397
      %4527 = vst.msk [vmem:[%s2517 + $0x81] sm:$0xff] %vm2461, %v4400
      %4528 = vst.msk [vmem:[%s2517 + $0x91] sm:$0xff] %vm2461, %v4403
      %4529 = vst.msk [vmem:[%s2517 + $0x99] sm:$0xff] %vm2461, %v4406
      %4530 = vst.msk [vmem:[%s2517 + $0xa9] sm:$0xff] %vm2461, %v4409
      %4531 = vst.msk [vmem:[%s2517 + $0xb1] sm:$0xff] %vm2461, %v4412
      %4532 = vst.msk [vmem:[%s2517 + $0xc1] sm:$0xff] %vm2461, %v4415
      %4533 = vst.msk [vmem:[%s2517 + $0xc9] sm:$0xff] %vm2461, %v4418
      %4534 = vst.msk [vmem:[%s2517 + $0xd9] sm:$0xff] %vm2461, %v4421
      %4535 = vst.msk [vmem:[%s2517 + $0xe1] sm:$0xff] %vm2461, %v4424
      %4536 = vst.msk [vmem:[%s2517 + $0xf1] sm:$0xff] %vm2461, %v4427
      %4537 = vst.msk [vmem:[%s2517 + $0xf9] sm:$0xff] %vm2461, %v4430
      %4538 = vst.msk [vmem:[%s2517 + $0x109] sm:$0xff] %vm2461, %v4433
      %4539 = vst.msk [vmem:[%s2517 + $0x111] sm:$0xff] %vm2461, %v4436
      %4540 = vst.msk [vmem:[%s2517 + $0x121] sm:$0xff] %vm2461, %v4439
      %4541 = vst.msk [vmem:[%s2517 + $0x129] sm:$0xff] %vm2461, %v4442
      %4542 = vst.msk [vmem:[%s2517 + $0x139] sm:$0xff] %vm2461, %v4445
      %4543 = vst.msk [vmem:[%s2517 + $0x141] sm:$0xff] %vm2461, %v4448
      %4544 = vst.msk [vmem:[%s2517 + $0x151] sm:$0xff] %vm2461, %v4451
      %4545 = vst.msk [vmem:[%s2517 + $0x159] sm:$0xff] %vm2461, %v4454
      %4546 = vst.msk [vmem:[%s2517 + $0x169] sm:$0xff] %vm2461, %v4457
      %4547 = vst.msk [vmem:[%s2517 + $0x171] sm:$0xff] %vm2461, %v4460
      %v4548 = vld [vmem:[#allocation3] sm:$0xff]
      %v4549 = vld [vmem:[#allocation3 + $0x8] sm:$0xff]
      %v4550 = vld [vmem:[#allocation3 + $0x10] sm:$0x3]
      %v4551 = vld [vmem:[#allocation3 + $0x18] sm:$0xff]
      %v4552 = vld [vmem:[#allocation3 + $0x20] sm:$0xff]
      %v4553 = vld [vmem:[#allocation3 + $0x28] sm:$0x3]
      %v4554 = vld [vmem:[#allocation3 + $0x30] sm:$0xff]
      %v4555 = vld [vmem:[#allocation3 + $0x38] sm:$0xff]
      %v4556 = vld [vmem:[#allocation3 + $0x40] sm:$0x3]
      %v4557 = vld [vmem:[#allocation3 + $0x48] sm:$0xff]
      %v4558 = vld [vmem:[#allocation3 + $0x50] sm:$0xff]
      %v4559 = vld [vmem:[#allocation3 + $0x58] sm:$0x3]
      %v4560 = vld [vmem:[#allocation3 + $0x60] sm:$0xff]
      %v4561 = vld [vmem:[#allocation3 + $0x68] sm:$0xff]
      %v4562 = vld [vmem:[#allocation3 + $0x70] sm:$0x3]
      %v4563 = vld [vmem:[#allocation3 + $0x78] sm:$0xff]
      %v4564 = vld [vmem:[#allocation3 + $0x80] sm:$0xff]
      %v4565 = vld [vmem:[#allocation3 + $0x88] sm:$0x3]
      %v4566 = vld [vmem:[#allocation3 + $0x90] sm:$0xff]
      %v4567 = vld [vmem:[#allocation3 + $0x98] sm:$0xff]
      %v4568 = vld [vmem:[#allocation3 + $0xa0] sm:$0x3]
      %v4569 = vld [vmem:[#allocation3 + $0xa8] sm:$0xff]
      %v4570 = vld [vmem:[#allocation3 + $0xb0] sm:$0xff]
      %v4571 = vld [vmem:[#allocation3 + $0xb8] sm:$0x3]
      %v4572 = vld [vmem:[#allocation3 + $0xc0] sm:$0xff]
      %v4573 = vld [vmem:[#allocation3 + $0xc8] sm:$0xff]
      %v4574 = vld [vmem:[#allocation3 + $0xd0] sm:$0x3]
      %v4575 = vld [vmem:[#allocation3 + $0xd8] sm:$0xff]
      %v4576 = vld [vmem:[#allocation3 + $0xe0] sm:$0xff]
      %v4577 = vld [vmem:[#allocation3 + $0xe8] sm:$0x3]
      %v4578 = vld [vmem:[#allocation3 + $0xf0] sm:$0xff]
      %v4579 = vld [vmem:[#allocation3 + $0xf8] sm:$0xff]
      %v4580 = vld [vmem:[#allocation3 + $0x100] sm:$0x3]
      %v4581 = vld [vmem:[#allocation3 + $0x108] sm:$0xff]
      %v4582 = vld [vmem:[#allocation3 + $0x110] sm:$0xff]
      %v4583 = vld [vmem:[#allocation3 + $0x118] sm:$0x3]
      %v4584 = vld [vmem:[#allocation3 + $0x120] sm:$0xff]
      %v4585 = vld [vmem:[#allocation3 + $0x128] sm:$0xff]
      %v4586 = vld [vmem:[#allocation3 + $0x130] sm:$0x3]
      %v4587 = vld [vmem:[#allocation3 + $0x138] sm:$0xff]
      %v4588 = vld [vmem:[#allocation3 + $0x140] sm:$0xff]
      %v4589 = vld [vmem:[#allocation3 + $0x148] sm:$0x3]
      %v4590 = vld [vmem:[#allocation3 + $0x150] sm:$0xff]
      %v4591 = vld [vmem:[#allocation3 + $0x158] sm:$0xff]
      %v4592 = vld [vmem:[#allocation3 + $0x160] sm:$0x3]
      %v4593 = vld [vmem:[#allocation3 + $0x168] sm:$0xff]
      %v4594 = vld [vmem:[#allocation3 + $0x170] sm:$0xff]
      %v4595 = vld [vmem:[#allocation3 + $0x178] sm:$0x3]
      %v4596 = vld [vmem:[#allocation3 + $0x180] sm:$0xff]
      %v4597 = vld [vmem:[#allocation3 + $0x188] sm:$0xff]
      %v4598 = vld [vmem:[#allocation3 + $0x190] sm:$0x3]
      %v4599 = vld [vmem:[#allocation3 + $0x198] sm:$0xff]
      %v4600 = vld [vmem:[#allocation3 + $0x1a0] sm:$0xff]
      %v4601 = vld [vmem:[#allocation3 + $0x1a8] sm:$0x3]
      %v4656 = vrot.slane %v4548, 1
      %v4657 = vrot.slane %v4549, 1
      %v4658 = vsel %vm730, %v4656, %v4657
      %v4659 = vrot.slane %v4550, 1
      %v4660 = vsel %vm730, %v4657, %v4659
      %v4661 = vrot.slane %v4551, 1
      %v4662 = vrot.slane %v4552, 1
      %v4663 = vsel %vm730, %v4661, %v4662
      %v4664 = vrot.slane %v4553, 1
      %v4665 = vsel %vm730, %v4662, %v4664
      %v4666 = vrot.slane %v4554, 1
      %v4667 = vrot.slane %v4555, 1
      %v4668 = vsel %vm730, %v4666, %v4667
      %v4669 = vrot.slane %v4556, 1
      %v4670 = vsel %vm730, %v4667, %v4669
      %v4671 = vrot.slane %v4557, 1
      %v4672 = vrot.slane %v4558, 1
      %v4673 = vsel %vm730, %v4671, %v4672
      %v4674 = vrot.slane %v4559, 1
      %v4675 = vsel %vm730, %v4672, %v4674
      %v4676 = vrot.slane %v4560, 1
      %v4677 = vrot.slane %v4561, 1
      %v4678 = vsel %vm730, %v4676, %v4677
      %v4679 = vrot.slane %v4562, 1
      %v4680 = vsel %vm730, %v4677, %v4679
      %v4681 = vrot.slane %v4563, 1
      %v4682 = vrot.slane %v4564, 1
      %v4683 = vsel %vm730, %v4681, %v4682
      %v4684 = vrot.slane %v4565, 1
      %v4685 = vsel %vm730, %v4682, %v4684
      %v4686 = vrot.slane %v4566, 1
      %v4687 = vrot.slane %v4567, 1
      %v4688 = vsel %vm730, %v4686, %v4687
      %v4689 = vrot.slane %v4568, 1
      %v4690 = vsel %vm730, %v4687, %v4689
      %v4691 = vrot.slane %v4569, 1
      %v4692 = vrot.slane %v4570, 1
      %v4693 = vsel %vm730, %v4691, %v4692
      %v4694 = vrot.slane %v4571, 1
      %v4695 = vsel %vm730, %v4692, %v4694
      %v4696 = vrot.slane %v4572, 1
      %v4697 = vrot.slane %v4573, 1
      %v4698 = vsel %vm730, %v4696, %v4697
      %v4699 = vrot.slane %v4574, 1
      %v4700 = vsel %vm730, %v4697, %v4699
      %v4701 = vrot.slane %v4575, 1
      %v4702 = vrot.slane %v4576, 1
      %v4703 = vsel %vm730, %v4701, %v4702
      %v4704 = vrot.slane %v4577, 1
      %v4705 = vsel %vm730, %v4702, %v4704
      %v4706 = vrot.slane %v4578, 1
      %v4707 = vrot.slane %v4579, 1
      %v4708 = vsel %vm730, %v4706, %v4707
      %v4709 = vrot.slane %v4580, 1
      %v4710 = vsel %vm730, %v4707, %v4709
      %v4711 = vrot.slane %v4581, 1
      %v4712 = vrot.slane %v4582, 1
      %v4713 = vsel %vm730, %v4711, %v4712
      %v4714 = vrot.slane %v4583, 1
      %v4715 = vsel %vm730, %v4712, %v4714
      %v4716 = vrot.slane %v4584, 1
      %v4717 = vrot.slane %v4585, 1
      %v4718 = vsel %vm730, %v4716, %v4717
      %v4719 = vrot.slane %v4586, 1
      %v4720 = vsel %vm730, %v4717, %v4719
      %v4721 = vrot.slane %v4587, 1
      %v4722 = vrot.slane %v4588, 1
      %v4723 = vsel %vm730, %v4721, %v4722
      %v4724 = vrot.slane %v4589, 1
      %v4725 = vsel %vm730, %v4722, %v4724
      %v4726 = vrot.slane %v4590, 1
      %v4727 = vrot.slane %v4591, 1
      %v4728 = vsel %vm730, %v4726, %v4727
      %v4729 = vrot.slane %v4592, 1
      %v4730 = vsel %vm730, %v4727, %v4729
      %v4731 = vrot.slane %v4593, 1
      %v4732 = vrot.slane %v4594, 1
      %v4733 = vsel %vm730, %v4731, %v4732
      %v4734 = vrot.slane %v4595, 1
      %v4735 = vsel %vm730, %v4732, %v4734
      %v4736 = vrot.slane %v4596, 1
      %v4737 = vrot.slane %v4597, 1
      %v4738 = vsel %vm730, %v4736, %v4737
      %v4739 = vrot.slane %v4598, 1
      %v4740 = vsel %vm730, %v4737, %v4739
      %v4741 = vrot.slane %v4599, 1
      %v4742 = vrot.slane %v4600, 1
      %v4743 = vsel %vm730, %v4741, %v4742
      %v4744 = vrot.slane %v4601, 1
      %v4745 = vsel %vm730, %v4742, %v4744
      %v4782 = vmax.f32 %v4548, %v4658
      %v4783 = vmax.f32 %v4549, %v4660
      %v4784 = vmax.f32 %v4551, %v4663
      %v4785 = vmax.f32 %v4552, %v4665
      %v4786 = vmax.f32 %v4554, %v4668
      %v4787 = vmax.f32 %v4555, %v4670
      %v4788 = vmax.f32 %v4557, %v4673
      %v4789 = vmax.f32 %v4558, %v4675
      %v4790 = vmax.f32 %v4560, %v4678
      %v4791 = vmax.f32 %v4561, %v4680
      %v4792 = vmax.f32 %v4563, %v4683
      %v4793 = vmax.f32 %v4564, %v4685
      %v4794 = vmax.f32 %v4566, %v4688
      %v4795 = vmax.f32 %v4567, %v4690
      %v4796 = vmax.f32 %v4569, %v4693
      %v4797 = vmax.f32 %v4570, %v4695
      %v4798 = vmax.f32 %v4572, %v4698
      %v4799 = vmax.f32 %v4573, %v4700
      %v4800 = vmax.f32 %v4575, %v4703
      %v4801 = vmax.f32 %v4576, %v4705
      %v4802 = vmax.f32 %v4578, %v4708
      %v4803 = vmax.f32 %v4579, %v4710
      %v4804 = vmax.f32 %v4581, %v4713
      %v4805 = vmax.f32 %v4582, %v4715
      %v4806 = vmax.f32 %v4584, %v4718
      %v4807 = vmax.f32 %v4585, %v4720
      %v4808 = vmax.f32 %v4587, %v4723
      %v4809 = vmax.f32 %v4588, %v4725
      %v4810 = vmax.f32 %v4590, %v4728
      %v4811 = vmax.f32 %v4591, %v4730
      %v4812 = vmax.f32 %v4593, %v4733
      %v4813 = vmax.f32 %v4594, %v4735
      %v4814 = vmax.f32 %v4596, %v4738
      %v4815 = vmax.f32 %v4597, %v4740
      %v4816 = vmax.f32 %v4599, %v4743
      %v4817 = vmax.f32 %v4600, %v4745
      %v4818 = vrot.slane %v4548, 2
      %v4819 = vrot.slane %v4549, 2
      %v4820 = vsel %vm972, %v4818, %v4819
      %v4821 = vrot.slane %v4550, 2
      %v4822 = vsel %vm972, %v4819, %v4821
      %v4823 = vrot.slane %v4551, 2
      %v4824 = vrot.slane %v4552, 2
      %v4825 = vsel %vm972, %v4823, %v4824
      %v4826 = vrot.slane %v4553, 2
      %v4827 = vsel %vm972, %v4824, %v4826
      %v4828 = vrot.slane %v4554, 2
      %v4829 = vrot.slane %v4555, 2
      %v4830 = vsel %vm972, %v4828, %v4829
      %v4831 = vrot.slane %v4556, 2
      %v4832 = vsel %vm972, %v4829, %v4831
      %v4833 = vrot.slane %v4557, 2
      %v4834 = vrot.slane %v4558, 2
      %v4835 = vsel %vm972, %v4833, %v4834
      %v4836 = vrot.slane %v4559, 2
      %v4837 = vsel %vm972, %v4834, %v4836
      %v4838 = vrot.slane %v4560, 2
      %v4839 = vrot.slane %v4561, 2
      %v4840 = vsel %vm972, %v4838, %v4839
      %v4841 = vrot.slane %v4562, 2
      %v4842 = vsel %vm972, %v4839, %v4841
      %v4843 = vrot.slane %v4563, 2
      %v4844 = vrot.slane %v4564, 2
      %v4845 = vsel %vm972, %v4843, %v4844
      %v4846 = vrot.slane %v4565, 2
      %v4847 = vsel %vm972, %v4844, %v4846
      %v4848 = vrot.slane %v4566, 2
      %v4849 = vrot.slane %v4567, 2
      %v4850 = vsel %vm972, %v4848, %v4849
      %v4851 = vrot.slane %v4568, 2
      %v4852 = vsel %vm972, %v4849, %v4851
      %v4853 = vrot.slane %v4569, 2
      %v4854 = vrot.slane %v4570, 2
      %v4855 = vsel %vm972, %v4853, %v4854
      %v4856 = vrot.slane %v4571, 2
      %v4857 = vsel %vm972, %v4854, %v4856
      %v4858 = vrot.slane %v4572, 2
      %v4859 = vrot.slane %v4573, 2
      %v4860 = vsel %vm972, %v4858, %v4859
      %v4861 = vrot.slane %v4574, 2
      %v4862 = vsel %vm972, %v4859, %v4861
      %v4863 = vrot.slane %v4575, 2
      %v4864 = vrot.slane %v4576, 2
      %v4865 = vsel %vm972, %v4863, %v4864
      %v4866 = vrot.slane %v4577, 2
      %v4867 = vsel %vm972, %v4864, %v4866
      %v4868 = vrot.slane %v4578, 2
      %v4869 = vrot.slane %v4579, 2
      %v4870 = vsel %vm972, %v4868, %v4869
      %v4871 = vrot.slane %v4580, 2
      %v4872 = vsel %vm972, %v4869, %v4871
      %v4873 = vrot.slane %v4581, 2
      %v4874 = vrot.slane %v4582, 2
      %v4875 = vsel %vm972, %v4873, %v4874
      %v4876 = vrot.slane %v4583, 2
      %v4877 = vsel %vm972, %v4874, %v4876
      %v4878 = vrot.slane %v4584, 2
      %v4879 = vrot.slane %v4585, 2
      %v4880 = vsel %vm972, %v4878, %v4879
      %v4881 = vrot.slane %v4586, 2
      %v4882 = vsel %vm972, %v4879, %v4881
      %v4883 = vrot.slane %v4587, 2
      %v4884 = vrot.slane %v4588, 2
      %v4885 = vsel %vm972, %v4883, %v4884
      %v4886 = vrot.slane %v4589, 2
      %v4887 = vsel %vm972, %v4884, %v4886
      %v4888 = vrot.slane %v4590, 2
      %v4889 = vrot.slane %v4591, 2
      %v4890 = vsel %vm972, %v4888, %v4889
      %v4891 = vrot.slane %v4592, 2
      %v4892 = vsel %vm972, %v4889, %v4891
      %v4893 = vrot.slane %v4593, 2
      %v4894 = vrot.slane %v4594, 2
      %v4895 = vsel %vm972, %v4893, %v4894
      %v4896 = vrot.slane %v4595, 2
      %v4897 = vsel %vm972, %v4894, %v4896
      %v4898 = vrot.slane %v4596, 2
      %v4899 = vrot.slane %v4597, 2
      %v4900 = vsel %vm972, %v4898, %v4899
      %v4901 = vrot.slane %v4598, 2
      %v4902 = vsel %vm972, %v4899, %v4901
      %v4903 = vrot.slane %v4599, 2
      %v4904 = vrot.slane %v4600, 2
      %v4905 = vsel %vm972, %v4903, %v4904
      %v4906 = vrot.slane %v4601, 2
      %v4907 = vsel %vm972, %v4904, %v4906
      %v4944 = vmax.f32 %v4782, %v4820
      %v4945 = vmax.f32 %v4783, %v4822
      %v4946 = vmax.f32 %v4784, %v4825
      %v4947 = vmax.f32 %v4785, %v4827
      %v4948 = vmax.f32 %v4786, %v4830
      %v4949 = vmax.f32 %v4787, %v4832
      %v4950 = vmax.f32 %v4788, %v4835
      %v4951 = vmax.f32 %v4789, %v4837
      %v4952 = vmax.f32 %v4790, %v4840
      %v4953 = vmax.f32 %v4791, %v4842
      %v4954 = vmax.f32 %v4792, %v4845
      %v4955 = vmax.f32 %v4793, %v4847
      %v4956 = vmax.f32 %v4794, %v4850
      %v4957 = vmax.f32 %v4795, %v4852
      %v4958 = vmax.f32 %v4796, %v4855
      %v4959 = vmax.f32 %v4797, %v4857
      %v4960 = vmax.f32 %v4798, %v4860
      %v4961 = vmax.f32 %v4799, %v4862
      %v4962 = vmax.f32 %v4800, %v4865
      %v4963 = vmax.f32 %v4801, %v4867
      %v4964 = vmax.f32 %v4802, %v4870
      %v4965 = vmax.f32 %v4803, %v4872
      %v4966 = vmax.f32 %v4804, %v4875
      %v4967 = vmax.f32 %v4805, %v4877
      %v4968 = vmax.f32 %v4806, %v4880
      %v4969 = vmax.f32 %v4807, %v4882
      %v4970 = vmax.f32 %v4808, %v4885
      %v4971 = vmax.f32 %v4809, %v4887
      %v4972 = vmax.f32 %v4810, %v4890
      %v4973 = vmax.f32 %v4811, %v4892
      %v4974 = vmax.f32 %v4812, %v4895
      %v4975 = vmax.f32 %v4813, %v4897
      %v4976 = vmax.f32 %v4814, %v4900
      %v4977 = vmax.f32 %v4815, %v4902
      %v4978 = vmax.f32 %v4816, %v4905
      %v4979 = vmax.f32 %v4817, %v4907
      %v4980 = vmax.f32 %v4944, %v4946
      %v4981 = vmax.f32 %v4945, %v4947
      %v4982 = vmax.f32 %v4946, %v4948
      %v4983 = vmax.f32 %v4947, %v4949
      %v4984 = vmax.f32 %v4948, %v4950
      %v4985 = vmax.f32 %v4949, %v4951
      %v4986 = vmax.f32 %v4950, %v4952
      %v4987 = vmax.f32 %v4951, %v4953
      %v4988 = vmax.f32 %v4952, %v4954
      %v4989 = vmax.f32 %v4953, %v4955
      %v4990 = vmax.f32 %v4954, %v4956
      %v4991 = vmax.f32 %v4955, %v4957
      %v4992 = vmax.f32 %v4956, %v4958
      %v4993 = vmax.f32 %v4957, %v4959
      %v4994 = vmax.f32 %v4958, %v4960
      %v4995 = vmax.f32 %v4959, %v4961
      %v4996 = vmax.f32 %v4960, %v4962
      %v4997 = vmax.f32 %v4961, %v4963
      %v4998 = vmax.f32 %v4962, %v4964
      %v4999 = vmax.f32 %v4963, %v4965
      %v5000 = vmax.f32 %v4964, %v4966
      %v5001 = vmax.f32 %v4965, %v4967
      %v5002 = vmax.f32 %v4966, %v4968
      %v5003 = vmax.f32 %v4967, %v4969
      %v5004 = vmax.f32 %v4968, %v4970
      %v5005 = vmax.f32 %v4969, %v4971
      %v5006 = vmax.f32 %v4970, %v4972
      %v5007 = vmax.f32 %v4971, %v4973
      %v5008 = vmax.f32 %v4972, %v4974
      %v5009 = vmax.f32 %v4973, %v4975
      %v5010 = vmax.f32 %v4974, %v4976
      %v5011 = vmax.f32 %v4975, %v4977
      %v5012 = vmax.f32 %v4980, %v4948
      %v5013 = vmax.f32 %v4981, %v4949
      %v5014 = vmax.f32 %v4982, %v4950
      %v5015 = vmax.f32 %v4983, %v4951
      %v5016 = vmax.f32 %v4984, %v4952
      %v5017 = vmax.f32 %v4985, %v4953
      %v5018 = vmax.f32 %v4986, %v4954
      %v5019 = vmax.f32 %v4987, %v4955
      %v5020 = vmax.f32 %v4988, %v4956
      %v5021 = vmax.f32 %v4989, %v4957
      %v5022 = vmax.f32 %v4990, %v4958
      %v5023 = vmax.f32 %v4991, %v4959
      %v5024 = vmax.f32 %v4992, %v4960
      %v5025 = vmax.f32 %v4993, %v4961
      %v5026 = vmax.f32 %v4994, %v4962
      %v5027 = vmax.f32 %v4995, %v4963
      %v5028 = vmax.f32 %v4996, %v4964
      %v5029 = vmax.f32 %v4997, %v4965
      %v5030 = vmax.f32 %v4998, %v4966
      %v5031 = vmax.f32 %v4999, %v4967
      %v5032 = vmax.f32 %v5000, %v4968
      %v5033 = vmax.f32 %v5001, %v4969
      %v5034 = vmax.f32 %v5002, %v4970
      %v5035 = vmax.f32 %v5003, %v4971
      %v5036 = vmax.f32 %v5004, %v4972
      %v5037 = vmax.f32 %v5005, %v4973
      %v5038 = vmax.f32 %v5006, %v4974
      %v5039 = vmax.f32 %v5007, %v4975
      %v5040 = vmax.f32 %v5008, %v4976
      %v5041 = vmax.f32 %v5009, %v4977
      %v5042 = vmax.f32 %v5010, %v4978
      %v5043 = vmax.f32 %v5011, %v4979
      %v5044 = vld [vmem:[%s9] sm:$0xff]
      %v5045 = vld [vmem:[%s9 + $0x8] sm:$0xff]
      %v5046 = vld [vmem:[%s9 + $0x10] sm:$0xff]
      %v5047 = vld [vmem:[%s9 + $0x18] sm:$0xff]
      %v5048 = vld [vmem:[%s9 + $0x20] sm:$0xff]
      %v5049 = vld [vmem:[%s9 + $0x28] sm:$0xff]
      %v5050 = vld [vmem:[%s9 + $0x30] sm:$0xff]
      %v5051 = vld [vmem:[%s9 + $0x38] sm:$0xff]
      %v5052 = vld [vmem:[%s9 + $0x40] sm:$0xff]
      %v5053 = vld [vmem:[%s9 + $0x48] sm:$0xff]
      %v5054 = vld [vmem:[%s9 + $0x50] sm:$0xff]
      %v5055 = vld [vmem:[%s9 + $0x58] sm:$0xff]
      %v5056 = vld [vmem:[%s9 + $0x60] sm:$0xff]
      %v5057 = vld [vmem:[%s9 + $0x68] sm:$0xff]
      %v5058 = vld [vmem:[%s9 + $0x70] sm:$0xff]
      %v5059 = vld [vmem:[%s9 + $0x78] sm:$0xff]
      %5060 = vmatpush.msra.mxu0 %v373
      %5061 = vmatpush.msra.mxu0 %v372
      %5062 = vmatpush.msra.mxu0 %v371
      %5063 = vmatpush.msra.mxu0 %v370
      %5064 = vmatpush.msra.mxu0 %v369
      %5065 = vmatpush.msra.mxu0 %v368
      %5066 = vmatpush.msra.mxu0 %v367
      %5067 = vmatpush.msra.mxu0 %v366
      %5068 = vmatpush.msra.mxu0 %v365
      %5069 = vmatpush.msra.mxu0 %v364
      %5070 = vmatpush.msra.mxu0 %v363
      %5071 = vmatpush.msra.mxu0 %v362
      %5072 = vmatpush.msra.mxu0 %v361
      %5073 = vmatpush.msra.mxu0 %v360
      %5074 = vmatpush.msra.mxu0 %v359
      %5075 = vmatpush.msra.mxu0 %v358
      %5076 = vmatmul.f32.gmra.mxu0 %v5044
      %v5077 = vpop.f32.mrf.mxu0
      %v5078 = vadd.f32 0.0, %v5077
      %5079 = vmatmul.f32.gmra.mxu0 %v5046
      %v5080 = vpop.f32.mrf.mxu0
      %v5081 = vadd.f32 0.0, %v5080
      %5082 = vmatmul.f32.gmra.mxu0 %v5048
      %v5083 = vpop.f32.mrf.mxu0
      %v5084 = vadd.f32 0.0, %v5083
      %5085 = vmatmul.f32.gmra.mxu0 %v5050
      %v5086 = vpop.f32.mrf.mxu0
      %v5087 = vadd.f32 0.0, %v5086
      %5088 = vmatmul.f32.gmra.mxu0 %v5052
      %v5089 = vpop.f32.mrf.mxu0
      %v5090 = vadd.f32 0.0, %v5089
      %5091 = vmatmul.f32.gmra.mxu0 %v5054
      %v5092 = vpop.f32.mrf.mxu0
      %v5093 = vadd.f32 0.0, %v5092
      %5094 = vmatmul.f32.gmra.mxu0 %v5056
      %v5095 = vpop.f32.mrf.mxu0
      %v5096 = vadd.f32 0.0, %v5095
      %5097 = vmatmul.f32.gmra.mxu0 %v5058
      %v5098 = vpop.f32.mrf.mxu0
      %v5099 = vadd.f32 0.0, %v5098
      %5100 = vdwg.mxu0
      %5101 = vmatpush.msra.mxu0 %v389
      %5102 = vmatpush.msra.mxu0 %v388
      %5103 = vmatpush.msra.mxu0 %v387
      %5104 = vmatpush.msra.mxu0 %v386
      %5105 = vmatpush.msra.mxu0 %v385
      %5106 = vmatpush.msra.mxu0 %v384
      %5107 = vmatpush.msra.mxu0 %v383
      %5108 = vmatpush.msra.mxu0 %v382
      %5109 = vmatpush.msra.mxu0 %v381
      %5110 = vmatpush.msra.mxu0 %v380
      %5111 = vmatpush.msra.mxu0 %v379
      %5112 = vmatpush.msra.mxu0 %v378
      %5113 = vmatpush.msra.mxu0 %v377
      %5114 = vmatpush.msra.mxu0 %v376
      %5115 = vmatpush.msra.mxu0 %v375
      %5116 = vmatpush.msra.mxu0 %v374
      %5117 = vmatmul.f32.gmra.mxu0 %v5045
      %v5118 = vpop.f32.mrf.mxu0
      %v5119 = vadd.f32 %v5078, %v5118
      %5120 = vmatmul.f32.gmra.mxu0 %v5047
      %v5121 = vpop.f32.mrf.mxu0
      %v5122 = vadd.f32 %v5081, %v5121
      %5123 = vmatmul.f32.gmra.mxu0 %v5049
      %v5124 = vpop.f32.mrf.mxu0
      %v5125 = vadd.f32 %v5084, %v5124
      %5126 = vmatmul.f32.gmra.mxu0 %v5051
      %v5127 = vpop.f32.mrf.mxu0
      %v5128 = vadd.f32 %v5087, %v5127
      %5129 = vmatmul.f32.gmra.mxu0 %v5053
      %v5130 = vpop.f32.mrf.mxu0
      %v5131 = vadd.f32 %v5090, %v5130
      %5132 = vmatmul.f32.gmra.mxu0 %v5055
      %v5133 = vpop.f32.mrf.mxu0
      %v5134 = vadd.f32 %v5093, %v5133
      %5135 = vmatmul.f32.gmra.mxu0 %v5057
      %v5136 = vpop.f32.mrf.mxu0
      %v5137 = vadd.f32 %v5096, %v5136
      %5138 = vmatmul.f32.gmra.mxu0 %v5059
      %v5139 = vpop.f32.mrf.mxu0
      %v5140 = vadd.f32 %v5099, %v5139
      %5141 = vdwg.mxu0
      %v5142 = vld [vmem:[%s7] sm:$0xf]
      %v5143 = vld [vmem:[%s8] sm:$0x1]
      %v5145 = vperm.slane %v5143, 0
      %v5148 = vsel %vm422, %v5119, 0
      %v5151 = vsel %vm422, %v5122, 0
      %v5154 = vsel %vm422, %v5125, 0
      %v5157 = vsel %vm422, %v5128, 0
      %v5160 = vsel %vm422, %v5131, 0
      %v5163 = vsel %vm422, %v5134, 0
      %v5166 = vsel %vm422, %v5137, 0
      %v5169 = vsel %vm422, %v5140, 0
      %v5172 = vsel %vm2312, %v5142, 0
      %5174 = vmatpush.msra.mxu0 0.0
      %5175 = vmatpush.msra.mxu0 0.0
      %5176 = vmatpush.msra.mxu0 0.0
      %5177 = vmatpush.msra.mxu0 0.0
      %5178 = vmatpush.msra.mxu0 0.0
      %5179 = vmatpush.msra.mxu0 0.0
      %5180 = vmatpush.msra.mxu0 0.0
      %5181 = vmatpush.msra.mxu0 0.0
      %5182 = vmatpush.msra.mxu0 0.0
      %5183 = vmatpush.msra.mxu0 0.0
      %5184 = vmatpush.msra.mxu0 0.0
      %5185 = vmatpush.msra.mxu0 0.0
      %5186 = vmatpush.msra.mxu0 0.0
      %5187 = vmatpush.msra.mxu0 0.0
      %5188 = vmatpush.msra.mxu0 0.0
      %5189 = vmatpush.msra.mxu0 %v5172
      %5190 = vmatmul.f32.gmra.mxu0 %v5148
      %v5191 = vpop.f32.mrf.mxu0
      %v5192 = vadd.f32 %v5145, %v5191
      %5193 = vmatmul.f32.gmra.mxu0 %v5151
      %v5194 = vpop.f32.mrf.mxu0
      %v5195 = vadd.f32 %v5145, %v5194
      %5196 = vmatmul.f32.gmra.mxu0 %v5154
      %v5197 = vpop.f32.mrf.mxu0
      %v5198 = vadd.f32 %v5145, %v5197
      %5199 = vmatmul.f32.gmra.mxu0 %v5157
      %v5200 = vpop.f32.mrf.mxu0
      %v5201 = vadd.f32 %v5145, %v5200
      %5202 = vmatmul.f32.gmra.mxu0 %v5160
      %v5203 = vpop.f32.mrf.mxu0
      %v5204 = vadd.f32 %v5145, %v5203
      %5205 = vmatmul.f32.gmra.mxu0 %v5163
      %v5206 = vpop.f32.mrf.mxu0
      %v5207 = vadd.f32 %v5145, %v5206
      %5208 = vmatmul.f32.gmra.mxu0 %v5166
      %v5209 = vpop.f32.mrf.mxu0
      %v5210 = vadd.f32 %v5145, %v5209
      %5211 = vmatmul.f32.gmra.mxu0 %v5169
      %v5212 = vpop.f32.mrf.mxu0
      %v5213 = vadd.f32 %v5145, %v5212
      %5214 = vdwg.mxu0
      %5215 = vmatpush.msra.mxu0 %v5027
      %5216 = vmatpush.msra.mxu0 %v5026
      %5217 = vmatpush.msra.mxu0 %v5025
      %5218 = vmatpush.msra.mxu0 %v5024
      %5219 = vmatpush.msra.mxu0 %v5023
      %5220 = vmatpush.msra.mxu0 %v5022
      %5221 = vmatpush.msra.mxu0 %v5021
      %5222 = vmatpush.msra.mxu0 %v5020
      %5223 = vmatpush.msra.mxu0 %v5019
      %5224 = vmatpush.msra.mxu0 %v5018
      %5225 = vmatpush.msra.mxu0 %v5017
      %5226 = vmatpush.msra.mxu0 %v5016
      %5227 = vmatpush.msra.mxu0 %v5015
      %5228 = vmatpush.msra.mxu0 %v5014
      %5229 = vmatpush.msra.mxu0 %v5013
      %5230 = vmatpush.msra.mxu0 %v5012
      %5231 = vmatmul.f32.gmra.mxu0 %v5044
      %v5232 = vpop.f32.mrf.mxu0
      %v5233 = vadd.f32 %v5192, %v5232
      %5234 = vmatmul.f32.gmra.mxu0 %v5046
      %v5235 = vpop.f32.mrf.mxu0
      %v5236 = vadd.f32 %v5195, %v5235
      %5237 = vmatmul.f32.gmra.mxu0 %v5048
      %v5238 = vpop.f32.mrf.mxu0
      %v5239 = vadd.f32 %v5198, %v5238
      %5240 = vmatmul.f32.gmra.mxu0 %v5050
      %v5241 = vpop.f32.mrf.mxu0
      %v5242 = vadd.f32 %v5201, %v5241
      %5243 = vmatmul.f32.gmra.mxu0 %v5052
      %v5244 = vpop.f32.mrf.mxu0
      %v5245 = vadd.f32 %v5204, %v5244
      %5246 = vmatmul.f32.gmra.mxu0 %v5054
      %v5247 = vpop.f32.mrf.mxu0
      %v5248 = vadd.f32 %v5207, %v5247
      %5249 = vmatmul.f32.gmra.mxu0 %v5056
      %v5250 = vpop.f32.mrf.mxu0
      %v5251 = vadd.f32 %v5210, %v5250
      %5252 = vmatmul.f32.gmra.mxu0 %v5058
      %v5253 = vpop.f32.mrf.mxu0
      %v5254 = vadd.f32 %v5213, %v5253
      %5255 = vdwg.mxu0
      %5256 = vmatpush.msra.mxu0 %v5043
      %5257 = vmatpush.msra.mxu0 %v5042
      %5258 = vmatpush.msra.mxu0 %v5041
      %5259 = vmatpush.msra.mxu0 %v5040
      %5260 = vmatpush.msra.mxu0 %v5039
      %5261 = vmatpush.msra.mxu0 %v5038
      %5262 = vmatpush.msra.mxu0 %v5037
      %5263 = vmatpush.msra.mxu0 %v5036
      %5264 = vmatpush.msra.mxu0 %v5035
      %5265 = vmatpush.msra.mxu0 %v5034
      %5266 = vmatpush.msra.mxu0 %v5033
      %5267 = vmatpush.msra.mxu0 %v5032
      %5268 = vmatpush.msra.mxu0 %v5031
      %5269 = vmatpush.msra.mxu0 %v5030
      %5270 = vmatpush.msra.mxu0 %v5029
      %5271 = vmatpush.msra.mxu0 %v5028
      %5272 = vmatmul.f32.gmra.mxu0 %v5045
      %v5273 = vpop.f32.mrf.mxu0
      %v5274 = vadd.f32 %v5233, %v5273
      %5275 = vmatmul.f32.gmra.mxu0 %v5047
      %v5276 = vpop.f32.mrf.mxu0
      %v5277 = vadd.f32 %v5236, %v5276
      %5278 = vmatmul.f32.gmra.mxu0 %v5049
      %v5279 = vpop.f32.mrf.mxu0
      %v5280 = vadd.f32 %v5239, %v5279
      %5281 = vmatmul.f32.gmra.mxu0 %v5051
      %v5282 = vpop.f32.mrf.mxu0
      %v5283 = vadd.f32 %v5242, %v5282
      %5284 = vmatmul.f32.gmra.mxu0 %v5053
      %v5285 = vpop.f32.mrf.mxu0
      %v5286 = vadd.f32 %v5245, %v5285
      %5287 = vmatmul.f32.gmra.mxu0 %v5055
      %v5288 = vpop.f32.mrf.mxu0
      %v5289 = vadd.f32 %v5248, %v5288
      %5290 = vmatmul.f32.gmra.mxu0 %v5057
      %v5291 = vpop.f32.mrf.mxu0
      %v5292 = vadd.f32 %v5251, %v5291
      %5293 = vmatmul.f32.gmra.mxu0 %v5059
      %v5294 = vpop.f32.mrf.mxu0
      %v5295 = vadd.f32 %v5254, %v5294
      %5296 = vdwg.mxu0
      %v5297 = vlaneseq
      %v5298 = vshrl.u32 %v5297, 7
      %v5299 = vlaneseq
      %v5300 = vand.u32 %v5299, 127
      %vm5301 = vcmp.eq.s32.totalorder %v5298, %v5300
      %v5302 = vsel %vm5301, 1.0, 0.0
      %v5304 = vsel %vm2461, %v5302, 0
      %v5307 = vsel %vm2461, %v5274, 0
      %v5310 = vsel %vm2461, %v5277, 0
      %v5313 = vsel %vm2461, %v5280, 0
      %v5316 = vsel %vm2461, %v5283, 0
      %v5319 = vsel %vm2461, %v5286, 0
      %v5322 = vsel %vm2461, %v5289, 0
      %v5325 = vsel %vm2461, %v5292, 0
      %v5328 = vsel %vm2461, %v5295, 0
      %5330 = vmatpush.xpose.msra.mxu0 0.0
      %5331 = vmatpush.xpose.msra.mxu0 0.0
      %5332 = vmatpush.xpose.msra.mxu0 0.0
      %5333 = vmatpush.xpose.msra.mxu0 0.0
      %5334 = vmatpush.xpose.msra.mxu0 0.0
      %5335 = vmatpush.xpose.msra.mxu0 0.0
      %5336 = vmatpush.xpose.msra.mxu0 0.0
      %5337 = vmatpush.xpose.msra.mxu0 0.0
      %5338 = vmatpush.xpose.msra.mxu0 %v5328
      %5339 = vmatpush.xpose.msra.mxu0 %v5325
      %5340 = vmatpush.xpose.msra.mxu0 %v5322
      %5341 = vmatpush.xpose.msra.mxu0 %v5319
      %5342 = vmatpush.xpose.msra.mxu0 %v5316
      %5343 = vmatpush.xpose.msra.mxu0 %v5313
      %5344 = vmatpush.xpose.msra.mxu0 %v5310
      %5345 = vmatpush.xpose.msra.mxu0 %v5307
      %5346 = vmatmul.f32.gmra.mxu0 %v5304
      %v5347 = vpop.f32.mrf.mxu0
      %v5348 = vadd.f32 0.0, %v5347
      %5349 = vdwg.mxu0
      %vm5350 = vcmask 523264
      %5351 = vst.msk [vmem:[%s357] sm:$0xff] %vm5350, %v5348
      %p5352 = scmp.lt.s32.totalorder %s21, 1
      %s5353 = scalar_select %p5352, %s21, 1
      %s5354 = smul.addr %s5353, 8
      %s5355 = scalar_lea.vmem %s10, %s5354
      // Predicated region
      $region61: #{xception_block_forward.1} parent=59 // pred_check
        %p5356 = pneg %p254
      $region62: #{xception_block_forward.1} parent=59 // pred_check_branch
        %5358 = sbr.rel (%p5356) target = $region64
      $region63: #{xception_block_forward.1} parent=59 // pred_region
        _
      $region64: #{xception_block_forward.1} parent=59 // pred_fallthru
        _
    $region60: #{xception_block_forward.1} parent=5 // pred_fallthru
      _
    %p5359 = scmp.le.s32.totalorder 2, %s16
    // Predicated region
    $region65: #{xception_block_forward.1} parent=5 // pred_check
      %p5360 = pneg %p5359
    $region66: #{xception_block_forward.1} parent=5 // pred_check_branch
      %5362 = sbr.rel (%p5360) target = $region68
    $region67: #{xception_block_forward.1} parent=5 // pred_region
      %s5363 = ssub.s32 %s16, 2
      // Predicated region
      $region69: #{xception_block_forward.1} parent=67 // pred_check
        %p5364 = pneg %p260
      $region70: #{xception_block_forward.1} parent=67 // pred_check_branch
        %5366 = sbr.rel (%p5364) target = $region72
      $region71: #{xception_block_forward.1} parent=67 // pred_region
        %p5367 = scmp.lt.s32.totalorder %s22, 1
        %s5368 = scalar_select %p5367, %s22, 1
        %s5369 = smul.addr %s5368, 8
        %s5370 = scalar_lea.vmem %s10, %s5369
      $region72: #{xception_block_forward.1} parent=67 // pred_fallthru
        _
    $region68: #{xception_block_forward.1} parent=5 // pred_fallthru
      _
  $region6: #{xception_block_forward.1} parent=0 // loop_footer
    %s20 = sadd.s32 1, %s16
  $region7: #{xception_block_forward.1} parent=0 // loop_footer_branch
    %15 = sbr.rel target = $region3
  $region8: #{xception_block_forward.1} parent=0 // loop_exit
    _

</llo_original>
